<compile_context>
chip_gen: v6e
topology: v6e:2x2x1
jax: 0.10.0
libtpu: 0.0.40
codegen_flags: <defaults>
</compile_context>

<pallas_src>
import functools
import numpy as np

import jax
import jax.numpy as jnp
from jax.experimental import pallas as pl
from jax.experimental.pallas import tpu as pltpu


# ------------------------------------------------------------------
# Tiny geometry helpers, operating on one flattened 4x4 as a (1, 16) row.
# ------------------------------------------------------------------
def _el(m, i, j):
    k = 4 * i + j
    return m[:, k:k + 1]                      # (1, 1)


def _affine_inverse(m):
    """Inverse of an affine transform [A|t; 0 0 0 1], m is (1, 16)."""
    a, b, c, tx = _el(m, 0, 0), _el(m, 0, 1), _el(m, 0, 2), _el(m, 0, 3)
    d, e, f, ty = _el(m, 1, 0), _el(m, 1, 1), _el(m, 1, 2), _el(m, 1, 3)
    g, h, i, tz = _el(m, 2, 0), _el(m, 2, 1), _el(m, 2, 2), _el(m, 2, 3)
    A00 = e * i - f * h; A01 = c * h - b * i; A02 = b * f - c * e
    A10 = f * g - d * i; A11 = a * i - c * g; A12 = c * d - a * f
    A20 = d * h - e * g; A21 = b * g - a * h; A22 = a * e - b * d
    det = a * A00 + b * A10 + c * A20
    inv_det = 1.0 / det
    R00, R01, R02 = A00 * inv_det, A01 * inv_det, A02 * inv_det
    R10, R11, R12 = A10 * inv_det, A11 * inv_det, A12 * inv_det
    R20, R21, R22 = A20 * inv_det, A21 * inv_det, A22 * inv_det
    t0 = -(R00 * tx + R01 * ty + R02 * tz)
    t1 = -(R10 * tx + R11 * ty + R12 * tz)
    t2 = -(R20 * tx + R21 * ty + R22 * tz)
    zero = jnp.zeros_like(a)
    one = jnp.ones_like(a)
    return jnp.concatenate(
        [R00, R01, R02, t0,
         R10, R11, R12, t1,
         R20, R21, R22, t2,
         zero, zero, zero, one], axis=1)


def _matmul4(m1, m2):
    """4x4 @ 4x4 on flattened (1, 16) rows."""
    cols = []
    for i in range(4):
        for j in range(4):
            acc = _el(m1, i, 0) * _el(m2, 0, j)
            for k in range(1, 4):
                acc = acc + _el(m1, i, k) * _el(m2, k, j)
            cols.append(acc)
    return jnp.concatenate(cols, axis=1)


# ------------------------------------------------------------------
# Fused kernel: encoder conv (in-kernel im2col, row-tiled, GAP accumulated)
#               + per-batch 4x4 geometry (inverse_rt / compose_se3).
# ------------------------------------------------------------------
def ihoi_fused_kernel(xpad_ref, w_ref, b_ref, nTh_ref, cTh_ref,
                      local_ref, glob_ref, hTx_ref, cTx_ref,
                      gap_acc, *, H, W, Cin, row_tile):
    # xpad_ref : (1, H+2, W+2, Cin) bf16   resident per batch element
    # w_ref    : (9, Cin, C)        bf16   conv taps [kh*kw, cin, cout]
    # b_ref    : (1, C)             f32
    # nTh_ref  : (1, 1, 16)         f32
    # cTh_ref  : (1, 1, 16)         f32
    # local_ref: (1, TH*W, C)       bf16   channels-last spatial features
    # glob_ref : (1, 1, C)          f32    global-average-pooled feature
    # hTx_ref  : (1, 1, 16)         f32
    # cTx_ref  : (1, 1, 16)         f32
    # gap_acc  : (1, C)             f32    VMEM scratch (per-core, per-b accumulator)
    r = pl.program_id(1)
    n_r = pl.num_programs(1)
    TH = row_tile
    C = w_ref.shape[-1]

    # ---- once per batch element: fused tiny geometry + GAP accumulator init ----
    @pl.when(r == 0)
    def _init():
        nTh = nTh_ref[0]                       # (1, 16)
        cTh = cTh_ref[0]                       # (1, 16)
        hTx = _affine_inverse(nTh)             # hTx = inverse_rt(nTh)
        hTx_ref[0] = hTx
        cTx_ref[0] = _matmul4(cTh, hTx)        # cTx = compose_se3(cTh, hTx)
        gap_acc[...] = jnp.zeros_like(gap_acc)

    # ---- conv row tile: in-kernel im2col as 9 shifted-tap matmuls ----
    row0 = pl.multiple_of(r * TH, TH)
    xt = xpad_ref[0, pl.ds(row0, TH + 2), :, :]     # (TH+2, W+2, Cin) bf16

    feat = jnp.zeros((TH * W, C), jnp.float32)
    for k in range(9):
        di, dj = k // 3, k % 3
        tap = xt[di:di + TH, dj:dj + W, :].reshape(TH * W, Cin)     # bf16
        feat = feat + jnp.dot(tap, w_ref[k], preferred_element_type=jnp.float32)
    feat = jnp.maximum(feat + b_ref[...], 0.0)                      # bias + ReLU (f32)

    local_ref[0] = feat.astype(local_ref.dtype)                     # bf16, lane-dense
    gap_acc[...] += jnp.sum(feat, axis=0, keepdims=True)

    # ---- last tile: finalize global average pool ----
    @pl.when(r == n_r - 1)
    def _finalize():
        glob_ref[0] = gap_acc[...] * (1.0 / float(H * W))


def ihoi_encode_and_geom(image_nhwc, mask_nhwc, w4d, bias, nTh, cTh, *,
                         row_tile=None):
    """Fused IHoi forward tensor math (encoder + frame transforms)."""
    B, H, W, _ = image_nhwc.shape
    Cin = image_nhwc.shape[-1] + mask_nhwc.shape[-1]   # modality='rgba' -> 4
    C = w4d.shape[-1]
    assert w4d.shape == (3, 3, Cin, C)

    if row_tile is None:
        cands = [t for t in range(1, H + 1)
                 if H % t == 0 and (t * W) % 8 == 0 and t * W <= 2048]
        row_tile = max(cands) if cands else 1
    assert H % row_tile == 0
    assert (row_tile * W) % 8 == 0, "flattened row tile must be sublane aligned"
    n_r = H // row_tile

    # 'rgba': concat mask as a 4th channel; SAME padding for the 3x3 conv; bf16.
    x = jnp.concatenate([image_nhwc, mask_nhwc], axis=-1)           # (B, H, W, 4)
    xpad = jnp.pad(x, ((0, 0), (1, 1), (1, 1), (0, 0))).astype(jnp.bfloat16)

    w_taps = w4d.reshape(9, Cin, C).astype(jnp.bfloat16)            # [kh*kw, cin, cout]
    bias2d = bias.reshape(1, C).astype(jnp.float32)
    nTh_r = nTh.reshape(B, 1, 16).astype(jnp.float32)
    cTh_r = cTh.reshape(B, 1, 16).astype(jnp.float32)

    kernel = functools.partial(ihoi_fused_kernel, H=H, W=W, Cin=Cin,
                               row_tile=row_tile)

    local, glob, hTx, cTx = pl.pallas_call(
        kernel,
        grid=(B, n_r),
        in_specs=[
            # padded image: resident per batch element, re-fetched only when b changes
            pl.BlockSpec((1, H + 2, W + 2, Cin), lambda b, r: (b, 0, 0, 0)),
            pl.BlockSpec((9, Cin, C), lambda b, r: (0, 0, 0)),
            pl.BlockSpec((1, C), lambda b, r: (0, 0)),
            pl.BlockSpec((1, 1, 16), lambda b, r: (b, 0, 0)),
            pl.BlockSpec((1, 1, 16), lambda b, r: (b, 0, 0)),
        ],
        out_specs=[
            pl.BlockSpec((1, row_tile * W, C), lambda b, r: (b, r, 0)),
            pl.BlockSpec((1, 1, C), lambda b, r: (b, 0, 0)),
            pl.BlockSpec((1, 1, 16), lambda b, r: (b, 0, 0)),
            pl.BlockSpec((1, 1, 16), lambda b, r: (b, 0, 0)),
        ],
        out_shape=[
            jax.ShapeDtypeStruct((B, H * W, C), jnp.bfloat16),
            jax.ShapeDtypeStruct((B, 1, C), jnp.float32),
            jax.ShapeDtypeStruct((B, 1, 16), jnp.float32),
            jax.ShapeDtypeStruct((B, 1, 16), jnp.float32),
        ],
        scratch_shapes=[pltpu.VMEM((1, C), jnp.float32)],
        compiler_params=pltpu.CompilerParams(
            dimension_semantics=("parallel", "arbitrary"),
            # per-step buffers are ~1-2 MB even at 224x224; explicit limit keeps
            # us portable across v5e/v6e and v7x's 64 MiB physical VMEM.
            vmem_limit_bytes=32 * 1024 * 1024),
    )(xpad, w_taps, bias2d, nTh_r, cTh_r)

    z_local = local                                 # (B, H*W, C) channels-last bf16
    z_glb = glob.reshape(B, C)
    return z_local, z_glb, hTx.reshape(B, 4, 4), cTx.reshape(B, 4, 4)


# ------------------------------------------------------------------
# IHoi forward wrapper
# ------------------------------------------------------------------
def init_params(key, cin=4, cout=256):
    # TODO(synk): the real ImageSpEnc is an external ResNet-based spatial encoder;
    # we implement a representative 3x3 conv + ReLU + GAP hot path with out_dim=256.
    k1, k2 = jax.random.split(key)
    w4d = 0.05 * jax.random.normal(k1, (3, 3, cin, cout), dtype=jnp.float32)  # HWIO
    bias = 0.01 * jax.random.normal(k2, (cout,), dtype=jnp.float32)
    return {"w4d": w4d, "b": bias}


def ihoi_forward(params, batch, *, row_tile=None):
    z_local, z_glb, hTx, cTx = ihoi_encode_and_geom(
        batch["image"], batch["obj_mask"], params["w4d"], params["b"],
        batch["nTh"], batch["cTh"], row_tile=row_tile)

    # xTh = inverse_rt(hTx) == nTh algebraically (double inverse) -> no second
    # inverse kernel; numerics stay well within tolerance.
    xTh = batch["nTh"].astype(jnp.float32)

    # TODO(synk): 'sdf' / 'sdf_hA' in the original forward are functools.partial
    # closures over the external PixCoord decoder and ManopthWrapper
    # (pose_to_transform); PerspectiveCameras(cam_f, cam_p) is construction-only.
    # No tensors are materialized for them in forward, so they are not reproduced.
    return {
        "image_feat": (z_glb, z_local),   # z_local kept channels-last (B, H*W, C)
        "hTx": hTx,
        "xTh": xTh,
        "cTx": cTx,                       # consumed inside the sdf closure originally
    }


# ------------------------------------------------------------------
# Deterministic example inputs + reference checks
# ------------------------------------------------------------------
def make_batch(key, B=2, H=16, W=16):
    ks = jax.random.split(key, 6)
    image = jax.random.normal(ks[0], (B, H, W, 3), dtype=jnp.float32)     # NHWC
    obj_mask = (jax.random.uniform(ks[1], (B, H, W, 1)) > 0.5).astype(jnp.float32)

    def make_T(angle_key, trans_key, scale):
        ang = jax.random.uniform(angle_key, (B,), minval=-1.0, maxval=1.0)
        t = 0.3 * jax.random.normal(trans_key, (B, 3))
        ca, sa = jnp.cos(ang), jnp.sin(ang)
        z = jnp.zeros_like(ca)
        o = jnp.ones_like(ca)
        R = jnp.stack([
            jnp.stack([ca, -sa, z], axis=-1),
            jnp.stack([sa, ca, z], axis=-1),
            jnp.stack([z, z, o], axis=-1),
        ], axis=-2) * scale
        top = jnp.concatenate([R, t[:, :, None]], axis=-1)                 # (B,3,4)
        bottom = jnp.broadcast_to(jnp.array([0., 0., 0., 1.]), (B, 1, 4))
        return jnp.concatenate([top, bottom], axis=1)                      # (B,4,4)

    nTh = make_T(ks[2], ks[3], 1.3)
    cTh = make_T(ks[4], ks[5], 1.0)

    return {
        "image": image,
        "obj_mask": obj_mask,
        "nTh": nTh,
        "cTh": cTh,
        "cam_f": jnp.full((B, 2), 100.0, dtype=jnp.float32),   # camera construction only
        "cam_p": jnp.zeros((B, 2), dtype=jnp.float32),
        "hA": jnp.zeros((B, 45), dtype=jnp.float32),           # used only inside sdf closure
    }


if __name__ == "__main__":
    key = jax.random.PRNGKey(0)
    pkey, bkey = jax.random.split(key)

    params = init_params(pkey, cin=4, cout=256)
    batch = make_batch(bkey, B=2, H=16, W=16)

    # row_tile=8 -> two spatial tiles per image: exercises the tiled GAP accumulation.
    out = jax.block_until_ready(ihoi_forward(params, batch, row_tile=8))

    # ---------------- reference checks (numpy, float64) ----------------
    B, H, W, _ = batch["image"].shape
    C = params["w4d"].shape[-1]

    x = jnp.concatenate([batch["image"], batch["obj_mask"]], axis=-1)      # (B,H,W,4)
    # kernel consumes bf16 inputs; build the reference from the same rounded values
    x_bf = np.asarray(x.astype(jnp.bfloat16).astype(jnp.float32), dtype=np.float64)
    w_bf = np.asarray(params["w4d"].astype(jnp.bfloat16).astype(jnp.float32),
                      dtype=np.float64)
    b_np = np.asarray(params["b"], dtype=np.float64)

    xp = np.pad(x_bf, ((0, 0), (1, 1), (1, 1), (0, 0)))
    cols = []
    for di in range(3):
        for dj in range(3):
            cols.append(xp[:, di:di + H, dj:dj + W, :])
    patches = np.concatenate(cols, axis=-1).reshape(B, H * W, 9 * 4)
    ref_local = np.maximum(patches @ w_bf.reshape(9 * 4, C) + b_np, 0.0)   # (B,HW,C)
    ref_glb = ref_local.mean(axis=1)

    nTh_np = np.asarray(batch["nTh"], dtype=np.float64)
    cTh_np = np.asarray(batch["cTh"], dtype=np.float64)
    ref_hTx = np.linalg.inv(nTh_np)
    ref_xTh = np.linalg.inv(ref_hTx)
    ref_cTx = cTh_np @ ref_hTx

    z_glb, z_local = out["image_feat"]
    np.testing.assert_allclose(
        np.asarray(z_local.astype(jnp.float32), dtype=np.float64), ref_local,
        rtol=2e-2, atol=2e-2)
    np.testing.assert_allclose(np.asarray(z_glb, dtype=np.float64), ref_glb,
                               rtol=5e-3, atol=5e-3)
    np.testing.assert_allclose(np.asarray(out["hTx"], dtype=np.float64), ref_hTx,
                               rtol=1e-3, atol=1e-3)
    np.testing.assert_allclose(np.asarray(out["xTh"], dtype=np.float64), ref_xTh,
                               rtol=1e-3, atol=1e-3)
    np.testing.assert_allclose(np.asarray(out["cTx"], dtype=np.float64), ref_cTx,
                               rtol=1e-3, atol=1e-3)

    print("KERNEL_OK")
</pallas_src>

<mosaic_0001>
module attributes {stable_mosaic.version = 11 : i64} {
  func.func @ihoi_fused_kernel(%arg0: i32, %arg1: i32, %arg2: memref<1x18x18x4xbf16, #tpu.memory_space<vmem>>, %arg3: memref<9x4x256xbf16, #tpu.memory_space<vmem>>, %arg4: memref<1x256xf32, #tpu.memory_space<vmem>>, %arg5: memref<1x1x16xf32, #tpu.memory_space<vmem>>, %arg6: memref<1x1x16xf32, #tpu.memory_space<vmem>>, %arg7: memref<1x128x256xbf16, #tpu.memory_space<vmem>>, %arg8: memref<1x1x256xf32, #tpu.memory_space<vmem>>, %arg9: memref<1x1x16xf32, #tpu.memory_space<vmem>>, %arg10: memref<1x1x16xf32, #tpu.memory_space<vmem>>, %arg11: memref<1x256xf32, #tpu.memory_space<vmem>>) attributes {dimension_semantics = [#tpu.dimension_semantics<parallel>, #tpu.dimension_semantics<arbitrary>], iteration_bounds = array<i64: 2, 2>, scalar_prefetch = 0 : i64, scratch_operands = 1 : i64, tpu.core_type = #tpu.core_type<tc>, window_params = [{transform_indices = @transform_0, window_bounds = array<i64: 1, 18, 18, 4>}, {pipeline_mode = #tpu.pipeline_mode<synchronous>, transform_indices = @transform_1, window_bounds = array<i64: 9, 4, 256>}, {pipeline_mode = #tpu.pipeline_mode<synchronous>, transform_indices = @transform_2, window_bounds = array<i64: 1, 256>}, {transform_indices = @transform_3, window_bounds = array<i64: 1, 1, 16>}, {transform_indices = @transform_4, window_bounds = array<i64: 1, 1, 16>}, {transform_indices = @transform_5, window_bounds = array<i64: 1, 128, 256>}, {transform_indices = @transform_6, window_bounds = array<i64: 1, 1, 256>}, {transform_indices = @transform_7, window_bounds = array<i64: 1, 1, 16>}, {transform_indices = @transform_8, window_bounds = array<i64: 1, 1, 16>}]} {
    %c0_i32 = arith.constant 0 : i32
    %0 = arith.cmpi eq, %arg1, %c0_i32 : i32
    %1 = arith.extui %0 : i1 to i32
    %c0_i32_0 = arith.constant 0 : i32
    %2 = arith.cmpi ne, %1, %c0_i32_0 : i32
    scf.if %2 {
      %c0_43 = arith.constant 0 : index
      %c0_44 = arith.constant 0 : index
      %c0_45 = arith.constant 0 : index
      %80 = vector.load %arg5[%c0_43, %c0_44, %c0_45] : memref<1x1x16xf32, #tpu.memory_space<vmem>>, vector<1x1x16xf32>
      %81 = vector.shape_cast %80 : vector<1x1x16xf32> to vector<1x16xf32>
      %c0_46 = arith.constant 0 : index
      %c0_47 = arith.constant 0 : index
      %c0_48 = arith.constant 0 : index
      %82 = vector.load %arg6[%c0_46, %c0_47, %c0_48] : memref<1x1x16xf32, #tpu.memory_space<vmem>>, vector<1x1x16xf32>
      %83 = vector.shape_cast %82 : vector<1x1x16xf32> to vector<1x16xf32>
      %84 = vector.extract_strided_slice %81 {offsets = [0, 0], sizes = [1, 1], strides = [1, 1]} : vector<1x16xf32> to vector<1x1xf32>
      %85 = vector.extract_strided_slice %81 {offsets = [0, 1], sizes = [1, 1], strides = [1, 1]} : vector<1x16xf32> to vector<1x1xf32>
      %86 = vector.extract_strided_slice %81 {offsets = [0, 2], sizes = [1, 1], strides = [1, 1]} : vector<1x16xf32> to vector<1x1xf32>
      %87 = vector.extract_strided_slice %81 {offsets = [0, 3], sizes = [1, 1], strides = [1, 1]} : vector<1x16xf32> to vector<1x1xf32>
      %88 = vector.extract_strided_slice %81 {offsets = [0, 4], sizes = [1, 1], strides = [1, 1]} : vector<1x16xf32> to vector<1x1xf32>
      %89 = vector.extract_strided_slice %81 {offsets = [0, 5], sizes = [1, 1], strides = [1, 1]} : vector<1x16xf32> to vector<1x1xf32>
      %90 = vector.extract_strided_slice %81 {offsets = [0, 6], sizes = [1, 1], strides = [1, 1]} : vector<1x16xf32> to vector<1x1xf32>
      %91 = vector.extract_strided_slice %81 {offsets = [0, 7], sizes = [1, 1], strides = [1, 1]} : vector<1x16xf32> to vector<1x1xf32>
      %92 = vector.extract_strided_slice %81 {offsets = [0, 8], sizes = [1, 1], strides = [1, 1]} : vector<1x16xf32> to vector<1x1xf32>
      %93 = vector.extract_strided_slice %81 {offsets = [0, 9], sizes = [1, 1], strides = [1, 1]} : vector<1x16xf32> to vector<1x1xf32>
      %94 = vector.extract_strided_slice %81 {offsets = [0, 10], sizes = [1, 1], strides = [1, 1]} : vector<1x16xf32> to vector<1x1xf32>
      %95 = vector.extract_strided_slice %81 {offsets = [0, 11], sizes = [1, 1], strides = [1, 1]} : vector<1x16xf32> to vector<1x1xf32>
      %96 = arith.mulf %89, %94 : vector<1x1xf32>
      %97 = arith.mulf %90, %93 : vector<1x1xf32>
      %98 = arith.subf %96, %97 : vector<1x1xf32>
      %99 = arith.mulf %86, %93 : vector<1x1xf32>
      %100 = arith.mulf %85, %94 : vector<1x1xf32>
      %101 = arith.subf %99, %100 : vector<1x1xf32>
      %102 = arith.mulf %85, %90 : vector<1x1xf32>
      %103 = arith.mulf %86, %89 : vector<1x1xf32>
      %104 = arith.subf %102, %103 : vector<1x1xf32>
      %105 = arith.mulf %90, %92 : vector<1x1xf32>
      %106 = arith.mulf %88, %94 : vector<1x1xf32>
      %107 = arith.subf %105, %106 : vector<1x1xf32>
      %108 = arith.mulf %84, %94 : vector<1x1xf32>
      %109 = arith.mulf %86, %92 : vector<1x1xf32>
      %110 = arith.subf %108, %109 : vector<1x1xf32>
      %111 = arith.mulf %86, %88 : vector<1x1xf32>
      %112 = arith.mulf %84, %90 : vector<1x1xf32>
      %113 = arith.subf %111, %112 : vector<1x1xf32>
      %114 = arith.mulf %88, %93 : vector<1x1xf32>
      %115 = arith.mulf %89, %92 : vector<1x1xf32>
      %116 = arith.subf %114, %115 : vector<1x1xf32>
      %117 = arith.mulf %85, %92 : vector<1x1xf32>
      %118 = arith.mulf %84, %93 : vector<1x1xf32>
      %119 = arith.subf %117, %118 : vector<1x1xf32>
      %120 = arith.mulf %84, %89 : vector<1x1xf32>
      %121 = arith.mulf %85, %88 : vector<1x1xf32>
      %122 = arith.subf %120, %121 : vector<1x1xf32>
      %123 = arith.mulf %84, %98 : vector<1x1xf32>
      %124 = arith.mulf %85, %107 : vector<1x1xf32>
      %125 = arith.addf %123, %124 : vector<1x1xf32>
      %126 = arith.mulf %86, %116 : vector<1x1xf32>
      %127 = arith.addf %125, %126 : vector<1x1xf32>
      %cst_49 = arith.constant 1.000000e+00 : f32
      %128 = vector.broadcast %cst_49 : f32 to vector<1x1xf32>
      %129 = arith.divf %128, %127 : vector<1x1xf32>
      %130 = arith.mulf %98, %129 : vector<1x1xf32>
      %131 = arith.mulf %101, %129 : vector<1x1xf32>
      %132 = arith.mulf %104, %129 : vector<1x1xf32>
      %133 = arith.mulf %107, %129 : vector<1x1xf32>
      %134 = arith.mulf %110, %129 : vector<1x1xf32>
      %135 = arith.mulf %113, %129 : vector<1x1xf32>
      %136 = arith.mulf %116, %129 : vector<1x1xf32>
      %137 = arith.mulf %119, %129 : vector<1x1xf32>
      %138 = arith.mulf %122, %129 : vector<1x1xf32>
      %139 = arith.mulf %130, %87 : vector<1x1xf32>
      %140 = arith.mulf %131, %91 : vector<1x1xf32>
      %141 = arith.addf %139, %140 : vector<1x1xf32>
      %142 = arith.mulf %132, %95 : vector<1x1xf32>
      %143 = arith.addf %141, %142 : vector<1x1xf32>
      %cst_50 = arith.constant 0.000000e+00 : f32
      %144 = vector.broadcast %cst_50 : f32 to vector<1x1xf32>
      %145 = arith.subf %144, %143 : vector<1x1xf32>
      %146 = arith.mulf %133, %87 : vector<1x1xf32>
      %147 = arith.mulf %134, %91 : vector<1x1xf32>
      %148 = arith.addf %146, %147 : vector<1x1xf32>
      %149 = arith.mulf %135, %95 : vector<1x1xf32>
      %150 = arith.addf %148, %149 : vector<1x1xf32>
      %cst_51 = arith.constant 0.000000e+00 : f32
      %151 = vector.broadcast %cst_51 : f32 to vector<1x1xf32>
      %152 = arith.subf %151, %150 : vector<1x1xf32>
      %153 = arith.mulf %136, %87 : vector<1x1xf32>
      %154 = arith.mulf %137, %91 : vector<1x1xf32>
      %155 = arith.addf %153, %154 : vector<1x1xf32>
      %156 = arith.mulf %138, %95 : vector<1x1xf32>
      %157 = arith.addf %155, %156 : vector<1x1xf32>
      %cst_52 = arith.constant 0.000000e+00 : f32
      %158 = vector.broadcast %cst_52 : f32 to vector<1x1xf32>
      %159 = arith.subf %158, %157 : vector<1x1xf32>
      %cst_53 = arith.constant 0.000000e+00 : f32
      %160 = vector.broadcast %cst_53 : f32 to vector<1x1xf32>
      %cst_54 = arith.constant 1.000000e+00 : f32
      %161 = vector.broadcast %cst_54 : f32 to vector<1x1xf32>
      %162 = tpu.concatenate %130, %131, %132, %145, %133, %134, %135, %152, %136, %137, %138, %159, %160, %160, %160, %161 in 1 : vector<1x1xf32>, vector<1x1xf32>, vector<1x1xf32>, vector<1x1xf32>, vector<1x1xf32>, vector<1x1xf32>, vector<1x1xf32>, vector<1x1xf32>, vector<1x1xf32>, vector<1x1xf32>, vector<1x1xf32>, vector<1x1xf32>, vector<1x1xf32>, vector<1x1xf32>, vector<1x1xf32>, vector<1x1xf32> -> vector<1x16xf32>
      %c0_55 = arith.constant 0 : index
      %c0_56 = arith.constant 0 : index
      %c0_57 = arith.constant 0 : index
      %163 = vector.load %arg9[%c0_55, %c0_56, %c0_57] : memref<1x1x16xf32, #tpu.memory_space<vmem>>, vector<1x1x16xf32>
      %164 = vector.shape_cast %163 : vector<1x1x16xf32> to vector<1x16xf32>
      %165 = vector.shape_cast %162 : vector<1x16xf32> to vector<1x1x16xf32>
      tpu.vector_store %arg9[%c0_55, %c0_56, %c0_57], %165 {strides = array<i32>} : memref<1x1x16xf32, #tpu.memory_space<vmem>>, vector<1x1x16xf32>,
      %166 = vector.extract_strided_slice %83 {offsets = [0, 0], sizes = [1, 1], strides = [1, 1]} : vector<1x16xf32> to vector<1x1xf32>
      %167 = vector.extract_strided_slice %162 {offsets = [0, 0], sizes = [1, 1], strides = [1, 1]} : vector<1x16xf32> to vector<1x1xf32>
      %168 = arith.mulf %166, %167 : vector<1x1xf32>
      %169 = vector.extract_strided_slice %83 {offsets = [0, 1], sizes = [1, 1], strides = [1, 1]} : vector<1x16xf32> to vector<1x1xf32>
      %170 = vector.extract_strided_slice %162 {offsets = [0, 4], sizes = [1, 1], strides = [1, 1]} : vector<1x16xf32> to vector<1x1xf32>
      %171 = arith.mulf %169, %170 : vector<1x1xf32>
      %172 = arith.addf %168, %171 : vector<1x1xf32>
      %173 = vector.extract_strided_slice %83 {offsets = [0, 2], sizes = [1, 1], strides = [1, 1]} : vector<1x16xf32> to vector<1x1xf32>
      %174 = vector.extract_strided_slice %162 {offsets = [0, 8], sizes = [1, 1], strides = [1, 1]} : vector<1x16xf32> to vector<1x1xf32>
      %175 = arith.mulf %173, %174 : vector<1x1xf32>
      %176 = arith.addf %172, %175 : vector<1x1xf32>
      %177 = vector.extract_strided_slice %83 {offsets = [0, 3], sizes = [1, 1], strides = [1, 1]} : vector<1x16xf32> to vector<1x1xf32>
      %178 = vector.extract_strided_slice %162 {offsets = [0, 12], sizes = [1, 1], strides = [1, 1]} : vector<1x16xf32> to vector<1x1xf32>
      %179 = arith.mulf %177, %178 : vector<1x1xf32>
      %180 = arith.addf %176, %179 : vector<1x1xf32>
      %181 = vector.extract_strided_slice %83 {offsets = [0, 0], sizes = [1, 1], strides = [1, 1]} : vector<1x16xf32> to vector<1x1xf32>
      %182 = vector.extract_strided_slice %162 {offsets = [0, 1], sizes = [1, 1], strides = [1, 1]} : vector<1x16xf32> to vector<1x1xf32>
      %183 = arith.mulf %181, %182 : vector<1x1xf32>
      %184 = vector.extract_strided_slice %83 {offsets = [0, 1], sizes = [1, 1], strides = [1, 1]} : vector<1x16xf32> to vector<1x1xf32>
      %185 = vector.extract_strided_slice %162 {offsets = [0, 5], sizes = [1, 1], strides = [1, 1]} : vector<1x16xf32> to vector<1x1xf32>
      %186 = arith.mulf %184, %185 : vector<1x1xf32>
      %187 = arith.addf %183, %186 : vector<1x1xf32>
      %188 = vector.extract_strided_slice %83 {offsets = [0, 2], sizes = [1, 1], strides = [1, 1]} : vector<1x16xf32> to vector<1x1xf32>
      %189 = vector.extract_strided_slice %162 {offsets = [0, 9], sizes = [1, 1], strides = [1, 1]} : vector<1x16xf32> to vector<1x1xf32>
      %190 = arith.mulf %188, %189 : vector<1x1xf32>
      %191 = arith.addf %187, %190 : vector<1x1xf32>
      %192 = vector.extract_strided_slice %83 {offsets = [0, 3], sizes = [1, 1], strides = [1, 1]} : vector<1x16xf32> to vector<1x1xf32>
      %193 = vector.extract_strided_slice %162 {offsets = [0, 13], sizes = [1, 1], strides = [1, 1]} : vector<1x16xf32> to vector<1x1xf32>
      %194 = arith.mulf %192, %193 : vector<1x1xf32>
      %195 = arith.addf %191, %194 : vector<1x1xf32>
      %196 = vector.extract_strided_slice %83 {offsets = [0, 0], sizes = [1, 1], strides = [1, 1]} : vector<1x16xf32> to vector<1x1xf32>
      %197 = vector.extract_strided_slice %162 {offsets = [0, 2], sizes = [1, 1], strides = [1, 1]} : vector<1x16xf32> to vector<1x1xf32>
      %198 = arith.mulf %196, %197 : vector<1x1xf32>
      %199 = vector.extract_strided_slice %83 {offsets = [0, 1], sizes = [1, 1], strides = [1, 1]} : vector<1x16xf32> to vector<1x1xf32>
      %200 = vector.extract_strided_slice %162 {offsets = [0, 6], sizes = [1, 1], strides = [1, 1]} : vector<1x16xf32> to vector<1x1xf32>
      %201 = arith.mulf %199, %200 : vector<1x1xf32>
      %202 = arith.addf %198, %201 : vector<1x1xf32>
      %203 = vector.extract_strided_slice %83 {offsets = [0, 2], sizes = [1, 1], strides = [1, 1]} : vector<1x16xf32> to vector<1x1xf32>
      %204 = vector.extract_strided_slice %162 {offsets = [0, 10], sizes = [1, 1], strides = [1, 1]} : vector<1x16xf32> to vector<1x1xf32>
      %205 = arith.mulf %203, %204 : vector<1x1xf32>
      %206 = arith.addf %202, %205 : vector<1x1xf32>
      %207 = vector.extract_strided_slice %83 {offsets = [0, 3], sizes = [1, 1], strides = [1, 1]} : vector<1x16xf32> to vector<1x1xf32>
      %208 = vector.extract_strided_slice %162 {offsets = [0, 14], sizes = [1, 1], strides = [1, 1]} : vector<1x16xf32> to vector<1x1xf32>
      %209 = arith.mulf %207, %208 : vector<1x1xf32>
      %210 = arith.addf %206, %209 : vector<1x1xf32>
      %211 = vector.extract_strided_slice %83 {offsets = [0, 0], sizes = [1, 1], strides = [1, 1]} : vector<1x16xf32> to vector<1x1xf32>
      %212 = vector.extract_strided_slice %162 {offsets = [0, 3], sizes = [1, 1], strides = [1, 1]} : vector<1x16xf32> to vector<1x1xf32>
      %213 = arith.mulf %211, %212 : vector<1x1xf32>
      %214 = vector.extract_strided_slice %83 {offsets = [0, 1], sizes = [1, 1], strides = [1, 1]} : vector<1x16xf32> to vector<1x1xf32>
      %215 = vector.extract_strided_slice %162 {offsets = [0, 7], sizes = [1, 1], strides = [1, 1]} : vector<1x16xf32> to vector<1x1xf32>
      %216 = arith.mulf %214, %215 : vector<1x1xf32>
      %217 = arith.addf %213, %216 : vector<1x1xf32>
      %218 = vector.extract_strided_slice %83 {offsets = [0, 2], sizes = [1, 1], strides = [1, 1]} : vector<1x16xf32> to vector<1x1xf32>
      %219 = vector.extract_strided_slice %162 {offsets = [0, 11], sizes = [1, 1], strides = [1, 1]} : vector<1x16xf32> to vector<1x1xf32>
      %220 = arith.mulf %218, %219 : vector<1x1xf32>
      %221 = arith.addf %217, %220 : vector<1x1xf32>
      %222 = vector.extract_strided_slice %83 {offsets = [0, 3], sizes = [1, 1], strides = [1, 1]} : vector<1x16xf32> to vector<1x1xf32>
      %223 = vector.extract_strided_slice %162 {offsets = [0, 15], sizes = [1, 1], strides = [1, 1]} : vector<1x16xf32> to vector<1x1xf32>
      %224 = arith.mulf %222, %223 : vector<1x1xf32>
      %225 = arith.addf %221, %224 : vector<1x1xf32>
      %226 = vector.extract_strided_slice %83 {offsets = [0, 4], sizes = [1, 1], strides = [1, 1]} : vector<1x16xf32> to vector<1x1xf32>
      %227 = vector.extract_strided_slice %162 {offsets = [0, 0], sizes = [1, 1], strides = [1, 1]} : vector<1x16xf32> to vector<1x1xf32>
      %228 = arith.mulf %226, %227 : vector<1x1xf32>
      %229 = vector.extract_strided_slice %83 {offsets = [0, 5], sizes = [1, 1], strides = [1, 1]} : vector<1x16xf32> to vector<1x1xf32>
      %230 = vector.extract_strided_slice %162 {offsets = [0, 4], sizes = [1, 1], strides = [1, 1]} : vector<1x16xf32> to vector<1x1xf32>
      %231 = arith.mulf %229, %230 : vector<1x1xf32>
      %232 = arith.addf %228, %231 : vector<1x1xf32>
      %233 = vector.extract_strided_slice %83 {offsets = [0, 6], sizes = [1, 1], strides = [1, 1]} : vector<1x16xf32> to vector<1x1xf32>
      %234 = vector.extract_strided_slice %162 {offsets = [0, 8], sizes = [1, 1], strides = [1, 1]} : vector<1x16xf32> to vector<1x1xf32>
      %235 = arith.mulf %233, %234 : vector<1x1xf32>
      %236 = arith.addf %232, %235 : vector<1x1xf32>
      %237 = vector.extract_strided_slice %83 {offsets = [0, 7], sizes = [1, 1], strides = [1, 1]} : vector<1x16xf32> to vector<1x1xf32>
      %238 = vector.extract_strided_slice %162 {offsets = [0, 12], sizes = [1, 1], strides = [1, 1]} : vector<1x16xf32> to vector<1x1xf32>
      %239 = arith.mulf %237, %238 : vector<1x1xf32>
      %240 = arith.addf %236, %239 : vector<1x1xf32>
      %241 = vector.extract_strided_slice %83 {offsets = [0, 4], sizes = [1, 1], strides = [1, 1]} : vector<1x16xf32> to vector<1x1xf32>
      %242 = vector.extract_strided_slice %162 {offsets = [0, 1], sizes = [1, 1], strides = [1, 1]} : vector<1x16xf32> to vector<1x1xf32>
      %243 = arith.mulf %241, %242 : vector<1x1xf32>
      %244 = vector.extract_strided_slice %83 {offsets = [0, 5], sizes = [1, 1], strides = [1, 1]} : vector<1x16xf32> to vector<1x1xf32>
      %245 = vector.extract_strided_slice %162 {offsets = [0, 5], sizes = [1, 1], strides = [1, 1]} : vector<1x16xf32> to vector<1x1xf32>
      %246 = arith.mulf %244, %245 : vector<1x1xf32>
      %247 = arith.addf %243, %246 : vector<1x1xf32>
      %248 = vector.extract_strided_slice %83 {offsets = [0, 6], sizes = [1, 1], strides = [1, 1]} : vector<1x16xf32> to vector<1x1xf32>
      %249 = vector.extract_strided_slice %162 {offsets = [0, 9], sizes = [1, 1], strides = [1, 1]} : vector<1x16xf32> to vector<1x1xf32>
      %250 = arith.mulf %248, %249 : vector<1x1xf32>
      %251 = arith.addf %247, %250 : vector<1x1xf32>
      %252 = vector.extract_strided_slice %83 {offsets = [0, 7], sizes = [1, 1], strides = [1, 1]} : vector<1x16xf32> to vector<1x1xf32>
      %253 = vector.extract_strided_slice %162 {offsets = [0, 13], sizes = [1, 1], strides = [1, 1]} : vector<1x16xf32> to vector<1x1xf32>
      %254 = arith.mulf %252, %253 : vector<1x1xf32>
      %255 = arith.addf %251, %254 : vector<1x1xf32>
      %256 = vector.extract_strided_slice %83 {offsets = [0, 4], sizes = [1, 1], strides = [1, 1]} : vector<1x16xf32> to vector<1x1xf32>
      %257 = vector.extract_strided_slice %162 {offsets = [0, 2], sizes = [1, 1], strides = [1, 1]} : vector<1x16xf32> to vector<1x1xf32>
      %258 = arith.mulf %256, %257 : vector<1x1xf32>
      %259 = vector.extract_strided_slice %83 {offsets = [0, 5], sizes = [1, 1], strides = [1, 1]} : vector<1x16xf32> to vector<1x1xf32>
      %260 = vector.extract_strided_slice %162 {offsets = [0, 6], sizes = [1, 1], strides = [1, 1]} : vector<1x16xf32> to vector<1x1xf32>
      %261 = arith.mulf %259, %260 : vector<1x1xf32>
      %262 = arith.addf %258, %261 : vector<1x1xf32>
      %263 = vector.extract_strided_slice %83 {offsets = [0, 6], sizes = [1, 1], strides = [1, 1]} : vector<1x16xf32> to vector<1x1xf32>
      %264 = vector.extract_strided_slice %162 {offsets = [0, 10], sizes = [1, 1], strides = [1, 1]} : vector<1x16xf32> to vector<1x1xf32>
      %265 = arith.mulf %263, %264 : vector<1x1xf32>
      %266 = arith.addf %262, %265 : vector<1x1xf32>
      %267 = vector.extract_strided_slice %83 {offsets = [0, 7], sizes = [1, 1], strides = [1, 1]} : vector<1x16xf32> to vector<1x1xf32>
      %268 = vector.extract_strided_slice %162 {offsets = [0, 14], sizes = [1, 1], strides = [1, 1]} : vector<1x16xf32> to vector<1x1xf32>
      %269 = arith.mulf %267, %268 : vector<1x1xf32>
      %270 = arith.addf %266, %269 : vector<1x1xf32>
      %271 = vector.extract_strided_slice %83 {offsets = [0, 4], sizes = [1, 1], strides = [1, 1]} : vector<1x16xf32> to vector<1x1xf32>
      %272 = vector.extract_strided_slice %162 {offsets = [0, 3], sizes = [1, 1], strides = [1, 1]} : vector<1x16xf32> to vector<1x1xf32>
      %273 = arith.mulf %271, %272 : vector<1x1xf32>
      %274 = vector.extract_strided_slice %83 {offsets = [0, 5], sizes = [1, 1], strides = [1, 1]} : vector<1x16xf32> to vector<1x1xf32>
      %275 = vector.extract_strided_slice %162 {offsets = [0, 7], sizes = [1, 1], strides = [1, 1]} : vector<1x16xf32> to vector<1x1xf32>
      %276 = arith.mulf %274, %275 : vector<1x1xf32>
      %277 = arith.addf %273, %276 : vector<1x1xf32>
      %278 = vector.extract_strided_slice %83 {offsets = [0, 6], sizes = [1, 1], strides = [1, 1]} : vector<1x16xf32> to vector<1x1xf32>
      %279 = vector.extract_strided_slice %162 {offsets = [0, 11], sizes = [1, 1], strides = [1, 1]} : vector<1x16xf32> to vector<1x1xf32>
      %280 = arith.mulf %278, %279 : vector<1x1xf32>
      %281 = arith.addf %277, %280 : vector<1x1xf32>
      %282 = vector.extract_strided_slice %83 {offsets = [0, 7], sizes = [1, 1], strides = [1, 1]} : vector<1x16xf32> to vector<1x1xf32>
      %283 = vector.extract_strided_slice %162 {offsets = [0, 15], sizes = [1, 1], strides = [1, 1]} : vector<1x16xf32> to vector<1x1xf32>
      %284 = arith.mulf %282, %283 : vector<1x1xf32>
      %285 = arith.addf %281, %284 : vector<1x1xf32>
      %286 = vector.extract_strided_slice %83 {offsets = [0, 8], sizes = [1, 1], strides = [1, 1]} : vector<1x16xf32> to vector<1x1xf32>
      %287 = vector.extract_strided_slice %162 {offsets = [0, 0], sizes = [1, 1], strides = [1, 1]} : vector<1x16xf32> to vector<1x1xf32>
      %288 = arith.mulf %286, %287 : vector<1x1xf32>
      %289 = vector.extract_strided_slice %83 {offsets = [0, 9], sizes = [1, 1], strides = [1, 1]} : vector<1x16xf32> to vector<1x1xf32>
      %290 = vector.extract_strided_slice %162 {offsets = [0, 4], sizes = [1, 1], strides = [1, 1]} : vector<1x16xf32> to vector<1x1xf32>
      %291 = arith.mulf %289, %290 : vector<1x1xf32>
      %292 = arith.addf %288, %291 : vector<1x1xf32>
      %293 = vector.extract_strided_slice %83 {offsets = [0, 10], sizes = [1, 1], strides = [1, 1]} : vector<1x16xf32> to vector<1x1xf32>
      %294 = vector.extract_strided_slice %162 {offsets = [0, 8], sizes = [1, 1], strides = [1, 1]} : vector<1x16xf32> to vector<1x1xf32>
      %295 = arith.mulf %293, %294 : vector<1x1xf32>
      %296 = arith.addf %292, %295 : vector<1x1xf32>
      %297 = vector.extract_strided_slice %83 {offsets = [0, 11], sizes = [1, 1], strides = [1, 1]} : vector<1x16xf32> to vector<1x1xf32>
      %298 = vector.extract_strided_slice %162 {offsets = [0, 12], sizes = [1, 1], strides = [1, 1]} : vector<1x16xf32> to vector<1x1xf32>
      %299 = arith.mulf %297, %298 : vector<1x1xf32>
      %300 = arith.addf %296, %299 : vector<1x1xf32>
      %301 = vector.extract_strided_slice %83 {offsets = [0, 8], sizes = [1, 1], strides = [1, 1]} : vector<1x16xf32> to vector<1x1xf32>
      %302 = vector.extract_strided_slice %162 {offsets = [0, 1], sizes = [1, 1], strides = [1, 1]} : vector<1x16xf32> to vector<1x1xf32>
      %303 = arith.mulf %301, %302 : vector<1x1xf32>
      %304 = vector.extract_strided_slice %83 {offsets = [0, 9], sizes = [1, 1], strides = [1, 1]} : vector<1x16xf32> to vector<1x1xf32>
      %305 = vector.extract_strided_slice %162 {offsets = [0, 5], sizes = [1, 1], strides = [1, 1]} : vector<1x16xf32> to vector<1x1xf32>
      %306 = arith.mulf %304, %305 : vector<1x1xf32>
      %307 = arith.addf %303, %306 : vector<1x1xf32>
      %308 = vector.extract_strided_slice %83 {offsets = [0, 10], sizes = [1, 1], strides = [1, 1]} : vector<1x16xf32> to vector<1x1xf32>
      %309 = vector.extract_strided_slice %162 {offsets = [0, 9], sizes = [1, 1], strides = [1, 1]} : vector<1x16xf32> to vector<1x1xf32>
      %310 = arith.mulf %308, %309 : vector<1x1xf32>
      %311 = arith.addf %307, %310 : vector<1x1xf32>
      %312 = vector.extract_strided_slice %83 {offsets = [0, 11], sizes = [1, 1], strides = [1, 1]} : vector<1x16xf32> to vector<1x1xf32>
      %313 = vector.extract_strided_slice %162 {offsets = [0, 13], sizes = [1, 1], strides = [1, 1]} : vector<1x16xf32> to vector<1x1xf32>
      %314 = arith.mulf %312, %313 : vector<1x1xf32>
      %315 = arith.addf %311, %314 : vector<1x1xf32>
      %316 = vector.extract_strided_slice %83 {offsets = [0, 8], sizes = [1, 1], strides = [1, 1]} : vector<1x16xf32> to vector<1x1xf32>
      %317 = vector.extract_strided_slice %162 {offsets = [0, 2], sizes = [1, 1], strides = [1, 1]} : vector<1x16xf32> to vector<1x1xf32>
      %318 = arith.mulf %316, %317 : vector<1x1xf32>
      %319 = vector.extract_strided_slice %83 {offsets = [0, 9], sizes = [1, 1], strides = [1, 1]} : vector<1x16xf32> to vector<1x1xf32>
      %320 = vector.extract_strided_slice %162 {offsets = [0, 6], sizes = [1, 1], strides = [1, 1]} : vector<1x16xf32> to vector<1x1xf32>
      %321 = arith.mulf %319, %320 : vector<1x1xf32>
      %322 = arith.addf %318, %321 : vector<1x1xf32>
      %323 = vector.extract_strided_slice %83 {offsets = [0, 10], sizes = [1, 1], strides = [1, 1]} : vector<1x16xf32> to vector<1x1xf32>
      %324 = vector.extract_strided_slice %162 {offsets = [0, 10], sizes = [1, 1], strides = [1, 1]} : vector<1x16xf32> to vector<1x1xf32>
      %325 = arith.mulf %323, %324 : vector<1x1xf32>
      %326 = arith.addf %322, %325 : vector<1x1xf32>
      %327 = vector.extract_strided_slice %83 {offsets = [0, 11], sizes = [1, 1], strides = [1, 1]} : vector<1x16xf32> to vector<1x1xf32>
      %328 = vector.extract_strided_slice %162 {offsets = [0, 14], sizes = [1, 1], strides = [1, 1]} : vector<1x16xf32> to vector<1x1xf32>
      %329 = arith.mulf %327, %328 : vector<1x1xf32>
      %330 = arith.addf %326, %329 : vector<1x1xf32>
      %331 = vector.extract_strided_slice %83 {offsets = [0, 8], sizes = [1, 1], strides = [1, 1]} : vector<1x16xf32> to vector<1x1xf32>
      %332 = vector.extract_strided_slice %162 {offsets = [0, 3], sizes = [1, 1], strides = [1, 1]} : vector<1x16xf32> to vector<1x1xf32>
      %333 = arith.mulf %331, %332 : vector<1x1xf32>
      %334 = vector.extract_strided_slice %83 {offsets = [0, 9], sizes = [1, 1], strides = [1, 1]} : vector<1x16xf32> to vector<1x1xf32>
      %335 = vector.extract_strided_slice %162 {offsets = [0, 7], sizes = [1, 1], strides = [1, 1]} : vector<1x16xf32> to vector<1x1xf32>
      %336 = arith.mulf %334, %335 : vector<1x1xf32>
      %337 = arith.addf %333, %336 : vector<1x1xf32>
      %338 = vector.extract_strided_slice %83 {offsets = [0, 10], sizes = [1, 1], strides = [1, 1]} : vector<1x16xf32> to vector<1x1xf32>
      %339 = vector.extract_strided_slice %162 {offsets = [0, 11], sizes = [1, 1], strides = [1, 1]} : vector<1x16xf32> to vector<1x1xf32>
      %340 = arith.mulf %338, %339 : vector<1x1xf32>
      %341 = arith.addf %337, %340 : vector<1x1xf32>
      %342 = vector.extract_strided_slice %83 {offsets = [0, 11], sizes = [1, 1], strides = [1, 1]} : vector<1x16xf32> to vector<1x1xf32>
      %343 = vector.extract_strided_slice %162 {offsets = [0, 15], sizes = [1, 1], strides = [1, 1]} : vector<1x16xf32> to vector<1x1xf32>
      %344 = arith.mulf %342, %343 : vector<1x1xf32>
      %345 = arith.addf %341, %344 : vector<1x1xf32>
      %346 = vector.extract_strided_slice %83 {offsets = [0, 12], sizes = [1, 1], strides = [1, 1]} : vector<1x16xf32> to vector<1x1xf32>
      %347 = vector.extract_strided_slice %162 {offsets = [0, 0], sizes = [1, 1], strides = [1, 1]} : vector<1x16xf32> to vector<1x1xf32>
      %348 = arith.mulf %346, %347 : vector<1x1xf32>
      %349 = vector.extract_strided_slice %83 {offsets = [0, 13], sizes = [1, 1], strides = [1, 1]} : vector<1x16xf32> to vector<1x1xf32>
      %350 = vector.extract_strided_slice %162 {offsets = [0, 4], sizes = [1, 1], strides = [1, 1]} : vector<1x16xf32> to vector<1x1xf32>
      %351 = arith.mulf %349, %350 : vector<1x1xf32>
      %352 = arith.addf %348, %351 : vector<1x1xf32>
      %353 = vector.extract_strided_slice %83 {offsets = [0, 14], sizes = [1, 1], strides = [1, 1]} : vector<1x16xf32> to vector<1x1xf32>
      %354 = vector.extract_strided_slice %162 {offsets = [0, 8], sizes = [1, 1], strides = [1, 1]} : vector<1x16xf32> to vector<1x1xf32>
      %355 = arith.mulf %353, %354 : vector<1x1xf32>
      %356 = arith.addf %352, %355 : vector<1x1xf32>
      %357 = vector.extract_strided_slice %83 {offsets = [0, 15], sizes = [1, 1], strides = [1, 1]} : vector<1x16xf32> to vector<1x1xf32>
      %358 = vector.extract_strided_slice %162 {offsets = [0, 12], sizes = [1, 1], strides = [1, 1]} : vector<1x16xf32> to vector<1x1xf32>
      %359 = arith.mulf %357, %358 : vector<1x1xf32>
      %360 = arith.addf %356, %359 : vector<1x1xf32>
      %361 = vector.extract_strided_slice %83 {offsets = [0, 12], sizes = [1, 1], strides = [1, 1]} : vector<1x16xf32> to vector<1x1xf32>
      %362 = vector.extract_strided_slice %162 {offsets = [0, 1], sizes = [1, 1], strides = [1, 1]} : vector<1x16xf32> to vector<1x1xf32>
      %363 = arith.mulf %361, %362 : vector<1x1xf32>
      %364 = vector.extract_strided_slice %83 {offsets = [0, 13], sizes = [1, 1], strides = [1, 1]} : vector<1x16xf32> to vector<1x1xf32>
      %365 = vector.extract_strided_slice %162 {offsets = [0, 5], sizes = [1, 1], strides = [1, 1]} : vector<1x16xf32> to vector<1x1xf32>
      %366 = arith.mulf %364, %365 : vector<1x1xf32>
      %367 = arith.addf %363, %366 : vector<1x1xf32>
      %368 = vector.extract_strided_slice %83 {offsets = [0, 14], sizes = [1, 1], strides = [1, 1]} : vector<1x16xf32> to vector<1x1xf32>
      %369 = vector.extract_strided_slice %162 {offsets = [0, 9], sizes = [1, 1], strides = [1, 1]} : vector<1x16xf32> to vector<1x1xf32>
      %370 = arith.mulf %368, %369 : vector<1x1xf32>
      %371 = arith.addf %367, %370 : vector<1x1xf32>
      %372 = vector.extract_strided_slice %83 {offsets = [0, 15], sizes = [1, 1], strides = [1, 1]} : vector<1x16xf32> to vector<1x1xf32>
      %373 = vector.extract_strided_slice %162 {offsets = [0, 13], sizes = [1, 1], strides = [1, 1]} : vector<1x16xf32> to vector<1x1xf32>
      %374 = arith.mulf %372, %373 : vector<1x1xf32>
      %375 = arith.addf %371, %374 : vector<1x1xf32>
      %376 = vector.extract_strided_slice %83 {offsets = [0, 12], sizes = [1, 1], strides = [1, 1]} : vector<1x16xf32> to vector<1x1xf32>
      %377 = vector.extract_strided_slice %162 {offsets = [0, 2], sizes = [1, 1], strides = [1, 1]} : vector<1x16xf32> to vector<1x1xf32>
      %378 = arith.mulf %376, %377 : vector<1x1xf32>
      %379 = vector.extract_strided_slice %83 {offsets = [0, 13], sizes = [1, 1], strides = [1, 1]} : vector<1x16xf32> to vector<1x1xf32>
      %380 = vector.extract_strided_slice %162 {offsets = [0, 6], sizes = [1, 1], strides = [1, 1]} : vector<1x16xf32> to vector<1x1xf32>
      %381 = arith.mulf %379, %380 : vector<1x1xf32>
      %382 = arith.addf %378, %381 : vector<1x1xf32>
      %383 = vector.extract_strided_slice %83 {offsets = [0, 14], sizes = [1, 1], strides = [1, 1]} : vector<1x16xf32> to vector<1x1xf32>
      %384 = vector.extract_strided_slice %162 {offsets = [0, 10], sizes = [1, 1], strides = [1, 1]} : vector<1x16xf32> to vector<1x1xf32>
      %385 = arith.mulf %383, %384 : vector<1x1xf32>
      %386 = arith.addf %382, %385 : vector<1x1xf32>
      %387 = vector.extract_strided_slice %83 {offsets = [0, 15], sizes = [1, 1], strides = [1, 1]} : vector<1x16xf32> to vector<1x1xf32>
      %388 = vector.extract_strided_slice %162 {offsets = [0, 14], sizes = [1, 1], strides = [1, 1]} : vector<1x16xf32> to vector<1x1xf32>
      %389 = arith.mulf %387, %388 : vector<1x1xf32>
      %390 = arith.addf %386, %389 : vector<1x1xf32>
      %391 = vector.extract_strided_slice %83 {offsets = [0, 12], sizes = [1, 1], strides = [1, 1]} : vector<1x16xf32> to vector<1x1xf32>
      %392 = vector.extract_strided_slice %162 {offsets = [0, 3], sizes = [1, 1], strides = [1, 1]} : vector<1x16xf32> to vector<1x1xf32>
      %393 = arith.mulf %391, %392 : vector<1x1xf32>
      %394 = vector.extract_strided_slice %83 {offsets = [0, 13], sizes = [1, 1], strides = [1, 1]} : vector<1x16xf32> to vector<1x1xf32>
      %395 = vector.extract_strided_slice %162 {offsets = [0, 7], sizes = [1, 1], strides = [1, 1]} : vector<1x16xf32> to vector<1x1xf32>
      %396 = arith.mulf %394, %395 : vector<1x1xf32>
      %397 = arith.addf %393, %396 : vector<1x1xf32>
      %398 = vector.extract_strided_slice %83 {offsets = [0, 14], sizes = [1, 1], strides = [1, 1]} : vector<1x16xf32> to vector<1x1xf32>
      %399 = vector.extract_strided_slice %162 {offsets = [0, 11], sizes = [1, 1], strides = [1, 1]} : vector<1x16xf32> to vector<1x1xf32>
      %400 = arith.mulf %398, %399 : vector<1x1xf32>
      %401 = arith.addf %397, %400 : vector<1x1xf32>
      %402 = vector.extract_strided_slice %83 {offsets = [0, 15], sizes = [1, 1], strides = [1, 1]} : vector<1x16xf32> to vector<1x1xf32>
      %403 = vector.extract_strided_slice %162 {offsets = [0, 15], sizes = [1, 1], strides = [1, 1]} : vector<1x16xf32> to vector<1x1xf32>
      %404 = arith.mulf %402, %403 : vector<1x1xf32>
      %405 = arith.addf %401, %404 : vector<1x1xf32>
      %406 = tpu.concatenate %180, %195, %210, %225, %240, %255, %270, %285, %300, %315, %330, %345, %360, %375, %390, %405 in 1 : vector<1x1xf32>, vector<1x1xf32>, vector<1x1xf32>, vector<1x1xf32>, vector<1x1xf32>, vector<1x1xf32>, vector<1x1xf32>, vector<1x1xf32>, vector<1x1xf32>, vector<1x1xf32>, vector<1x1xf32>, vector<1x1xf32>, vector<1x1xf32>, vector<1x1xf32>, vector<1x1xf32>, vector<1x1xf32> -> vector<1x16xf32>
      %c0_58 = arith.constant 0 : index
      %c0_59 = arith.constant 0 : index
      %c0_60 = arith.constant 0 : index
      %407 = vector.load %arg10[%c0_58, %c0_59, %c0_60] : memref<1x1x16xf32, #tpu.memory_space<vmem>>, vector<1x1x16xf32>
      %408 = vector.shape_cast %407 : vector<1x1x16xf32> to vector<1x16xf32>
      %409 = vector.shape_cast %406 : vector<1x16xf32> to vector<1x1x16xf32>
      tpu.vector_store %arg10[%c0_58, %c0_59, %c0_60], %409 {strides = array<i32>} : memref<1x1x16xf32, #tpu.memory_space<vmem>>, vector<1x1x16xf32>,
      %cst_61 = arith.constant 0.000000e+00 : f32
      %410 = vector.broadcast %cst_61 : f32 to vector<1x256xf32>
      %c0_62 = arith.constant 0 : index
      %c0_63 = arith.constant 0 : index
      %411 = vector.load %arg11[%c0_62, %c0_63] : memref<1x256xf32, #tpu.memory_space<vmem>>, vector<1x256xf32>
      tpu.vector_store %arg11[%c0_62, %c0_63], %410 {strides = array<i32>} : memref<1x256xf32, #tpu.memory_space<vmem>>, vector<1x256xf32>,
    } else {
    }
    %c8_i32 = arith.constant 8 : i32
    %3 = arith.muli %arg1, %c8_i32 : i32
    %4 = tpu.assume_multiple %3, 8 : i32
    %c0 = arith.constant 0 : index
    %5 = arith.index_cast %4 : i32 to index
    %c0_1 = arith.constant 0 : index
    %c0_2 = arith.constant 0 : index
    %6 = vector.load %arg2[%c0, %5, %c0_1, %c0_2] : memref<1x18x18x4xbf16, #tpu.memory_space<vmem>>, vector<1x10x18x4xbf16>
    %7 = vector.shape_cast %6 : vector<1x10x18x4xbf16> to vector<10x18x4xbf16>
    %cst = arith.constant 0.000000e+00 : f32
    %8 = vector.broadcast %cst : f32 to vector<128x256xf32>
    %9 = vector.extract_strided_slice %7 {offsets = [0, 0, 0], sizes = [8, 16, 4], strides = [1, 1, 1]} : vector<10x18x4xbf16> to vector<8x16x4xbf16>
    %10 = vector.shape_cast %9 : vector<8x16x4xbf16> to vector<128x4xbf16>
    %c0_3 = arith.constant 0 : index
    %c0_4 = arith.constant 0 : index
    %c0_5 = arith.constant 0 : index
    %11 = vector.load %arg3[%c0_3, %c0_4, %c0_5] : memref<9x4x256xbf16, #tpu.memory_space<vmem>>, vector<1x4x256xbf16>
    %12 = vector.shape_cast %11 : vector<1x4x256xbf16> to vector<4x256xbf16>
    %cst_6 = arith.constant dense<0.000000e+00> : vector<128x256xf32>
    %13 = tpu.matmul %10, %12, %cst_6 {dimension_numbers = #tpu.dot_dimension_numbers<[1], [0], [0], [1], [0, 0, 1, 1], [], []>} : vector<128x4xbf16>, vector<4x256xbf16>, vector<128x256xf32> -> vector<128x256xf32>
    %14 = arith.addf %8, %13 : vector<128x256xf32>
    %15 = vector.extract_strided_slice %7 {offsets = [0, 1, 0], sizes = [8, 16, 4], strides = [1, 1, 1]} : vector<10x18x4xbf16> to vector<8x16x4xbf16>
    %16 = vector.shape_cast %15 : vector<8x16x4xbf16> to vector<128x4xbf16>
    %c1 = arith.constant 1 : index
    %c0_7 = arith.constant 0 : index
    %c0_8 = arith.constant 0 : index
    %17 = vector.load %arg3[%c1, %c0_7, %c0_8] : memref<9x4x256xbf16, #tpu.memory_space<vmem>>, vector<1x4x256xbf16>
    %18 = vector.shape_cast %17 : vector<1x4x256xbf16> to vector<4x256xbf16>
    %cst_9 = arith.constant dense<0.000000e+00> : vector<128x256xf32>
    %19 = tpu.matmul %16, %18, %cst_9 {dimension_numbers = #tpu.dot_dimension_numbers<[1], [0], [0], [1], [0, 0, 1, 1], [], []>} : vector<128x4xbf16>, vector<4x256xbf16>, vector<128x256xf32> -> vector<128x256xf32>
    %20 = arith.addf %14, %19 : vector<128x256xf32>
    %21 = vector.extract_strided_slice %7 {offsets = [0, 2, 0], sizes = [8, 16, 4], strides = [1, 1, 1]} : vector<10x18x4xbf16> to vector<8x16x4xbf16>
    %22 = vector.shape_cast %21 : vector<8x16x4xbf16> to vector<128x4xbf16>
    %c2 = arith.constant 2 : index
    %c0_10 = arith.constant 0 : index
    %c0_11 = arith.constant 0 : index
    %23 = vector.load %arg3[%c2, %c0_10, %c0_11] : memref<9x4x256xbf16, #tpu.memory_space<vmem>>, vector<1x4x256xbf16>
    %24 = vector.shape_cast %23 : vector<1x4x256xbf16> to vector<4x256xbf16>
    %cst_12 = arith.constant dense<0.000000e+00> : vector<128x256xf32>
    %25 = tpu.matmul %22, %24, %cst_12 {dimension_numbers = #tpu.dot_dimension_numbers<[1], [0], [0], [1], [0, 0, 1, 1], [], []>} : vector<128x4xbf16>, vector<4x256xbf16>, vector<128x256xf32> -> vector<128x256xf32>
    %26 = arith.addf %20, %25 : vector<128x256xf32>
    %27 = vector.extract_strided_slice %7 {offsets = [1, 0, 0], sizes = [8, 16, 4], strides = [1, 1, 1]} : vector<10x18x4xbf16> to vector<8x16x4xbf16>
    %28 = vector.shape_cast %27 : vector<8x16x4xbf16> to vector<128x4xbf16>
    %c3 = arith.constant 3 : index
    %c0_13 = arith.constant 0 : index
    %c0_14 = arith.constant 0 : index
    %29 = vector.load %arg3[%c3, %c0_13, %c0_14] : memref<9x4x256xbf16, #tpu.memory_space<vmem>>, vector<1x4x256xbf16>
    %30 = vector.shape_cast %29 : vector<1x4x256xbf16> to vector<4x256xbf16>
    %cst_15 = arith.constant dense<0.000000e+00> : vector<128x256xf32>
    %31 = tpu.matmul %28, %30, %cst_15 {dimension_numbers = #tpu.dot_dimension_numbers<[1], [0], [0], [1], [0, 0, 1, 1], [], []>} : vector<128x4xbf16>, vector<4x256xbf16>, vector<128x256xf32> -> vector<128x256xf32>
    %32 = arith.addf %26, %31 : vector<128x256xf32>
    %33 = vector.extract_strided_slice %7 {offsets = [1, 1, 0], sizes = [8, 16, 4], strides = [1, 1, 1]} : vector<10x18x4xbf16> to vector<8x16x4xbf16>
    %34 = vector.shape_cast %33 : vector<8x16x4xbf16> to vector<128x4xbf16>
    %c4 = arith.constant 4 : index
    %c0_16 = arith.constant 0 : index
    %c0_17 = arith.constant 0 : index
    %35 = vector.load %arg3[%c4, %c0_16, %c0_17] : memref<9x4x256xbf16, #tpu.memory_space<vmem>>, vector<1x4x256xbf16>
    %36 = vector.shape_cast %35 : vector<1x4x256xbf16> to vector<4x256xbf16>
    %cst_18 = arith.constant dense<0.000000e+00> : vector<128x256xf32>
    %37 = tpu.matmul %34, %36, %cst_18 {dimension_numbers = #tpu.dot_dimension_numbers<[1], [0], [0], [1], [0, 0, 1, 1], [], []>} : vector<128x4xbf16>, vector<4x256xbf16>, vector<128x256xf32> -> vector<128x256xf32>
    %38 = arith.addf %32, %37 : vector<128x256xf32>
    %39 = vector.extract_strided_slice %7 {offsets = [1, 2, 0], sizes = [8, 16, 4], strides = [1, 1, 1]} : vector<10x18x4xbf16> to vector<8x16x4xbf16>
    %40 = vector.shape_cast %39 : vector<8x16x4xbf16> to vector<128x4xbf16>
    %c5 = arith.constant 5 : index
    %c0_19 = arith.constant 0 : index
    %c0_20 = arith.constant 0 : index
    %41 = vector.load %arg3[%c5, %c0_19, %c0_20] : memref<9x4x256xbf16, #tpu.memory_space<vmem>>, vector<1x4x256xbf16>
    %42 = vector.shape_cast %41 : vector<1x4x256xbf16> to vector<4x256xbf16>
    %cst_21 = arith.constant dense<0.000000e+00> : vector<128x256xf32>
    %43 = tpu.matmul %40, %42, %cst_21 {dimension_numbers = #tpu.dot_dimension_numbers<[1], [0], [0], [1], [0, 0, 1, 1], [], []>} : vector<128x4xbf16>, vector<4x256xbf16>, vector<128x256xf32> -> vector<128x256xf32>
    %44 = arith.addf %38, %43 : vector<128x256xf32>
    %45 = vector.extract_strided_slice %7 {offsets = [2, 0, 0], sizes = [8, 16, 4], strides = [1, 1, 1]} : vector<10x18x4xbf16> to vector<8x16x4xbf16>
    %46 = vector.shape_cast %45 : vector<8x16x4xbf16> to vector<128x4xbf16>
    %c6 = arith.constant 6 : index
    %c0_22 = arith.constant 0 : index
    %c0_23 = arith.constant 0 : index
    %47 = vector.load %arg3[%c6, %c0_22, %c0_23] : memref<9x4x256xbf16, #tpu.memory_space<vmem>>, vector<1x4x256xbf16>
    %48 = vector.shape_cast %47 : vector<1x4x256xbf16> to vector<4x256xbf16>
    %cst_24 = arith.constant dense<0.000000e+00> : vector<128x256xf32>
    %49 = tpu.matmul %46, %48, %cst_24 {dimension_numbers = #tpu.dot_dimension_numbers<[1], [0], [0], [1], [0, 0, 1, 1], [], []>} : vector<128x4xbf16>, vector<4x256xbf16>, vector<128x256xf32> -> vector<128x256xf32>
    %50 = arith.addf %44, %49 : vector<128x256xf32>
    %51 = vector.extract_strided_slice %7 {offsets = [2, 1, 0], sizes = [8, 16, 4], strides = [1, 1, 1]} : vector<10x18x4xbf16> to vector<8x16x4xbf16>
    %52 = vector.shape_cast %51 : vector<8x16x4xbf16> to vector<128x4xbf16>
    %c7 = arith.constant 7 : index
    %c0_25 = arith.constant 0 : index
    %c0_26 = arith.constant 0 : index
    %53 = vector.load %arg3[%c7, %c0_25, %c0_26] : memref<9x4x256xbf16, #tpu.memory_space<vmem>>, vector<1x4x256xbf16>
    %54 = vector.shape_cast %53 : vector<1x4x256xbf16> to vector<4x256xbf16>
    %cst_27 = arith.constant dense<0.000000e+00> : vector<128x256xf32>
    %55 = tpu.matmul %52, %54, %cst_27 {dimension_numbers = #tpu.dot_dimension_numbers<[1], [0], [0], [1], [0, 0, 1, 1], [], []>} : vector<128x4xbf16>, vector<4x256xbf16>, vector<128x256xf32> -> vector<128x256xf32>
    %56 = arith.addf %50, %55 : vector<128x256xf32>
    %57 = vector.extract_strided_slice %7 {offsets = [2, 2, 0], sizes = [8, 16, 4], strides = [1, 1, 1]} : vector<10x18x4xbf16> to vector<8x16x4xbf16>
    %58 = vector.shape_cast %57 : vector<8x16x4xbf16> to vector<128x4xbf16>
    %c8 = arith.constant 8 : index
    %c0_28 = arith.constant 0 : index
    %c0_29 = arith.constant 0 : index
    %59 = vector.load %arg3[%c8, %c0_28, %c0_29] : memref<9x4x256xbf16, #tpu.memory_space<vmem>>, vector<1x4x256xbf16>
    %60 = vector.shape_cast %59 : vector<1x4x256xbf16> to vector<4x256xbf16>
    %cst_30 = arith.constant dense<0.000000e+00> : vector<128x256xf32>
    %61 = tpu.matmul %58, %60, %cst_30 {dimension_numbers = #tpu.dot_dimension_numbers<[1], [0], [0], [1], [0, 0, 1, 1], [], []>} : vector<128x4xbf16>, vector<4x256xbf16>, vector<128x256xf32> -> vector<128x256xf32>
    %62 = arith.addf %56, %61 : vector<128x256xf32>
    %c0_31 = arith.constant 0 : index
    %c0_32 = arith.constant 0 : index
    %63 = vector.load %arg4[%c0_31, %c0_32] : memref<1x256xf32, #tpu.memory_space<vmem>>, vector<1x256xf32>
    %64 = vector.broadcast %63 : vector<1x256xf32> to vector<128x256xf32>
    %65 = arith.addf %62, %64 : vector<128x256xf32>
    %cst_33 = arith.constant 0.000000e+00 : f32
    %66 = vector.broadcast %cst_33 : f32 to vector<128x256xf32>
    %67 = arith.maximumf %65, %66 : vector<128x256xf32>
    %68 = arith.truncf %67 : vector<128x256xf32> to vector<128x256xbf16>
    %c0_34 = arith.constant 0 : index
    %c0_35 = arith.constant 0 : index
    %c0_36 = arith.constant 0 : index
    %69 = vector.load %arg7[%c0_34, %c0_35, %c0_36] : memref<1x128x256xbf16, #tpu.memory_space<vmem>>, vector<1x128x256xbf16>
    %70 = vector.shape_cast %69 : vector<1x128x256xbf16> to vector<128x256xbf16>
    %71 = vector.shape_cast %68 : vector<128x256xbf16> to vector<1x128x256xbf16>
    tpu.vector_store %arg7[%c0_34, %c0_35, %c0_36], %71 {strides = array<i32>} : memref<1x128x256xbf16, #tpu.memory_space<vmem>>, vector<1x128x256xbf16>,
    %c0_37 = arith.constant 0 : index
    %c0_38 = arith.constant 0 : index
    %72 = vector.load %arg11[%c0_37, %c0_38] : memref<1x256xf32, #tpu.memory_space<vmem>>, vector<1x256xf32>
    %cst_39 = arith.constant dense<0.000000e+00> : vector<256xf32>
    %73 = vector.multi_reduction <add>, %67, %cst_39 [0] : vector<128x256xf32> to vector<256xf32>
    %74 = vector.shape_cast %73 : vector<256xf32> to vector<1x256xf32>
    %75 = arith.addf %72, %74 : vector<1x256xf32>
    %c0_40 = arith.constant 0 : index
    %c0_41 = arith.constant 0 : index
    %76 = vector.load %arg11[%c0_40, %c0_41] : memref<1x256xf32, #tpu.memory_space<vmem>>, vector<1x256xf32>
    tpu.vector_store %arg11[%c0_40, %c0_41], %75 {strides = array<i32>} : memref<1x256xf32, #tpu.memory_space<vmem>>, vector<1x256xf32>,
    %c1_i32 = arith.constant 1 : i32
    %77 = arith.cmpi eq, %arg1, %c1_i32 : i32
    %78 = arith.extui %77 : i1 to i32
    %c0_i32_42 = arith.constant 0 : i32
    %79 = arith.cmpi ne, %78, %c0_i32_42 : i32
    scf.if %79 {
      %c0_43 = arith.constant 0 : index
      %c0_44 = arith.constant 0 : index
      %80 = vector.load %arg11[%c0_43, %c0_44] : memref<1x256xf32, #tpu.memory_space<vmem>>, vector<1x256xf32>
      %cst_45 = arith.constant 3.906250e-03 : f32
      %81 = vector.broadcast %cst_45 : f32 to vector<1x256xf32>
      %82 = arith.mulf %80, %81 : vector<1x256xf32>
      %c0_46 = arith.constant 0 : index
      %c0_47 = arith.constant 0 : index
      %c0_48 = arith.constant 0 : index
      %83 = vector.load %arg8[%c0_46, %c0_47, %c0_48] : memref<1x1x256xf32, #tpu.memory_space<vmem>>, vector<1x1x256xf32>
      %84 = vector.shape_cast %83 : vector<1x1x256xf32> to vector<1x256xf32>
      %85 = vector.shape_cast %82 : vector<1x256xf32> to vector<1x1x256xf32>
      tpu.vector_store %arg8[%c0_46, %c0_47, %c0_48], %85 {strides = array<i32>} : memref<1x1x256xf32, #tpu.memory_space<vmem>>, vector<1x1x256xf32>,
    } else {
    }
    return
  }
  func.func @transform_0(%arg0: i32, %arg1: i32) -> (i32, i32, i32, i32) {
    %c0_i32 = arith.constant 0 : i32
    %c0_i32_0 = arith.constant 0 : i32
    %c0_i32_1 = arith.constant 0 : i32
    %c0_i32_2 = arith.constant 0 : i32
    return %arg0, %c0_i32, %c0_i32_0, %c0_i32_1 : i32, i32, i32, i32
  }
  func.func @transform_1(%arg0: i32, %arg1: i32) -> (i32, i32, i32) {
    %c0_i32 = arith.constant 0 : i32
    %c0_i32_0 = arith.constant 0 : i32
    %c0_i32_1 = arith.constant 0 : i32
    %c0_i32_2 = arith.constant 0 : i32
    return %c0_i32, %c0_i32_0, %c0_i32_1 : i32, i32, i32
  }
  func.func @transform_2(%arg0: i32, %arg1: i32) -> (i32, i32) {
    %c0_i32 = arith.constant 0 : i32
    %c0_i32_0 = arith.constant 0 : i32
    %c0_i32_1 = arith.constant 0 : i32
    return %c0_i32, %c0_i32_0 : i32, i32
  }
  func.func @transform_3(%arg0: i32, %arg1: i32) -> (i32, i32, i32) {
    %c0_i32 = arith.constant 0 : i32
    %c0_i32_0 = arith.constant 0 : i32
    %c0_i32_1 = arith.constant 0 : i32
    return %arg0, %c0_i32, %c0_i32_0 : i32, i32, i32
  }
  func.func @transform_4(%arg0: i32, %arg1: i32) -> (i32, i32, i32) {
    %c0_i32 = arith.constant 0 : i32
    %c0_i32_0 = arith.constant 0 : i32
    %c0_i32_1 = arith.constant 0 : i32
    return %arg0, %c0_i32, %c0_i32_0 : i32, i32, i32
  }
  func.func @transform_5(%arg0: i32, %arg1: i32) -> (i32, i32, i32) {
    %c0_i32 = arith.constant 0 : i32
    %c0_i32_0 = arith.constant 0 : i32
    return %arg0, %arg1, %c0_i32 : i32, i32, i32
  }
  func.func @transform_6(%arg0: i32, %arg1: i32) -> (i32, i32, i32) {
    %c0_i32 = arith.constant 0 : i32
    %c0_i32_0 = arith.constant 0 : i32
    %c0_i32_1 = arith.constant 0 : i32
    return %arg0, %c0_i32, %c0_i32_0 : i32, i32, i32
  }
  func.func @transform_7(%arg0: i32, %arg1: i32) -> (i32, i32, i32) {
    %c0_i32 = arith.constant 0 : i32
    %c0_i32_0 = arith.constant 0 : i32
    %c0_i32_1 = arith.constant 0 : i32
    return %arg0, %c0_i32, %c0_i32_0 : i32, i32, i32
  }
  func.func @transform_8(%arg0: i32, %arg1: i32) -> (i32, i32, i32) {
    %c0_i32 = arith.constant 0 : i32
    %c0_i32_0 = arith.constant 0 : i32
    %c0_i32_1 = arith.constant 0 : i32
    return %arg0, %c0_i32, %c0_i32_0 : i32, i32, i32
  }
}

</mosaic_0001>

<llo_original>
// kernel: tpu_custom_call.1
$region0: #{tpu_custom_call.1}
  #allocation0 [shape = 'u32[]', space=smem, size = 0x4, offset = 0x4, fixed_abs, tag = 'smem constant byte address 0x4 - core index']
  #allocation1 [shape = 'u32[144,128]{1,0:T(1,128)}', space=vmem, size = 0x12000, scoped, tag = 'internal scratch']
  #allocation2 [shape = 'f32[1,256]{1,0:T(1,128)}', space=vmem, size = 0x400, scoped, tag = 'scratch operand']
  %s0 = inlined_call_operand.vmem [shape: bf16[2,18,18,4], index: 0, kind: input, shape index: {}]
  %s1 = inlined_call_operand.vmem [shape: bf16[9,4,256], index: 1, kind: input, shape index: {}]
  %s2 = inlined_call_operand.vmem [shape: f32[1,256], index: 2, kind: input, shape index: {}]
  %s3 = inlined_call_operand.vmem [shape: f32[2,1,16], index: 3, kind: input, shape index: {}]
  %s4 = inlined_call_operand.vmem [shape: f32[2,1,16], index: 4, kind: input, shape index: {}]
  %s5 = inlined_call_operand.hbm [shape: bf16[2,256,256], index: 5, kind: output, shape index: {0}]
  %s6 = inlined_call_operand.hbm [shape: f32[2,1,256], index: 6, kind: output, shape index: {1}]
  %s7 = inlined_call_operand.hbm [shape: f32[2,1,16], index: 7, kind: output, shape index: {2}]
  %s8 = inlined_call_operand.hbm [shape: f32[2,1,16], index: 8, kind: output, shape index: {3}]
  %9 = xla_tuple %s5, %s6, %s7, %s8
  %s10 = sld [smem:[#allocation0]]
  $region85: #{tpu_custom_call.1} parent=0
    _
  %s12 = ssub.s32 1, %s10
  %s13 = scalar_select 0, %s12, %s10
  $region1: #{tpu_custom_call.1} parent=0
    #allocation3 [shape = 'u8[131072]{0}', space=vmem, size = 0x20000, scoped, tag = 'output window, operand 0']
    #allocation4 [shape = 's32[2]{0}', space=sflag, size = 0x8, scoped, tag = 'scoped memory for tpu_custom_call.1']
    #allocation5 [shape = 'u8[2048]{0}', space=vmem, size = 0x800, scoped, tag = 'output window, operand 1']
    #allocation6 [shape = 's32[2]{0}', space=sflag, size = 0x8, scoped, tag = 'scoped memory for tpu_custom_call.1']
    #allocation7 [shape = 'u8[1024]{0}', space=vmem, size = 0x400, scoped, tag = 'output window, operand 2']
    #allocation8 [shape = 'u8[1024]{0}', space=vmem, size = 0x400, scoped, tag = 'output window, operand 3']
    #allocation9 [shape = 's32[2]{0}', space=sflag, size = 0x8, scoped, tag = 'scoped memory for tpu_custom_call.1']
    %14 = vsyncpa [#allocation4], 0
    %s15 = scalar_lea.sflag [#allocation4], 1
    %16 = vsyncpa %s15, 0
    %17 = vsyncpa [#allocation6], 0
    %s18 = scalar_lea.sflag [#allocation6], 1
    %19 = vsyncpa %s18, 0
    %20 = vsyncpa [#allocation9], 0
    %s21 = scalar_lea.sflag [#allocation9], 1
    %22 = vsyncpa %s21, 0
    loop: start=0, step=1, limit=6
    $region2: #{tpu_custom_call.1} parent=1 // loop_pre_header
      _
    $region3: #{tpu_custom_call.1} parent=1 // loop_header
      %s24 = sphi 0, %s28
      %p25 = scmp.ge.s32.totalorder %s24, 6
      %s31 = sphi 0, %s43
      %s32 = sphi 0, %s39
      %s33 = sphi 0, %s31
      %s34 = sphi 0, %s32
      %s35 = sphi 0, %s33
      %s36 = sphi 0, %s34
      %s46 = sphi 0, %s48
      %s49 = sphi 0, %s46
      %s50 = sphi 0, %s49
      %s66 = sphi 0, %s50
      %s70 = sphi 0, %s70
      %s72 = sphi 0, %s70
      %s73 = sphi 0, %s72
      %s87 = sphi 0, %s73
      %s91 = sphi 0, %s91
      %s93 = sphi 0, %s91
      %s94 = sphi 0, %s93
      %s108 = sphi 0, %s94
      %s114 = sphi 0, %s116
      %s117 = sphi 0, %s114
      %s118 = sphi 0, %s117
      %s134 = sphi 0, %s118
      %s140 = sphi 0, %s142
      %s143 = sphi 0, %s140
      %s144 = sphi 0, %s143
      %s160 = sphi 0, %s144
      %s168 = sphi 0, %s170
      %s171 = sphi 0, %s168
      %s172 = sphi 0, %s171
      %s188 = sphi 0, %s172
      %s194 = sphi 0, %s196
      %s197 = sphi 0, %s194
      %s198 = sphi 0, %s197
      %s214 = sphi 0, %s198
      %s220 = sphi 0, %s222
      %s223 = sphi 0, %s220
      %s224 = sphi 0, %s223
      %s240 = sphi 0, %s224
      %s246 = sphi 0, %s248
      %s249 = sphi 0, %s246
      %s250 = sphi 0, %s249
      %s266 = sphi 0, %s250
    $region4: #{tpu_custom_call.1} parent=1 // loop_header_branch
      %27 = sbr.rel (%p25) target = $region8
    $region5: #{tpu_custom_call.1} parent=1 // loop_body
      %s29 = ssub.s32 %s24, 1
      %s30 = ssub.s32 %s24, 2
      %s37 = sadd.s32 1, %s32
      %p38 = scmp.ge.s32.totalorder %s37, 2
      %s39 = scalar_select %p38, 0, %s37
      %s40 = sadd.s32 1, %s31
      %s41 = scalar_select %p38, %s40, %s31
      %p42 = scmp.ge.s32.totalorder %s41, 2
      %s43 = scalar_select %p42, 0, %s41
      %s44 = ssub.s32 %s31, %s43
      %p45 = scmp.eq.s32.totalorder %s44, 0
      %s47 = sadd.s32 %s46, 1
      %s48 = scalar_select %p45, %s46, %s47
      %p51 = pneg %p45
      %p52 = scmp.eq.s32.totalorder %s24, 3
      %p53 = por %p51, %p52
      %p54 = scmp.ne.s32.totalorder %s46, %s49
      %p55 = scmp.eq.s32.totalorder %s24, 0
      %p56 = por %p54, %p55
      %p57 = scmp.ne.s32.totalorder %s46, %s49
      %p58 = scmp.eq.s32.totalorder %s29, 3
      %p59 = por %p57, %p58
      %p60 = scmp.ne.s32.totalorder %s49, %s50
      %p61 = scmp.eq.s32.totalorder %s29, 0
      %p62 = por %p60, %p61
      %p63 = scmp.ne.s32.totalorder %s49, %s50
      %p64 = scmp.eq.s32.totalorder %s30, 3
      %p65 = por %p63, %p64
      %p67 = scmp.ne.s32.totalorder %s50, %s66
      %p68 = scmp.eq.s32.totalorder %s30, 0
      %p69 = por %p67, %p68
      %s71 = sadd.s32 %s70, 1
      %p74 = scmp.eq.s32.totalorder %s24, 3
      %p75 = scmp.ne.s32.totalorder %s70, %s72
      %p76 = scmp.eq.s32.totalorder %s24, 0
      %p77 = por %p75, %p76
      %p78 = scmp.ne.s32.totalorder %s70, %s72
      %p79 = scmp.eq.s32.totalorder %s29, 3
      %p80 = por %p78, %p79
      %p81 = scmp.ne.s32.totalorder %s72, %s73
      %p82 = scmp.eq.s32.totalorder %s29, 0
      %p83 = por %p81, %p82
      %p84 = scmp.ne.s32.totalorder %s72, %s73
      %p85 = scmp.eq.s32.totalorder %s30, 3
      %p86 = por %p84, %p85
      %p88 = scmp.ne.s32.totalorder %s73, %s87
      %p89 = scmp.eq.s32.totalorder %s30, 0
      %p90 = por %p88, %p89
      %s92 = sadd.s32 %s91, 1
      %p95 = scmp.eq.s32.totalorder %s24, 3
      %p96 = scmp.ne.s32.totalorder %s91, %s93
      %p97 = scmp.eq.s32.totalorder %s24, 0
      %p98 = por %p96, %p97
      %p99 = scmp.ne.s32.totalorder %s91, %s93
      %p100 = scmp.eq.s32.totalorder %s29, 3
      %p101 = por %p99, %p100
      %p102 = scmp.ne.s32.totalorder %s93, %s94
      %p103 = scmp.eq.s32.totalorder %s29, 0
      %p104 = por %p102, %p103
      %p105 = scmp.ne.s32.totalorder %s93, %s94
      %p106 = scmp.eq.s32.totalorder %s30, 3
      %p107 = por %p105, %p106
      %p109 = scmp.ne.s32.totalorder %s94, %s108
      %p110 = scmp.eq.s32.totalorder %s30, 0
      %p111 = por %p109, %p110
      %s112 = ssub.s32 %s31, %s43
      %p113 = scmp.eq.s32.totalorder %s112, 0
      %s115 = sadd.s32 %s114, 1
      %s116 = scalar_select %p113, %s114, %s115
      %p119 = pneg %p113
      %p120 = scmp.eq.s32.totalorder %s24, 3
      %p121 = por %p119, %p120
      %p122 = scmp.ne.s32.totalorder %s114, %s117
      %p123 = scmp.eq.s32.totalorder %s24, 0
      %p124 = por %p122, %p123
      %p125 = scmp.ne.s32.totalorder %s114, %s117
      %p126 = scmp.eq.s32.totalorder %s29, 3
      %p127 = por %p125, %p126
      %p128 = scmp.ne.s32.totalorder %s117, %s118
      %p129 = scmp.eq.s32.totalorder %s29, 0
      %p130 = por %p128, %p129
      %p131 = scmp.ne.s32.totalorder %s117, %s118
      %p132 = scmp.eq.s32.totalorder %s30, 3
      %p133 = por %p131, %p132
      %p135 = scmp.ne.s32.totalorder %s118, %s134
      %p136 = scmp.eq.s32.totalorder %s30, 0
      %p137 = por %p135, %p136
      %s138 = ssub.s32 %s31, %s43
      %p139 = scmp.eq.s32.totalorder %s138, 0
      %s141 = sadd.s32 %s140, 1
      %s142 = scalar_select %p139, %s140, %s141
      %p145 = pneg %p139
      %p146 = scmp.eq.s32.totalorder %s24, 3
      %p147 = por %p145, %p146
      %p148 = scmp.ne.s32.totalorder %s140, %s143
      %p149 = scmp.eq.s32.totalorder %s24, 0
      %p150 = por %p148, %p149
      %p151 = scmp.ne.s32.totalorder %s140, %s143
      %p152 = scmp.eq.s32.totalorder %s29, 3
      %p153 = por %p151, %p152
      %p154 = scmp.ne.s32.totalorder %s143, %s144
      %p155 = scmp.eq.s32.totalorder %s29, 0
      %p156 = por %p154, %p155
      %p157 = scmp.ne.s32.totalorder %s143, %s144
      %p158 = scmp.eq.s32.totalorder %s30, 3
      %p159 = por %p157, %p158
      %p161 = scmp.ne.s32.totalorder %s144, %s160
      %p162 = scmp.eq.s32.totalorder %s30, 0
      %p163 = por %p161, %p162
      %s164 = ssub.s32 %s31, %s43
      %s165 = ssub.s32 %s32, %s39
      %s166 = sor.u32 %s164, %s165
      %p167 = scmp.eq.s32.totalorder %s166, 0
      %s169 = sadd.s32 %s168, 1
      %s170 = scalar_select %p167, %s168, %s169
      %p173 = pneg %p167
      %p174 = scmp.eq.s32.totalorder %s24, 3
      %p175 = por %p173, %p174
      %p176 = scmp.ne.s32.totalorder %s168, %s171
      %p177 = scmp.eq.s32.totalorder %s24, 0
      %p178 = por %p176, %p177
      %p179 = scmp.ne.s32.totalorder %s168, %s171
      %p180 = scmp.eq.s32.totalorder %s29, 3
      %p181 = por %p179, %p180
      %p182 = scmp.ne.s32.totalorder %s171, %s172
      %p183 = scmp.eq.s32.totalorder %s29, 0
      %p184 = por %p182, %p183
      %p185 = scmp.ne.s32.totalorder %s171, %s172
      %p186 = scmp.eq.s32.totalorder %s30, 3
      %p187 = por %p185, %p186
      %p189 = scmp.ne.s32.totalorder %s172, %s188
      %p190 = scmp.eq.s32.totalorder %s30, 0
      %p191 = por %p189, %p190
      %s192 = ssub.s32 %s31, %s43
      %p193 = scmp.eq.s32.totalorder %s192, 0
      %s195 = sadd.s32 %s194, 1
      %s196 = scalar_select %p193, %s194, %s195
      %p199 = pneg %p193
      %p200 = scmp.eq.s32.totalorder %s24, 3
      %p201 = por %p199, %p200
      %p202 = scmp.ne.s32.totalorder %s194, %s197
      %p203 = scmp.eq.s32.totalorder %s24, 0
      %p204 = por %p202, %p203
      %p205 = scmp.ne.s32.totalorder %s194, %s197
      %p206 = scmp.eq.s32.totalorder %s29, 3
      %p207 = por %p205, %p206
      %p208 = scmp.ne.s32.totalorder %s197, %s198
      %p209 = scmp.eq.s32.totalorder %s29, 0
      %p210 = por %p208, %p209
      %p211 = scmp.ne.s32.totalorder %s197, %s198
      %p212 = scmp.eq.s32.totalorder %s30, 3
      %p213 = por %p211, %p212
      %p215 = scmp.ne.s32.totalorder %s198, %s214
      %p216 = scmp.eq.s32.totalorder %s30, 0
      %p217 = por %p215, %p216
      %s218 = ssub.s32 %s31, %s43
      %p219 = scmp.eq.s32.totalorder %s218, 0
      %s221 = sadd.s32 %s220, 1
      %s222 = scalar_select %p219, %s220, %s221
      %p225 = pneg %p219
      %p226 = scmp.eq.s32.totalorder %s24, 3
      %p227 = por %p225, %p226
      %p228 = scmp.ne.s32.totalorder %s220, %s223
      %p229 = scmp.eq.s32.totalorder %s24, 0
      %p230 = por %p228, %p229
      %p231 = scmp.ne.s32.totalorder %s220, %s223
      %p232 = scmp.eq.s32.totalorder %s29, 3
      %p233 = por %p231, %p232
      %p234 = scmp.ne.s32.totalorder %s223, %s224
      %p235 = scmp.eq.s32.totalorder %s29, 0
      %p236 = por %p234, %p235
      %p237 = scmp.ne.s32.totalorder %s223, %s224
      %p238 = scmp.eq.s32.totalorder %s30, 3
      %p239 = por %p237, %p238
      %p241 = scmp.ne.s32.totalorder %s224, %s240
      %p242 = scmp.eq.s32.totalorder %s30, 0
      %p243 = por %p241, %p242
      %s244 = ssub.s32 %s31, %s43
      %p245 = scmp.eq.s32.totalorder %s244, 0
      %s247 = sadd.s32 %s246, 1
      %s248 = scalar_select %p245, %s246, %s247
      %p251 = pneg %p245
      %p252 = scmp.eq.s32.totalorder %s24, 3
      %p253 = por %p251, %p252
      %p254 = scmp.ne.s32.totalorder %s246, %s249
      %p255 = scmp.eq.s32.totalorder %s24, 0
      %p256 = por %p254, %p255
      %p257 = scmp.ne.s32.totalorder %s246, %s249
      %p258 = scmp.eq.s32.totalorder %s29, 3
      %p259 = por %p257, %p258
      %p260 = scmp.ne.s32.totalorder %s249, %s250
      %p261 = scmp.eq.s32.totalorder %s29, 0
      %p262 = por %p260, %p261
      %p263 = scmp.ne.s32.totalorder %s249, %s250
      %p264 = scmp.eq.s32.totalorder %s30, 3
      %p265 = por %p263, %p264
      %p267 = scmp.ne.s32.totalorder %s250, %s266
      %p268 = scmp.eq.s32.totalorder %s30, 0
      %p269 = por %p267, %p268
      %p270 = scmp.le.s32.totalorder 1, %s24
      %p271 = scmp.lt.s32.totalorder %s24, 5
      %p272 = pnand %p270, %p271
      %p273 = pneg %p272
      // Predicated region
      $region9: #{tpu_custom_call.1} parent=5 // pred_check
        _
      $region10: #{tpu_custom_call.1} parent=5 // pred_check_branch
        %275 = sbr.rel (%p272) target = $region12
      $region11: #{tpu_custom_call.1} parent=5 // pred_region
        %s276 = ssub.s32 %s24, 1
        // Predicated region
        $region13: #{tpu_custom_call.1} parent=11 // pred_check
          %p277 = pneg %p83
        $region14: #{tpu_custom_call.1} parent=11 // pred_check_branch
          %279 = sbr.rel (%p277) target = $region16
        $region15: #{tpu_custom_call.1} parent=11 // pred_region
          _
        $region16: #{tpu_custom_call.1} parent=11 // pred_fallthru
          _
        // Predicated region
        $region17: #{tpu_custom_call.1} parent=11 // pred_check
          %p280 = pneg %p104
        $region18: #{tpu_custom_call.1} parent=11 // pred_check_branch
          %282 = sbr.rel (%p280) target = $region20
        $region19: #{tpu_custom_call.1} parent=11 // pred_region
          _
        $region20: #{tpu_custom_call.1} parent=11 // pred_fallthru
          _
      $region12: #{tpu_custom_call.1} parent=5 // pred_fallthru
        _
      %p283 = scmp.lt.s32.totalorder %s24, 4
      // Predicated region
      $region21: #{tpu_custom_call.1} parent=5 // pred_check
        %p284 = pneg %p283
      $region22: #{tpu_custom_call.1} parent=5 // pred_check_branch
        %286 = sbr.rel (%p284) target = $region24
      $region23: #{tpu_custom_call.1} parent=5 // pred_region
        // Predicated region
        $region25: #{tpu_custom_call.1} parent=23 // pred_check
          %p287 = pneg %p56
        $region26: #{tpu_custom_call.1} parent=23 // pred_check_branch
          %289 = sbr.rel (%p287) target = $region28
        $region27: #{tpu_custom_call.1} parent=23 // pred_region
          %p290 = scmp.lt.s32.totalorder %s31, 1
          %s291 = scalar_select %p290, %s31, 1
          %s292 = smul.addr %s291, 54
          %s293 = smul.addr %s292, 4
          %s294 = scalar_lea.vmem %s0, %s293
        $region28: #{tpu_custom_call.1} parent=23 // pred_fallthru
          _
        // Predicated region
        $region29: #{tpu_custom_call.1} parent=23 // pred_check
          %p295 = pneg %p124
        $region30: #{tpu_custom_call.1} parent=23 // pred_check_branch
          %297 = sbr.rel (%p295) target = $region32
        $region31: #{tpu_custom_call.1} parent=23 // pred_region
          %p298 = scmp.lt.s32.totalorder %s31, 1
          %s299 = scalar_select %p298, %s31, 1
          %s300 = scalar_lea.vmem %s3, %s299
        $region32: #{tpu_custom_call.1} parent=23 // pred_fallthru
          _
        // Predicated region
        $region33: #{tpu_custom_call.1} parent=23 // pred_check
          %p301 = pneg %p150
        $region34: #{tpu_custom_call.1} parent=23 // pred_check_branch
          %303 = sbr.rel (%p301) target = $region36
        $region35: #{tpu_custom_call.1} parent=23 // pred_region
          %p304 = scmp.lt.s32.totalorder %s31, 1
          %s305 = scalar_select %p304, %s31, 1
          %s306 = scalar_lea.vmem %s4, %s305
        $region36: #{tpu_custom_call.1} parent=23 // pred_fallthru
          _
      $region24: #{tpu_custom_call.1} parent=5 // pred_fallthru
        _
      %p307 = scmp.le.s32.totalorder 1, %s24
      %p308 = scmp.lt.s32.totalorder %s24, 5
      %p309 = pnand %p307, %p308
      %p310 = pneg %p309
      // Predicated region
      $region37: #{tpu_custom_call.1} parent=5 // pred_check
        _
      $region38: #{tpu_custom_call.1} parent=5 // pred_check_branch
        %312 = sbr.rel (%p309) target = $region40
      $region39: #{tpu_custom_call.1} parent=5 // pred_region
        %s313 = ssub.s32 %s24, 1
        %p314 = scmp.lt.s32.totalorder %s33, 1
        %s315 = scalar_select %p314, %s33, 1
        %s316 = smul.addr %s315, 54
        %s317 = smul.addr %s316, 4
        %s318 = scalar_lea.vmem %s0, %s317
        %p319 = pneg %p62
        %p320 = pneg %p59
        %p321 = pneg %p83
        %p322 = pneg %p80
        %p323 = pneg %p104
        %p324 = pneg %p101
        %p325 = scmp.lt.s32.totalorder %s33, 1
        %s326 = scalar_select %p325, %s33, 1
        %s327 = scalar_lea.vmem %s3, %s326
        %p328 = pneg %p130
        %p329 = pneg %p127
        %p330 = scmp.lt.s32.totalorder %s33, 1
        %s331 = scalar_select %p330, %s33, 1
        %s332 = scalar_lea.vmem %s4, %s331
        %p333 = pneg %p156
        %p334 = pneg %p153
        %p335 = pneg %p184
        %p336 = pneg %p181
        %s337 = sand.u32 %s171, 1
        %s338 = scalar_lea.sflag [#allocation4], %s337
        %s339 = sand.u32 %s171, 1
        %s340 = smul.addr %s339, 128
        %s341 = scalar_lea.vmem [#allocation3], %s340
        %p342 = pneg %p210
        %p343 = pneg %p207
        %s344 = sand.u32 %s29, 1
        %s345 = scalar_lea.sflag [#allocation6], %s344
        %s346 = sand.u32 %s197, 1
        %s347 = smul.addr %s346, 2
        %s348 = scalar_lea.vmem [#allocation5], %s347
        %p349 = pneg %p236
        %p350 = pneg %p233
        %s351 = sand.u32 %s29, 1
        %s352 = scalar_lea.sflag [#allocation6], %s351
        %s353 = sand.u32 %s223, 1
        %s354 = scalar_lea.vmem [#allocation7], %s353
        %p355 = pneg %p262
        %p356 = pneg %p259
        %s357 = sand.u32 %s249, 1
        %s358 = scalar_lea.sflag [#allocation9], %s357
        %s359 = sand.u32 %s249, 1
        %s360 = scalar_lea.vmem [#allocation8], %s359
        %p361 = scmp.lt.s32.totalorder %s33, 1
        %s362 = scalar_select %p361, %s33, 1
        %s363 = smul.addr %s362, 54
        %s364 = smul.addr %s363, 4
        %s365 = scalar_lea.vmem %s0, %s364
        %p366 = scmp.lt.s32.totalorder %s33, 1
        %s367 = scalar_select %p366, %s33, 1
        %s368 = scalar_lea.vmem %s3, %s367
        %p369 = scmp.lt.s32.totalorder %s33, 1
        %s370 = scalar_select %p369, %s33, 1
        %s371 = scalar_lea.vmem %s4, %s370
        %s372 = smul.u32 16, %s34
        %p374 = scmp.eq.s32.totalorder %s34, 0
        // Predicated region
        $region41: #{tpu_custom_call.1} parent=39 // pred_check
          %p375 = pneg %p374
        $region42: #{tpu_custom_call.1} parent=39 // pred_check_branch
          %377 = sbr.rel (%p375) target = $region44
        $region43: #{tpu_custom_call.1} parent=39 // pred_region
          %v378 = vld [vmem:[%s368] sm:$0x1]
          %v379 = vld [vmem:[%s371] sm:$0x1]
          %381 = vrot.lane.b32.xlu0 %v378, 123
          %v382 = vpop.permute.xlu0 %381
          %v384 = vmul.f32 %v378, %v382
          %385 = vrot.lane.b32.xlu0 %v378, 125
          %v386 = vpop.permute.xlu0 %385
          %v388 = vmul.f32 %v378, %v386
          %390 = vrot.lane.b32.xlu0 %v388, 127
          %v391 = vpop.permute.xlu0 %390
          %v393 = vsub.f32 %v384, %v391
          %394 = vrot.lane.b32.xlu0 %v378, 121
          %v395 = vpop.permute.xlu0 %394
          %v397 = vmul.f32 %v378, %v395
          %398 = vrot.lane.b32.xlu0 %v378, 119
          %v399 = vpop.permute.xlu0 %398
          %v401 = vmul.f32 %v378, %v399
          %403 = vrot.lane.b32.xlu0 %v401, 1
          %v404 = vpop.permute.xlu0 %403
          %v406 = vsub.f32 %v397, %v404
          %407 = vrot.lane.b32.xlu0 %v378, 126
          %v408 = vpop.permute.xlu0 %407
          %v410 = vmul.f32 %v378, %v408
          %411 = vrot.lane.b32.xlu0 %v378, 122
          %v412 = vpop.permute.xlu0 %411
          %v414 = vmul.f32 %v378, %v412
          %416 = vrot.lane.b32.xlu0 %v414, 2
          %v417 = vpop.permute.xlu0 %416
          %v419 = vsub.f32 %v410, %v417
          %420 = vrot.lane.b32.xlu0 %v378, 118
          %v421 = vpop.permute.xlu0 %420
          %v423 = vmul.f32 %v378, %v421
          %424 = vrot.lane.b32.xlu0 %v414, 126
          %v425 = vpop.permute.xlu0 %424
          %v427 = vsub.f32 %v423, %v425
          %429 = vrot.lane.b32.xlu0 %v393, 123
          %v430 = vpop.permute.xlu0 %429
          %v432 = vmul.f32 %v378, %v430
          %434 = vrot.lane.b32.xlu0 %v419, 123
          %v435 = vpop.permute.xlu0 %434
          %v437 = vmul.f32 %v378, %v435
          %439 = vrot.lane.b32.xlu0 %v437, 127
          %v440 = vpop.permute.xlu0 %439
          %v442 = vadd.f32 %v432, %v440
          %443 = vrot.lane.b32.xlu0 %v393, 126
          %v444 = vpop.permute.xlu0 %443
          %v446 = vmul.f32 %v378, %v444
          %448 = vrot.lane.b32.xlu0 %v446, 126
          %v449 = vpop.permute.xlu0 %448
          %v451 = vadd.f32 %v442, %v449
          %v452 = vrcp.pop %v451
          %v453 = vmul.f32 1.0, %v452
          %455 = vrot.lane.b32.xlu0 %v453, 5
          %v456 = vpop.permute.xlu0 %455
          %v458 = vmul.f32 %v393, %v456
          %459 = vrot.lane.b32.xlu0 %v453, 2
          %v460 = vpop.permute.xlu0 %459
          %v462 = vmul.f32 %v406, %v460
          %463 = vrot.lane.b32.xlu0 %v453, 1
          %v464 = vpop.permute.xlu0 %463
          %v466 = vmul.f32 %v393, %v464
          %467 = vrot.lane.b32.xlu0 %v453, 6
          %v468 = vpop.permute.xlu0 %467
          %v470 = vmul.f32 %v419, %v468
          %v471 = vmul.f32 %v427, %v453
          %v472 = vmul.f32 %v419, %v460
          %473 = vrot.lane.b32.xlu0 %v453, 4
          %v474 = vpop.permute.xlu0 %473
          %v476 = vmul.f32 %v393, %v474
          %v477 = vmul.f32 %v406, %v464
          %v478 = vmul.f32 %v393, %v453
          %479 = vrot.lane.b32.xlu0 %v378, 2
          %v480 = vpop.permute.xlu0 %479
          %v482 = vmul.f32 %v458, %v480
          %v483 = vmul.f32 %v462, %v382
          %485 = vrot.lane.b32.xlu0 %v483, 3
          %v486 = vpop.permute.xlu0 %485
          %v488 = vadd.f32 %v482, %v486
          %v489 = vmul.f32 %v466, %v421
          %491 = vrot.lane.b32.xlu0 %v489, 4
          %v492 = vpop.permute.xlu0 %491
          %v494 = vadd.f32 %v488, %v492
          %v495 = vsub.f32 0.0, %v494
          %496 = vrot.lane.b32.xlu0 %v378, 3
          %v497 = vpop.permute.xlu0 %496
          %v499 = vmul.f32 %v470, %v497
          %v500 = vmul.f32 %v471, %v395
          %502 = vrot.lane.b32.xlu0 %v500, 6
          %v503 = vpop.permute.xlu0 %502
          %v505 = vadd.f32 %v499, %v503
          %v506 = vmul.f32 %v472, %v399
          %508 = vrot.lane.b32.xlu0 %v506, 4
          %v509 = vpop.permute.xlu0 %508
          %v511 = vadd.f32 %v505, %v509
          %v512 = vsub.f32 0.0, %v511
          %513 = vrot.lane.b32.xlu0 %v378, 1
          %v514 = vpop.permute.xlu0 %513
          %v516 = vmul.f32 %v476, %v514
          %v517 = vmul.f32 %v477, %v412
          %519 = vrot.lane.b32.xlu0 %v517, 3
          %v520 = vpop.permute.xlu0 %519
          %v522 = vadd.f32 %v516, %v520
          %523 = vrot.lane.b32.xlu0 %v378, 117
          %v524 = vpop.permute.xlu0 %523
          %v526 = vmul.f32 %v478, %v524
          %528 = vrot.lane.b32.xlu0 %v526, 4
          %v529 = vpop.permute.xlu0 %528
          %v531 = vadd.f32 %v522, %v529
          %v532 = vsub.f32 0.0, %v531
          %v534 = vlaneseq
          %v535 = vshrl.u32 %v534, 7
          %v536 = vsub.s32 0, %v535
          %v537 = vrot.slane %v458, %v536
          %538 = vrot.lane.b32.xlu0 %v537, 123
          %v539 = vpop.permute.xlu0 %538
          %v542 = vlaneseq
          %v543 = vshrl.u32 %v542, 7
          %v544 = vsub.s32 0, %v543
          %v545 = vrot.slane %v462, %v544
          %546 = vrot.lane.b32.xlu0 %v545, 127
          %v547 = vpop.permute.xlu0 %546
          %v550 = vlaneseq
          %v551 = vshrl.u32 %v550, 7
          %v552 = vsub.s32 0, %v551
          %v553 = vrot.slane %v466, %v552
          %554 = vrot.lane.b32.xlu0 %v553, 1
          %v555 = vpop.permute.xlu0 %554
          %v558 = vlaneseq
          %v559 = vshrl.u32 %v558, 7
          %v560 = vsub.s32 0, %v559
          %v561 = vrot.slane %v495, %v560
          %562 = vrot.lane.b32.xlu0 %v561, 126
          %v563 = vpop.permute.xlu0 %562
          %v566 = vlaneseq
          %v567 = vshrl.u32 %v566, 7
          %v568 = vsub.s32 0, %v567
          %v569 = vrot.slane %v470, %v568
          %570 = vrot.lane.b32.xlu0 %v569, 126
          %v571 = vpop.permute.xlu0 %570
          %v574 = vlaneseq
          %v575 = vshrl.u32 %v574, 7
          %v576 = vsub.s32 0, %v575
          %v577 = vrot.slane %v471, %v576
          %578 = vrot.lane.b32.xlu0 %v577, 5
          %v579 = vpop.permute.xlu0 %578
          %v582 = vlaneseq
          %v583 = vshrl.u32 %v582, 7
          %v584 = vsub.s32 0, %v583
          %v585 = vrot.slane %v472, %v584
          %586 = vrot.lane.b32.xlu0 %v585, 4
          %v587 = vpop.permute.xlu0 %586
          %v590 = vlaneseq
          %v591 = vshrl.u32 %v590, 7
          %v592 = vsub.s32 0, %v591
          %v593 = vrot.slane %v512, %v592
          %594 = vrot.lane.b32.xlu0 %v593, 1
          %v595 = vpop.permute.xlu0 %594
          %v598 = vlaneseq
          %v599 = vshrl.u32 %v598, 7
          %v600 = vsub.s32 0, %v599
          %v601 = vrot.slane %v476, %v600
          %602 = vrot.lane.b32.xlu0 %v601, 4
          %v603 = vpop.permute.xlu0 %602
          %v606 = vlaneseq
          %v607 = vshrl.u32 %v606, 7
          %v608 = vsub.s32 0, %v607
          %v609 = vrot.slane %v477, %v608
          %610 = vrot.lane.b32.xlu0 %v609, 8
          %v611 = vpop.permute.xlu0 %610
          %v614 = vlaneseq
          %v615 = vshrl.u32 %v614, 7
          %v616 = vsub.s32 0, %v615
          %v617 = vrot.slane %v478, %v616
          %618 = vrot.lane.b32.xlu0 %v617, 10
          %v619 = vpop.permute.xlu0 %618
          %v622 = vlaneseq
          %v623 = vshrl.u32 %v622, 7
          %v624 = vsub.s32 0, %v623
          %v625 = vrot.slane %v532, %v624
          %626 = vrot.lane.b32.xlu0 %v625, 7
          %v627 = vpop.permute.xlu0 %626
          %vm629 = vcmask 7168
          %v630 = vsel %vm629, %v539, %v547
          %vm631 = vcmask 15360
          %v632 = vsel %vm631, %v630, %v555
          %vm633 = vcmask 23552
          %v634 = vsel %vm633, %v632, %v563
          %vm635 = vcmask 31744
          %v636 = vsel %vm635, %v634, %v571
          %vm637 = vcmask 39936
          %v638 = vsel %vm637, %v636, %v579
          %vm639 = vcmask 48128
          %v640 = vsel %vm639, %v638, %v587
          %vm641 = vcmask 56320
          %v642 = vsel %vm641, %v640, %v595
          %vm643 = vcmask 64512
          %v644 = vsel %vm643, %v642, %v603
          %vm645 = vcmask 72704
          %v646 = vsel %vm645, %v644, %v611
          %vm647 = vcmask 80896
          %v648 = vsel %vm647, %v646, %v619
          %vm649 = vcmask 89088
          %v650 = vsel %vm649, %v648, %v627
          %vm651 = vcmask 97280
          %v652 = vsel %vm651, %v650, 0.0
          %vm653 = vcmask 105472
          %v654 = vsel %vm653, %v652, 0.0
          %vm655 = vcmask 113664
          %v656 = vsel %vm655, %v654, 0.0
          %vm657 = vcmask 121856
          %v658 = vsel %vm657, %v656, 1.0
          %vm659 = vcmask 122880
          %660 = vst.msk [vmem:[%s354] sm:$0x1] %vm659, %v658
          %v661 = vmul.f32 %v379, %v658
          %v664 = vunpack.c.l.s4 1966171168
          %v665 = vunpack.c.0.s8 %v664
          %v666 = vlaneseq
          %v667 = vshrl.u32 %v666, 7
          %v668 = vsub.s32 %v665, %v667
          %v669 = vrot.slane %v658, %v668
          %v671 = vunpack.c.l.s4 1966171168
          %v672 = vunpack.c.0.s8 %v671
          %v673 = vlaneseq
          %v674 = vshrl.u32 %v673, 7
          %v675 = vsub.s32 %v672, %v674
          %v676 = vrot.slane %v669, %v675
          %677 = vrot.lane.b32.xlu0 %v676, 125
          %v678 = vpop.permute.xlu0 %677
          %v680 = vmul.f32 %v379, %v678
          %682 = vrot.lane.b32.xlu0 %v680, 127
          %v683 = vpop.permute.xlu0 %682
          %v685 = vadd.f32 %v661, %v683
          %686 = vrot.lane.b32.xlu0 %v676, 122
          %v687 = vpop.permute.xlu0 %686
          %v689 = vmul.f32 %v379, %v687
          %691 = vrot.lane.b32.xlu0 %v689, 126
          %v692 = vpop.permute.xlu0 %691
          %v694 = vadd.f32 %v685, %v692
          %695 = vrot.lane.b32.xlu0 %v676, 119
          %v696 = vpop.permute.xlu0 %695
          %v698 = vmul.f32 %v379, %v696
          %700 = vrot.lane.b32.xlu0 %v698, 125
          %v701 = vpop.permute.xlu0 %700
          %v703 = vadd.f32 %v694, %v701
          %704 = vrot.lane.b32.xlu0 %v676, 127
          %v705 = vpop.permute.xlu0 %704
          %v707 = vmul.f32 %v379, %v705
          %708 = vrot.lane.b32.xlu0 %v676, 124
          %v709 = vpop.permute.xlu0 %708
          %v711 = vmul.f32 %v379, %v709
          %713 = vrot.lane.b32.xlu0 %v711, 127
          %v714 = vpop.permute.xlu0 %713
          %v716 = vadd.f32 %v707, %v714
          %717 = vrot.lane.b32.xlu0 %v676, 121
          %v718 = vpop.permute.xlu0 %717
          %v720 = vmul.f32 %v379, %v718
          %722 = vrot.lane.b32.xlu0 %v720, 126
          %v723 = vpop.permute.xlu0 %722
          %v725 = vadd.f32 %v716, %v723
          %726 = vrot.lane.b32.xlu0 %v676, 118
          %v727 = vpop.permute.xlu0 %726
          %v729 = vmul.f32 %v379, %v727
          %731 = vrot.lane.b32.xlu0 %v729, 125
          %v732 = vpop.permute.xlu0 %731
          %v734 = vadd.f32 %v725, %v732
          %735 = vrot.lane.b32.xlu0 %v676, 126
          %v736 = vpop.permute.xlu0 %735
          %v738 = vmul.f32 %v379, %v736
          %739 = vrot.lane.b32.xlu0 %v676, 123
          %v740 = vpop.permute.xlu0 %739
          %v742 = vmul.f32 %v379, %v740
          %744 = vrot.lane.b32.xlu0 %v742, 127
          %v745 = vpop.permute.xlu0 %744
          %v747 = vadd.f32 %v738, %v745
          %748 = vrot.lane.b32.xlu0 %v676, 120
          %v749 = vpop.permute.xlu0 %748
          %v751 = vmul.f32 %v379, %v749
          %753 = vrot.lane.b32.xlu0 %v751, 126
          %v754 = vpop.permute.xlu0 %753
          %v756 = vadd.f32 %v747, %v754
          %757 = vrot.lane.b32.xlu0 %v676, 117
          %v758 = vpop.permute.xlu0 %757
          %v760 = vmul.f32 %v379, %v758
          %762 = vrot.lane.b32.xlu0 %v760, 125
          %v763 = vpop.permute.xlu0 %762
          %v765 = vadd.f32 %v756, %v763
          %766 = vrot.lane.b32.xlu0 %v689, 127
          %v767 = vpop.permute.xlu0 %766
          %v769 = vadd.f32 %v680, %v767
          %770 = vrot.lane.b32.xlu0 %v698, 126
          %v771 = vpop.permute.xlu0 %770
          %v773 = vadd.f32 %v769, %v771
          %774 = vrot.lane.b32.xlu0 %v676, 116
          %v775 = vpop.permute.xlu0 %774
          %v777 = vmul.f32 %v379, %v775
          %779 = vrot.lane.b32.xlu0 %v777, 125
          %v780 = vpop.permute.xlu0 %779
          %v782 = vadd.f32 %v773, %v780
          %783 = vrot.lane.b32.xlu0 %v676, 4
          %v784 = vpop.permute.xlu0 %783
          %v786 = vmul.f32 %v379, %v784
          %787 = vrot.lane.b32.xlu0 %v676, 1
          %v788 = vpop.permute.xlu0 %787
          %v790 = vmul.f32 %v379, %v788
          %792 = vrot.lane.b32.xlu0 %v790, 127
          %v793 = vpop.permute.xlu0 %792
          %v795 = vadd.f32 %v786, %v793
          %797 = vrot.lane.b32.xlu0 %v738, 126
          %v798 = vpop.permute.xlu0 %797
          %v800 = vadd.f32 %v795, %v798
          %801 = vrot.lane.b32.xlu0 %v742, 125
          %v802 = vpop.permute.xlu0 %801
          %v804 = vadd.f32 %v800, %v802
          %805 = vrot.lane.b32.xlu0 %v676, 3
          %v806 = vpop.permute.xlu0 %805
          %v808 = vmul.f32 %v379, %v806
          %810 = vrot.lane.b32.xlu0 %v661, 127
          %v811 = vpop.permute.xlu0 %810
          %v813 = vadd.f32 %v808, %v811
          %814 = vrot.lane.b32.xlu0 %v680, 126
          %v815 = vpop.permute.xlu0 %814
          %v817 = vadd.f32 %v813, %v815
          %818 = vrot.lane.b32.xlu0 %v689, 125
          %v819 = vpop.permute.xlu0 %818
          %v821 = vadd.f32 %v817, %v819
          %822 = vrot.lane.b32.xlu0 %v676, 2
          %v823 = vpop.permute.xlu0 %822
          %v825 = vmul.f32 %v379, %v823
          %827 = vrot.lane.b32.xlu0 %v707, 127
          %v828 = vpop.permute.xlu0 %827
          %v830 = vadd.f32 %v825, %v828
          %831 = vrot.lane.b32.xlu0 %v711, 126
          %v832 = vpop.permute.xlu0 %831
          %v834 = vadd.f32 %v830, %v832
          %835 = vrot.lane.b32.xlu0 %v720, 125
          %v836 = vpop.permute.xlu0 %835
          %v838 = vadd.f32 %v834, %v836
          %839 = vrot.lane.b32.xlu0 %v738, 127
          %v840 = vpop.permute.xlu0 %839
          %v842 = vadd.f32 %v790, %v840
          %843 = vrot.lane.b32.xlu0 %v742, 126
          %v844 = vpop.permute.xlu0 %843
          %v846 = vadd.f32 %v842, %v844
          %847 = vrot.lane.b32.xlu0 %v751, 125
          %v848 = vpop.permute.xlu0 %847
          %v850 = vadd.f32 %v846, %v848
          %851 = vrot.lane.b32.xlu0 %v676, 8
          %v852 = vpop.permute.xlu0 %851
          %v854 = vmul.f32 %v379, %v852
          %855 = vrot.lane.b32.xlu0 %v676, 5
          %v856 = vpop.permute.xlu0 %855
          %v858 = vmul.f32 %v379, %v856
          %860 = vrot.lane.b32.xlu0 %v858, 127
          %v861 = vpop.permute.xlu0 %860
          %v863 = vadd.f32 %v854, %v861
          %865 = vrot.lane.b32.xlu0 %v825, 126
          %v866 = vpop.permute.xlu0 %865
          %v868 = vadd.f32 %v863, %v866
          %869 = vrot.lane.b32.xlu0 %v707, 125
          %v870 = vpop.permute.xlu0 %869
          %v872 = vadd.f32 %v868, %v870
          %873 = vrot.lane.b32.xlu0 %v676, 7
          %v874 = vpop.permute.xlu0 %873
          %v876 = vmul.f32 %v379, %v874
          %878 = vrot.lane.b32.xlu0 %v786, 127
          %v879 = vpop.permute.xlu0 %878
          %v881 = vadd.f32 %v876, %v879
          %882 = vrot.lane.b32.xlu0 %v790, 126
          %v883 = vpop.permute.xlu0 %882
          %v885 = vadd.f32 %v881, %v883
          %886 = vrot.lane.b32.xlu0 %v738, 125
          %v887 = vpop.permute.xlu0 %886
          %v889 = vadd.f32 %v885, %v887
          %890 = vrot.lane.b32.xlu0 %v676, 6
          %v891 = vpop.permute.xlu0 %890
          %v893 = vmul.f32 %v379, %v891
          %895 = vrot.lane.b32.xlu0 %v808, 127
          %v896 = vpop.permute.xlu0 %895
          %v898 = vadd.f32 %v893, %v896
          %899 = vrot.lane.b32.xlu0 %v661, 126
          %v900 = vpop.permute.xlu0 %899
          %v902 = vadd.f32 %v898, %v900
          %903 = vrot.lane.b32.xlu0 %v680, 125
          %v904 = vpop.permute.xlu0 %903
          %v906 = vadd.f32 %v902, %v904
          %907 = vrot.lane.b32.xlu0 %v825, 127
          %v908 = vpop.permute.xlu0 %907
          %v910 = vadd.f32 %v858, %v908
          %911 = vrot.lane.b32.xlu0 %v707, 126
          %v912 = vpop.permute.xlu0 %911
          %v914 = vadd.f32 %v910, %v912
          %915 = vrot.lane.b32.xlu0 %v711, 125
          %v916 = vpop.permute.xlu0 %915
          %v918 = vadd.f32 %v914, %v916
          %919 = vrot.lane.b32.xlu0 %v676, 12
          %v920 = vpop.permute.xlu0 %919
          %v922 = vmul.f32 %v379, %v920
          %923 = vrot.lane.b32.xlu0 %v676, 9
          %v924 = vpop.permute.xlu0 %923
          %v926 = vmul.f32 %v379, %v924
          %928 = vrot.lane.b32.xlu0 %v926, 127
          %v929 = vpop.permute.xlu0 %928
          %v931 = vadd.f32 %v922, %v929
          %933 = vrot.lane.b32.xlu0 %v893, 126
          %v934 = vpop.permute.xlu0 %933
          %v936 = vadd.f32 %v931, %v934
          %937 = vrot.lane.b32.xlu0 %v808, 125
          %v938 = vpop.permute.xlu0 %937
          %v940 = vadd.f32 %v936, %v938
          %941 = vrot.lane.b32.xlu0 %v676, 11
          %v942 = vpop.permute.xlu0 %941
          %v944 = vmul.f32 %v379, %v942
          %946 = vrot.lane.b32.xlu0 %v854, 127
          %v947 = vpop.permute.xlu0 %946
          %v949 = vadd.f32 %v944, %v947
          %950 = vrot.lane.b32.xlu0 %v858, 126
          %v951 = vpop.permute.xlu0 %950
          %v953 = vadd.f32 %v949, %v951
          %954 = vrot.lane.b32.xlu0 %v825, 125
          %v955 = vpop.permute.xlu0 %954
          %v957 = vadd.f32 %v953, %v955
          %958 = vrot.lane.b32.xlu0 %v676, 10
          %v959 = vpop.permute.xlu0 %958
          %v961 = vmul.f32 %v379, %v959
          %963 = vrot.lane.b32.xlu0 %v876, 127
          %v964 = vpop.permute.xlu0 %963
          %v966 = vadd.f32 %v961, %v964
          %967 = vrot.lane.b32.xlu0 %v786, 126
          %v968 = vpop.permute.xlu0 %967
          %v970 = vadd.f32 %v966, %v968
          %971 = vrot.lane.b32.xlu0 %v790, 125
          %v972 = vpop.permute.xlu0 %971
          %v974 = vadd.f32 %v970, %v972
          %975 = vrot.lane.b32.xlu0 %v893, 127
          %v976 = vpop.permute.xlu0 %975
          %v978 = vadd.f32 %v926, %v976
          %979 = vrot.lane.b32.xlu0 %v808, 126
          %v980 = vpop.permute.xlu0 %979
          %v982 = vadd.f32 %v978, %v980
          %983 = vrot.lane.b32.xlu0 %v661, 125
          %v984 = vpop.permute.xlu0 %983
          %v986 = vadd.f32 %v982, %v984
          %v988 = vlaneseq
          %v989 = vshrl.u32 %v988, 7
          %v990 = vsub.s32 0, %v989
          %v991 = vrot.slane %v734, %v990
          %992 = vrot.lane.b32.xlu0 %v991, 1
          %v993 = vpop.permute.xlu0 %992
          %v996 = vlaneseq
          %v997 = vshrl.u32 %v996, 7
          %v998 = vsub.s32 0, %v997
          %v999 = vrot.slane %v765, %v998
          %1000 = vrot.lane.b32.xlu0 %v999, 2
          %v1001 = vpop.permute.xlu0 %1000
          %v1004 = vlaneseq
          %v1005 = vshrl.u32 %v1004, 7
          %v1006 = vsub.s32 0, %v1005
          %v1007 = vrot.slane %v782, %v1006
          %1008 = vrot.lane.b32.xlu0 %v1007, 3
          %v1009 = vpop.permute.xlu0 %1008
          %v1012 = vlaneseq
          %v1013 = vshrl.u32 %v1012, 7
          %v1014 = vsub.s32 0, %v1013
          %v1015 = vrot.slane %v821, %v1014
          %1016 = vrot.lane.b32.xlu0 %v1015, 1
          %v1017 = vpop.permute.xlu0 %1016
          %v1020 = vlaneseq
          %v1021 = vshrl.u32 %v1020, 7
          %v1022 = vsub.s32 0, %v1021
          %v1023 = vrot.slane %v838, %v1022
          %1024 = vrot.lane.b32.xlu0 %v1023, 2
          %v1025 = vpop.permute.xlu0 %1024
          %v1028 = vlaneseq
          %v1029 = vshrl.u32 %v1028, 7
          %v1030 = vsub.s32 0, %v1029
          %v1031 = vrot.slane %v850, %v1030
          %1032 = vrot.lane.b32.xlu0 %v1031, 3
          %v1033 = vpop.permute.xlu0 %1032
          %v1036 = vlaneseq
          %v1037 = vshrl.u32 %v1036, 7
          %v1038 = vsub.s32 0, %v1037
          %v1039 = vrot.slane %v889, %v1038
          %1040 = vrot.lane.b32.xlu0 %v1039, 1
          %v1041 = vpop.permute.xlu0 %1040
          %v1044 = vlaneseq
          %v1045 = vshrl.u32 %v1044, 7
          %v1046 = vsub.s32 0, %v1045
          %v1047 = vrot.slane %v906, %v1046
          %1048 = vrot.lane.b32.xlu0 %v1047, 2
          %v1049 = vpop.permute.xlu0 %1048
          %v1052 = vlaneseq
          %v1053 = vshrl.u32 %v1052, 7
          %v1054 = vsub.s32 0, %v1053
          %v1055 = vrot.slane %v918, %v1054
          %1056 = vrot.lane.b32.xlu0 %v1055, 3
          %v1057 = vpop.permute.xlu0 %1056
          %v1060 = vlaneseq
          %v1061 = vshrl.u32 %v1060, 7
          %v1062 = vsub.s32 0, %v1061
          %v1063 = vrot.slane %v957, %v1062
          %1064 = vrot.lane.b32.xlu0 %v1063, 1
          %v1065 = vpop.permute.xlu0 %1064
          %v1068 = vlaneseq
          %v1069 = vshrl.u32 %v1068, 7
          %v1070 = vsub.s32 0, %v1069
          %v1071 = vrot.slane %v974, %v1070
          %1072 = vrot.lane.b32.xlu0 %v1071, 2
          %v1073 = vpop.permute.xlu0 %1072
          %v1076 = vlaneseq
          %v1077 = vshrl.u32 %v1076, 7
          %v1078 = vsub.s32 0, %v1077
          %v1079 = vrot.slane %v986, %v1078
          %1080 = vrot.lane.b32.xlu0 %v1079, 3
          %v1081 = vpop.permute.xlu0 %1080
          %v1083 = vsel %vm629, %v703, %v993
          %v1084 = vsel %vm631, %v1083, %v1001
          %v1085 = vsel %vm633, %v1084, %v1009
          %v1086 = vsel %vm635, %v1085, %v804
          %v1087 = vsel %vm637, %v1086, %v1017
          %v1088 = vsel %vm639, %v1087, %v1025
          %v1089 = vsel %vm641, %v1088, %v1033
          %v1090 = vsel %vm643, %v1089, %v872
          %v1091 = vsel %vm645, %v1090, %v1041
          %v1092 = vsel %vm647, %v1091, %v1049
          %v1093 = vsel %vm649, %v1092, %v1057
          %v1094 = vsel %vm651, %v1093, %v940
          %v1095 = vsel %vm653, %v1094, %v1065
          %v1096 = vsel %vm655, %v1095, %v1073
          %v1097 = vsel %vm657, %v1096, %v1081
          %1098 = vst.msk [vmem:[%s360] sm:$0x1] %vm659, %v1097
          %v1099 = vlaneseq
          %vm1100 = vcmp.ge.s32.totalorder %v1099, 0
          %vm1101 = vcmp.lt.s32.totalorder %v1099, 256
          %vm1102 = vmand %vm1100, %vm1101
          %1103 = vst.msk [vmem:[#allocation2] sm:$0x3] %vm1102, 0.0
        $region44: #{tpu_custom_call.1} parent=39 // pred_fallthru
          _
        %s1104 = smul.u32 %s34, 8
        %s1105 = smul.u32 %s1104, 3
        %s1106 = smul.addr %s1105, 4
        %s1107 = scalar_lea.vmem %s365, %s1106
        %v1108 = vld [vmem:[%s1107] sm:$0xf]
        %v1109 = vld [vmem:[%s1107 + $0x4] sm:$0xf]
        %v1110 = vld [vmem:[%s1107 + $0x8] sm:$0x1]
        %v1111 = vld [vmem:[%s1107 + $0xc] sm:$0xf]
        %v1112 = vld [vmem:[%s1107 + $0x10] sm:$0xf]
        %v1113 = vld [vmem:[%s1107 + $0x14] sm:$0x1]
        %v1114 = vld [vmem:[%s1107 + $0x18] sm:$0xf]
        %v1115 = vld [vmem:[%s1107 + $0x1c] sm:$0xf]
        %v1116 = vld [vmem:[%s1107 + $0x20] sm:$0x1]
        %v1117 = vld [vmem:[%s1107 + $0x24] sm:$0xf]
        %v1118 = vld [vmem:[%s1107 + $0x28] sm:$0xf]
        %v1119 = vld [vmem:[%s1107 + $0x2c] sm:$0x1]
        %v1120 = vld [vmem:[%s1107 + $0x30] sm:$0xf]
        %v1121 = vld [vmem:[%s1107 + $0x34] sm:$0xf]
        %v1122 = vld [vmem:[%s1107 + $0x38] sm:$0x1]
        %v1123 = vld [vmem:[%s1107 + $0x3c] sm:$0xf]
        %v1124 = vld [vmem:[%s1107 + $0x40] sm:$0xf]
        %v1125 = vld [vmem:[%s1107 + $0x44] sm:$0x1]
        %v1126 = vld [vmem:[%s1107 + $0x48] sm:$0xf]
        %v1127 = vld [vmem:[%s1107 + $0x4c] sm:$0xf]
        %v1128 = vld [vmem:[%s1107 + $0x50] sm:$0x1]
        %v1129 = vld [vmem:[%s1107 + $0x54] sm:$0xf]
        %v1130 = vld [vmem:[%s1107 + $0x58] sm:$0xf]
        %v1131 = vld [vmem:[%s1107 + $0x5c] sm:$0x1]
        %v1132 = vld [vmem:[%s1107 + $0x60] sm:$0xf]
        %v1133 = vld [vmem:[%s1107 + $0x64] sm:$0xf]
        %v1134 = vld [vmem:[%s1107 + $0x68] sm:$0x1]
        %v1135 = vld [vmem:[%s1107 + $0x6c] sm:$0xf]
        %v1136 = vld [vmem:[%s1107 + $0x70] sm:$0xf]
        %v1137 = vld [vmem:[%s1107 + $0x74] sm:$0x1]
        %v1138 = vld [vmem:[%s1] sm:$0xf]
        %vm1139 = vsmask.f32 3328
        %vm1140 = vsmask.f32 7440
        %vm1141 = vmor %vm1139, %vm1140
        %v1143 = vshrl.u32 %v1108, 16
        %v1145 = vrot.slane %v1143, 4
        %v1146 = vshll.u32 %v1108, 16
        %v1148 = vrot.slane %v1146, 5
        %v1149 = vor.u32 %v1145, %v1148
        %v1150 = vrot.slane %v1149, 4
        %v1152 = vshll.u32 %v1109, 16
        %v1154 = vrot.slane %v1152, 5
        %v1155 = vsel %vm1141, %v1150, %v1154
        %v1156 = vshrl.u32 %v1109, 16
        %v1158 = vrot.slane %v1156, 4
        %v1159 = vor.u32 %v1158, %v1154
        %v1160 = vrot.slane %v1159, 4
        %v1162 = vshll.u32 %v1110, 16
        %v1164 = vrot.slane %v1162, 5
        %v1165 = vsel %vm1141, %v1160, %v1164
        %v1167 = vshrl.u32 %v1111, 16
        %v1169 = vrot.slane %v1167, 4
        %v1170 = vshll.u32 %v1111, 16
        %v1172 = vrot.slane %v1170, 5
        %v1173 = vor.u32 %v1169, %v1172
        %v1174 = vrot.slane %v1173, 4
        %v1176 = vshll.u32 %v1112, 16
        %v1178 = vrot.slane %v1176, 5
        %v1179 = vsel %vm1141, %v1174, %v1178
        %v1180 = vshrl.u32 %v1112, 16
        %v1182 = vrot.slane %v1180, 4
        %v1183 = vor.u32 %v1182, %v1178
        %v1184 = vrot.slane %v1183, 4
        %v1186 = vshll.u32 %v1113, 16
        %v1188 = vrot.slane %v1186, 5
        %v1189 = vsel %vm1141, %v1184, %v1188
        %v1191 = vshrl.u32 %v1114, 16
        %v1193 = vrot.slane %v1191, 4
        %v1194 = vshll.u32 %v1114, 16
        %v1196 = vrot.slane %v1194, 5
        %v1197 = vor.u32 %v1193, %v1196
        %v1198 = vrot.slane %v1197, 4
        %v1200 = vshll.u32 %v1115, 16
        %v1202 = vrot.slane %v1200, 5
        %v1203 = vsel %vm1141, %v1198, %v1202
        %v1204 = vshrl.u32 %v1115, 16
        %v1206 = vrot.slane %v1204, 4
        %v1207 = vor.u32 %v1206, %v1202
        %v1208 = vrot.slane %v1207, 4
        %v1210 = vshll.u32 %v1116, 16
        %v1212 = vrot.slane %v1210, 5
        %v1213 = vsel %vm1141, %v1208, %v1212
        %v1215 = vshrl.u32 %v1117, 16
        %v1217 = vrot.slane %v1215, 4
        %v1218 = vshll.u32 %v1117, 16
        %v1220 = vrot.slane %v1218, 5
        %v1221 = vor.u32 %v1217, %v1220
        %v1222 = vrot.slane %v1221, 4
        %v1224 = vshll.u32 %v1118, 16
        %v1226 = vrot.slane %v1224, 5
        %v1227 = vsel %vm1141, %v1222, %v1226
        %v1228 = vshrl.u32 %v1118, 16
        %v1230 = vrot.slane %v1228, 4
        %v1231 = vor.u32 %v1230, %v1226
        %v1232 = vrot.slane %v1231, 4
        %v1234 = vshll.u32 %v1119, 16
        %v1236 = vrot.slane %v1234, 5
        %v1237 = vsel %vm1141, %v1232, %v1236
        %v1239 = vshrl.u32 %v1120, 16
        %v1241 = vrot.slane %v1239, 4
        %v1242 = vshll.u32 %v1120, 16
        %v1244 = vrot.slane %v1242, 5
        %v1245 = vor.u32 %v1241, %v1244
        %v1246 = vrot.slane %v1245, 4
        %v1248 = vshll.u32 %v1121, 16
        %v1250 = vrot.slane %v1248, 5
        %v1251 = vsel %vm1141, %v1246, %v1250
        %v1252 = vshrl.u32 %v1121, 16
        %v1254 = vrot.slane %v1252, 4
        %v1255 = vor.u32 %v1254, %v1250
        %v1256 = vrot.slane %v1255, 4
        %v1258 = vshll.u32 %v1122, 16
        %v1260 = vrot.slane %v1258, 5
        %v1261 = vsel %vm1141, %v1256, %v1260
        %v1263 = vshrl.u32 %v1123, 16
        %v1265 = vrot.slane %v1263, 4
        %v1266 = vshll.u32 %v1123, 16
        %v1268 = vrot.slane %v1266, 5
        %v1269 = vor.u32 %v1265, %v1268
        %v1270 = vrot.slane %v1269, 4
        %v1272 = vshll.u32 %v1124, 16
        %v1274 = vrot.slane %v1272, 5
        %v1275 = vsel %vm1141, %v1270, %v1274
        %v1276 = vshrl.u32 %v1124, 16
        %v1278 = vrot.slane %v1276, 4
        %v1279 = vor.u32 %v1278, %v1274
        %v1280 = vrot.slane %v1279, 4
        %v1282 = vshll.u32 %v1125, 16
        %v1284 = vrot.slane %v1282, 5
        %v1285 = vsel %vm1141, %v1280, %v1284
        %v1287 = vshrl.u32 %v1126, 16
        %v1289 = vrot.slane %v1287, 4
        %v1290 = vshll.u32 %v1126, 16
        %v1292 = vrot.slane %v1290, 5
        %v1293 = vor.u32 %v1289, %v1292
        %v1294 = vrot.slane %v1293, 4
        %v1296 = vshll.u32 %v1127, 16
        %v1298 = vrot.slane %v1296, 5
        %v1299 = vsel %vm1141, %v1294, %v1298
        %v1300 = vshrl.u32 %v1127, 16
        %v1302 = vrot.slane %v1300, 4
        %v1303 = vor.u32 %v1302, %v1298
        %v1304 = vrot.slane %v1303, 4
        %v1306 = vshll.u32 %v1128, 16
        %v1308 = vrot.slane %v1306, 5
        %v1309 = vsel %vm1141, %v1304, %v1308
        %v1311 = vshrl.u32 %v1129, 16
        %v1313 = vrot.slane %v1311, 4
        %v1314 = vshll.u32 %v1129, 16
        %v1316 = vrot.slane %v1314, 5
        %v1317 = vor.u32 %v1313, %v1316
        %v1318 = vrot.slane %v1317, 4
        %v1320 = vshll.u32 %v1130, 16
        %v1322 = vrot.slane %v1320, 5
        %v1323 = vsel %vm1141, %v1318, %v1322
        %v1324 = vshrl.u32 %v1130, 16
        %v1326 = vrot.slane %v1324, 4
        %v1327 = vor.u32 %v1326, %v1322
        %v1328 = vrot.slane %v1327, 4
        %v1330 = vshll.u32 %v1131, 16
        %v1332 = vrot.slane %v1330, 5
        %v1333 = vsel %vm1141, %v1328, %v1332
        %s1334 = scalar_lea.vmem %s1, 4
        %v1335 = vld [vmem:[%s1334] sm:$0xf]
        %v1336 = vunpack.c.l.b16 %v1155
        %v1337 = vunpack.c.l.b16 %v1165
        %v1338 = vunpack.c.l.b16 %v1179
        %v1339 = vunpack.c.l.b16 %v1189
        %v1340 = vunpack.c.l.b16 %v1203
        %v1341 = vunpack.c.l.b16 %v1213
        %v1342 = vunpack.c.l.b16 %v1227
        %v1343 = vunpack.c.l.b16 %v1237
        %v1344 = vunpack.c.l.b16 %v1251
        %v1345 = vunpack.c.l.b16 %v1261
        %v1346 = vunpack.c.l.b16 %v1275
        %v1347 = vunpack.c.l.b16 %v1285
        %v1348 = vunpack.c.l.b16 %v1299
        %v1349 = vunpack.c.l.b16 %v1309
        %v1350 = vunpack.c.l.b16 %v1323
        %v1351 = vunpack.c.l.b16 %v1333
        %v1352 = vpack.c.b16 %v1337, %v1336
        %v1353 = vpack.c.b16 %v1339, %v1338
        %v1354 = vpack.c.b16 %v1341, %v1340
        %v1355 = vpack.c.b16 %v1343, %v1342
        %v1356 = vpack.c.b16 %v1345, %v1344
        %v1357 = vpack.c.b16 %v1347, %v1346
        %v1358 = vpack.c.b16 %v1349, %v1348
        %v1359 = vpack.c.b16 %v1351, %v1350
        %v1362 = vunpack.c.l.s4 1983009808
        %v1363 = vunpack.c.0.s8 %v1362
        %v1364 = vlaneseq
        %v1365 = vshrl.u32 %v1364, 7
        %v1366 = vsub.s32 %v1363, %v1365
        %v1367 = vrot.slane %v1335, %v1366
        %v1368 = vcombine.high %v1367, %v1367
        %vm1369 = vcmask 31744
        %v1371 = vsel %vm1369, %v1352, 0
        %v1374 = vsel %vm1369, %v1353, 0
        %v1377 = vsel %vm1369, %v1354, 0
        %v1380 = vsel %vm1369, %v1355, 0
        %v1383 = vsel %vm1369, %v1356, 0
        %v1386 = vsel %vm1369, %v1357, 0
        %v1389 = vsel %vm1369, %v1358, 0
        %v1392 = vsel %vm1369, %v1359, 0
        %vm1394 = vcmask 1041408
        %v1396 = vsel %vm1394, %v1367, 0
        %v1399 = vsel %vm1394, %v1368, 0
        %1401 = vmatprep.subr.bf16.mxu0 0
        %1402 = vmatpush1.bf16.msra.mxu0 0
        %1403 = vmatprep.subr.bf16.mxu0 0
        %1404 = vmatpush1.bf16.msra.mxu0 0
        %1405 = vmatprep.subr.bf16.mxu0 0
        %1406 = vmatpush1.bf16.msra.mxu0 0
        %1407 = vmatprep.subr.bf16.mxu0 0
        %1408 = vmatpush1.bf16.msra.mxu0 0
        %1409 = vmatprep.subr.bf16.mxu0 0
        %1410 = vmatpush1.bf16.msra.mxu0 0
        %1411 = vmatprep.subr.bf16.mxu0 0
        %1412 = vmatpush1.bf16.msra.mxu0 0
        %1413 = vmatprep.subr.bf16.mxu0 0
        %1414 = vmatpush1.bf16.msra.mxu0 0
        %1415 = vmatprep.subr.bf16.mxu0 %v1399
        %1416 = vmatpush1.bf16.msra.mxu0 %v1396
        %1417 = vmatprep.subr.bf16.mxu0 0
        %1418 = vmatpush2.bf16.msra.mxu0 0
        %1419 = vmatprep.subr.bf16.mxu0 0
        %1420 = vmatpush2.bf16.msra.mxu0 0
        %1421 = vmatprep.subr.bf16.mxu0 0
        %1422 = vmatpush2.bf16.msra.mxu0 0
        %1423 = vmatprep.subr.bf16.mxu0 0
        %1424 = vmatpush2.bf16.msra.mxu0 0
        %1425 = vmatprep.subr.bf16.mxu0 0
        %1426 = vmatpush2.bf16.msra.mxu0 0
        %1427 = vmatprep.subr.bf16.mxu0 0
        %1428 = vmatpush2.bf16.msra.mxu0 0
        %1429 = vmatprep.subr.bf16.mxu0 0
        %1430 = vmatpush2.bf16.msra.mxu0 0
        %1431 = vmatprep.subr.bf16.mxu0 0
        %1432 = vmatpush2.bf16.msra.mxu0 0
        %1433 = vmatprep.mubr.bf16.mxu0 0
        %1434 = vmatmul.mubr.bf16.gmra.mxu0 %v1371
        %v1435 = vpop.f32.mrf.mxu0
        %v1436 = vadd.f32 0.0, %v1435
        %v1437 = vpop.f32.mrf.mxu0
        %v1438 = vadd.f32 0.0, %v1437
        %v1439 = vpop.f32.mrf.mxu0
        %v1440 = vadd.f32 0.0, %v1439
        %v1441 = vpop.f32.mrf.mxu0
        %v1442 = vadd.f32 0.0, %v1441
        %1443 = vmatprep.mubr.bf16.mxu0 0
        %1444 = vmatmul.mubr.bf16.gmra.mxu0 %v1374
        %v1445 = vpop.f32.mrf.mxu0
        %v1446 = vadd.f32 0.0, %v1445
        %v1447 = vpop.f32.mrf.mxu0
        %v1448 = vadd.f32 0.0, %v1447
        %v1449 = vpop.f32.mrf.mxu0
        %v1450 = vadd.f32 0.0, %v1449
        %v1451 = vpop.f32.mrf.mxu0
        %v1452 = vadd.f32 0.0, %v1451
        %1453 = vmatprep.mubr.bf16.mxu0 0
        %1454 = vmatmul.mubr.bf16.gmra.mxu0 %v1377
        %v1455 = vpop.f32.mrf.mxu0
        %v1456 = vadd.f32 0.0, %v1455
        %v1457 = vpop.f32.mrf.mxu0
        %v1458 = vadd.f32 0.0, %v1457
        %v1459 = vpop.f32.mrf.mxu0
        %v1460 = vadd.f32 0.0, %v1459
        %v1461 = vpop.f32.mrf.mxu0
        %v1462 = vadd.f32 0.0, %v1461
        %1463 = vmatprep.mubr.bf16.mxu0 0
        %1464 = vmatmul.mubr.bf16.gmra.mxu0 %v1380
        %v1465 = vpop.f32.mrf.mxu0
        %v1466 = vadd.f32 0.0, %v1465
        %v1467 = vpop.f32.mrf.mxu0
        %v1468 = vadd.f32 0.0, %v1467
        %v1469 = vpop.f32.mrf.mxu0
        %v1470 = vadd.f32 0.0, %v1469
        %v1471 = vpop.f32.mrf.mxu0
        %v1472 = vadd.f32 0.0, %v1471
        %1473 = vmatprep.mubr.bf16.mxu0 0
        %1474 = vmatmul.mubr.bf16.gmra.mxu0 %v1383
        %v1475 = vpop.f32.mrf.mxu0
        %v1476 = vadd.f32 0.0, %v1475
        %v1477 = vpop.f32.mrf.mxu0
        %v1478 = vadd.f32 0.0, %v1477
        %v1479 = vpop.f32.mrf.mxu0
        %v1480 = vadd.f32 0.0, %v1479
        %v1481 = vpop.f32.mrf.mxu0
        %v1482 = vadd.f32 0.0, %v1481
        %1483 = vmatprep.mubr.bf16.mxu0 0
        %1484 = vmatmul.mubr.bf16.gmra.mxu0 %v1386
        %v1485 = vpop.f32.mrf.mxu0
        %v1486 = vadd.f32 0.0, %v1485
        %v1487 = vpop.f32.mrf.mxu0
        %v1488 = vadd.f32 0.0, %v1487
        %v1489 = vpop.f32.mrf.mxu0
        %v1490 = vadd.f32 0.0, %v1489
        %v1491 = vpop.f32.mrf.mxu0
        %v1492 = vadd.f32 0.0, %v1491
        %1493 = vmatprep.mubr.bf16.mxu0 0
        %1494 = vmatmul.mubr.bf16.gmra.mxu0 %v1389
        %v1495 = vpop.f32.mrf.mxu0
        %v1496 = vadd.f32 0.0, %v1495
        %v1497 = vpop.f32.mrf.mxu0
        %v1498 = vadd.f32 0.0, %v1497
        %v1499 = vpop.f32.mrf.mxu0
        %v1500 = vadd.f32 0.0, %v1499
        %v1501 = vpop.f32.mrf.mxu0
        %v1502 = vadd.f32 0.0, %v1501
        %1503 = vmatprep.mubr.bf16.mxu0 0
        %1504 = vmatmul.mubr.bf16.gmra.mxu0 %v1392
        %v1505 = vpop.f32.mrf.mxu0
        %v1506 = vadd.f32 0.0, %v1505
        %v1507 = vpop.f32.mrf.mxu0
        %v1508 = vadd.f32 0.0, %v1507
        %v1509 = vpop.f32.mrf.mxu0
        %v1510 = vadd.f32 0.0, %v1509
        %v1511 = vpop.f32.mrf.mxu0
        %v1512 = vadd.f32 0.0, %v1511
        %1513 = vdwg.mxu0
        %v1530 = vunpack.c.l.b16 %v1108
        %v1531 = vunpack.c.l.b16 %v1109
        %v1532 = vunpack.c.l.b16 %v1111
        %v1533 = vunpack.c.l.b16 %v1112
        %v1534 = vunpack.c.l.b16 %v1114
        %v1535 = vunpack.c.l.b16 %v1115
        %v1536 = vunpack.c.l.b16 %v1117
        %v1537 = vunpack.c.l.b16 %v1118
        %v1538 = vunpack.c.l.b16 %v1120
        %v1539 = vunpack.c.l.b16 %v1121
        %v1540 = vunpack.c.l.b16 %v1123
        %v1541 = vunpack.c.l.b16 %v1124
        %v1542 = vunpack.c.l.b16 %v1126
        %v1543 = vunpack.c.l.b16 %v1127
        %v1544 = vunpack.c.l.b16 %v1129
        %v1545 = vunpack.c.l.b16 %v1130
        %v1546 = vpack.c.b16 %v1531, %v1530
        %v1547 = vpack.c.b16 %v1533, %v1532
        %v1548 = vpack.c.b16 %v1535, %v1534
        %v1549 = vpack.c.b16 %v1537, %v1536
        %v1550 = vpack.c.b16 %v1539, %v1538
        %v1551 = vpack.c.b16 %v1541, %v1540
        %v1552 = vpack.c.b16 %v1543, %v1542
        %v1553 = vpack.c.b16 %v1545, %v1544
        %v1556 = vunpack.c.l.s4 1983009808
        %v1557 = vunpack.c.0.s8 %v1556
        %v1558 = vlaneseq
        %v1559 = vshrl.u32 %v1558, 7
        %v1560 = vsub.s32 %v1557, %v1559
        %v1561 = vrot.slane %v1138, %v1560
        %v1562 = vcombine.high %v1561, %v1561
        %v1564 = vsel %vm1369, %v1546, 0
        %v1567 = vsel %vm1369, %v1547, 0
        %v1570 = vsel %vm1369, %v1548, 0
        %v1573 = vsel %vm1369, %v1549, 0
        %v1576 = vsel %vm1369, %v1550, 0
        %v1579 = vsel %vm1369, %v1551, 0
        %v1582 = vsel %vm1369, %v1552, 0
        %v1585 = vsel %vm1369, %v1553, 0
        %v1588 = vsel %vm1394, %v1561, 0
        %v1591 = vsel %vm1394, %v1562, 0
        %1593 = vmatprep.subr.bf16.mxu0 0
        %1594 = vmatpush1.bf16.msra.mxu0 0
        %1595 = vmatprep.subr.bf16.mxu0 0
        %1596 = vmatpush1.bf16.msra.mxu0 0
        %1597 = vmatprep.subr.bf16.mxu0 0
        %1598 = vmatpush1.bf16.msra.mxu0 0
        %1599 = vmatprep.subr.bf16.mxu0 0
        %1600 = vmatpush1.bf16.msra.mxu0 0
        %1601 = vmatprep.subr.bf16.mxu0 0
        %1602 = vmatpush1.bf16.msra.mxu0 0
        %1603 = vmatprep.subr.bf16.mxu0 0
        %1604 = vmatpush1.bf16.msra.mxu0 0
        %1605 = vmatprep.subr.bf16.mxu0 0
        %1606 = vmatpush1.bf16.msra.mxu0 0
        %1607 = vmatprep.subr.bf16.mxu0 %v1591
        %1608 = vmatpush1.bf16.msra.mxu0 %v1588
        %1609 = vmatprep.subr.bf16.mxu0 0
        %1610 = vmatpush2.bf16.msra.mxu0 0
        %1611 = vmatprep.subr.bf16.mxu0 0
        %1612 = vmatpush2.bf16.msra.mxu0 0
        %1613 = vmatprep.subr.bf16.mxu0 0
        %1614 = vmatpush2.bf16.msra.mxu0 0
        %1615 = vmatprep.subr.bf16.mxu0 0
        %1616 = vmatpush2.bf16.msra.mxu0 0
        %1617 = vmatprep.subr.bf16.mxu0 0
        %1618 = vmatpush2.bf16.msra.mxu0 0
        %1619 = vmatprep.subr.bf16.mxu0 0
        %1620 = vmatpush2.bf16.msra.mxu0 0
        %1621 = vmatprep.subr.bf16.mxu0 0
        %1622 = vmatpush2.bf16.msra.mxu0 0
        %1623 = vmatprep.subr.bf16.mxu0 0
        %1624 = vmatpush2.bf16.msra.mxu0 0
        %1625 = vmatprep.mubr.bf16.mxu0 0
        %1626 = vmatmul.mubr.bf16.gmra.mxu0 %v1564
        %v1627 = vpop.f32.mrf.mxu0
        %v1628 = vadd.f32 %v1436, %v1627
        %v1629 = vpop.f32.mrf.mxu0
        %v1630 = vadd.f32 %v1438, %v1629
        %v1631 = vpop.f32.mrf.mxu0
        %v1632 = vadd.f32 %v1440, %v1631
        %v1633 = vpop.f32.mrf.mxu0
        %v1634 = vadd.f32 %v1442, %v1633
        %1635 = vmatprep.mubr.bf16.mxu0 0
        %1636 = vmatmul.mubr.bf16.gmra.mxu0 %v1567
        %v1637 = vpop.f32.mrf.mxu0
        %v1638 = vadd.f32 %v1446, %v1637
        %v1639 = vpop.f32.mrf.mxu0
        %v1640 = vadd.f32 %v1448, %v1639
        %v1641 = vpop.f32.mrf.mxu0
        %v1642 = vadd.f32 %v1450, %v1641
        %v1643 = vpop.f32.mrf.mxu0
        %v1644 = vadd.f32 %v1452, %v1643
        %1645 = vmatprep.mubr.bf16.mxu0 0
        %1646 = vmatmul.mubr.bf16.gmra.mxu0 %v1570
        %v1647 = vpop.f32.mrf.mxu0
        %v1648 = vadd.f32 %v1456, %v1647
        %v1649 = vpop.f32.mrf.mxu0
        %v1650 = vadd.f32 %v1458, %v1649
        %v1651 = vpop.f32.mrf.mxu0
        %v1652 = vadd.f32 %v1460, %v1651
        %v1653 = vpop.f32.mrf.mxu0
        %v1654 = vadd.f32 %v1462, %v1653
        %1655 = vmatprep.mubr.bf16.mxu0 0
        %1656 = vmatmul.mubr.bf16.gmra.mxu0 %v1573
        %v1657 = vpop.f32.mrf.mxu0
        %v1658 = vadd.f32 %v1466, %v1657
        %v1659 = vpop.f32.mrf.mxu0
        %v1660 = vadd.f32 %v1468, %v1659
        %v1661 = vpop.f32.mrf.mxu0
        %v1662 = vadd.f32 %v1470, %v1661
        %v1663 = vpop.f32.mrf.mxu0
        %v1664 = vadd.f32 %v1472, %v1663
        %1665 = vmatprep.mubr.bf16.mxu0 0
        %1666 = vmatmul.mubr.bf16.gmra.mxu0 %v1576
        %v1667 = vpop.f32.mrf.mxu0
        %v1668 = vadd.f32 %v1476, %v1667
        %v1669 = vpop.f32.mrf.mxu0
        %v1670 = vadd.f32 %v1478, %v1669
        %v1671 = vpop.f32.mrf.mxu0
        %v1672 = vadd.f32 %v1480, %v1671
        %v1673 = vpop.f32.mrf.mxu0
        %v1674 = vadd.f32 %v1482, %v1673
        %1675 = vmatprep.mubr.bf16.mxu0 0
        %1676 = vmatmul.mubr.bf16.gmra.mxu0 %v1579
        %v1677 = vpop.f32.mrf.mxu0
        %v1678 = vadd.f32 %v1486, %v1677
        %v1679 = vpop.f32.mrf.mxu0
        %v1680 = vadd.f32 %v1488, %v1679
        %v1681 = vpop.f32.mrf.mxu0
        %v1682 = vadd.f32 %v1490, %v1681
        %v1683 = vpop.f32.mrf.mxu0
        %v1684 = vadd.f32 %v1492, %v1683
        %1685 = vmatprep.mubr.bf16.mxu0 0
        %1686 = vmatmul.mubr.bf16.gmra.mxu0 %v1582
        %v1687 = vpop.f32.mrf.mxu0
        %v1688 = vadd.f32 %v1496, %v1687
        %v1689 = vpop.f32.mrf.mxu0
        %v1690 = vadd.f32 %v1498, %v1689
        %v1691 = vpop.f32.mrf.mxu0
        %v1692 = vadd.f32 %v1500, %v1691
        %v1693 = vpop.f32.mrf.mxu0
        %v1694 = vadd.f32 %v1502, %v1693
        %1695 = vmatprep.mubr.bf16.mxu0 0
        %1696 = vmatmul.mubr.bf16.gmra.mxu0 %v1585
        %v1697 = vpop.f32.mrf.mxu0
        %v1698 = vadd.f32 %v1506, %v1697
        %v1699 = vpop.f32.mrf.mxu0
        %v1700 = vadd.f32 %v1508, %v1699
        %v1701 = vpop.f32.mrf.mxu0
        %v1702 = vadd.f32 %v1510, %v1701
        %v1703 = vpop.f32.mrf.mxu0
        %v1704 = vadd.f32 %v1512, %v1703
        %1705 = vdwg.mxu0
        %vm1714 = vcmask 1042432
        %vm1715 = vcmask 1046532
        %vm1716 = vmor %vm1714, %vm1715
        %v1717 = vrot.slane %v1108, 5
        %v1718 = vrot.slane %v1717, 4
        %v1719 = vrot.slane %v1109, 5
        %v1720 = vsel %vm1716, %v1718, %v1719
        %v1721 = vrot.slane %v1719, 4
        %v1722 = vrot.slane %v1110, 5
        %v1723 = vsel %vm1716, %v1721, %v1722
        %v1724 = vrot.slane %v1111, 5
        %v1725 = vrot.slane %v1724, 4
        %v1726 = vrot.slane %v1112, 5
        %v1727 = vsel %vm1716, %v1725, %v1726
        %v1728 = vrot.slane %v1726, 4
        %v1729 = vrot.slane %v1113, 5
        %v1730 = vsel %vm1716, %v1728, %v1729
        %v1731 = vrot.slane %v1114, 5
        %v1732 = vrot.slane %v1731, 4
        %v1733 = vrot.slane %v1115, 5
        %v1734 = vsel %vm1716, %v1732, %v1733
        %v1735 = vrot.slane %v1733, 4
        %v1736 = vrot.slane %v1116, 5
        %v1737 = vsel %vm1716, %v1735, %v1736
        %v1738 = vrot.slane %v1117, 5
        %v1739 = vrot.slane %v1738, 4
        %v1740 = vrot.slane %v1118, 5
        %v1741 = vsel %vm1716, %v1739, %v1740
        %v1742 = vrot.slane %v1740, 4
        %v1743 = vrot.slane %v1119, 5
        %v1744 = vsel %vm1716, %v1742, %v1743
        %v1745 = vrot.slane %v1120, 5
        %v1746 = vrot.slane %v1745, 4
        %v1747 = vrot.slane %v1121, 5
        %v1748 = vsel %vm1716, %v1746, %v1747
        %v1749 = vrot.slane %v1747, 4
        %v1750 = vrot.slane %v1122, 5
        %v1751 = vsel %vm1716, %v1749, %v1750
        %v1752 = vrot.slane %v1123, 5
        %v1753 = vrot.slane %v1752, 4
        %v1754 = vrot.slane %v1124, 5
        %v1755 = vsel %vm1716, %v1753, %v1754
        %v1756 = vrot.slane %v1754, 4
        %v1757 = vrot.slane %v1125, 5
        %v1758 = vsel %vm1716, %v1756, %v1757
        %v1759 = vrot.slane %v1126, 5
        %v1760 = vrot.slane %v1759, 4
        %v1761 = vrot.slane %v1127, 5
        %v1762 = vsel %vm1716, %v1760, %v1761
        %v1763 = vrot.slane %v1761, 4
        %v1764 = vrot.slane %v1128, 5
        %v1765 = vsel %vm1716, %v1763, %v1764
        %v1766 = vrot.slane %v1129, 5
        %v1767 = vrot.slane %v1766, 4
        %v1768 = vrot.slane %v1130, 5
        %v1769 = vsel %vm1716, %v1767, %v1768
        %v1770 = vrot.slane %v1768, 4
        %v1771 = vrot.slane %v1131, 5
        %v1772 = vsel %vm1716, %v1770, %v1771
        %s1773 = scalar_lea.vmem %s1, 8
        %v1774 = vld [vmem:[%s1773] sm:$0xf]
        %v1775 = vunpack.c.l.b16 %v1720
        %v1776 = vunpack.c.l.b16 %v1723
        %v1777 = vunpack.c.l.b16 %v1727
        %v1778 = vunpack.c.l.b16 %v1730
        %v1779 = vunpack.c.l.b16 %v1734
        %v1780 = vunpack.c.l.b16 %v1737
        %v1781 = vunpack.c.l.b16 %v1741
        %v1782 = vunpack.c.l.b16 %v1744
        %v1783 = vunpack.c.l.b16 %v1748
        %v1784 = vunpack.c.l.b16 %v1751
        %v1785 = vunpack.c.l.b16 %v1755
        %v1786 = vunpack.c.l.b16 %v1758
        %v1787 = vunpack.c.l.b16 %v1762
        %v1788 = vunpack.c.l.b16 %v1765
        %v1789 = vunpack.c.l.b16 %v1769
        %v1790 = vunpack.c.l.b16 %v1772
        %v1791 = vpack.c.b16 %v1776, %v1775
        %v1792 = vpack.c.b16 %v1778, %v1777
        %v1793 = vpack.c.b16 %v1780, %v1779
        %v1794 = vpack.c.b16 %v1782, %v1781
        %v1795 = vpack.c.b16 %v1784, %v1783
        %v1796 = vpack.c.b16 %v1786, %v1785
        %v1797 = vpack.c.b16 %v1788, %v1787
        %v1798 = vpack.c.b16 %v1790, %v1789
        %v1801 = vunpack.c.l.s4 1983009808
        %v1802 = vunpack.c.0.s8 %v1801
        %v1803 = vlaneseq
        %v1804 = vshrl.u32 %v1803, 7
        %v1805 = vsub.s32 %v1802, %v1804
        %v1806 = vrot.slane %v1774, %v1805
        %v1807 = vcombine.high %v1806, %v1806
        %v1809 = vsel %vm1369, %v1791, 0
        %v1812 = vsel %vm1369, %v1792, 0
        %v1815 = vsel %vm1369, %v1793, 0
        %v1818 = vsel %vm1369, %v1794, 0
        %v1821 = vsel %vm1369, %v1795, 0
        %v1824 = vsel %vm1369, %v1796, 0
        %v1827 = vsel %vm1369, %v1797, 0
        %v1830 = vsel %vm1369, %v1798, 0
        %v1833 = vsel %vm1394, %v1806, 0
        %v1836 = vsel %vm1394, %v1807, 0
        %1838 = vmatprep.subr.bf16.mxu0 0
        %1839 = vmatpush1.bf16.msra.mxu0 0
        %1840 = vmatprep.subr.bf16.mxu0 0
        %1841 = vmatpush1.bf16.msra.mxu0 0
        %1842 = vmatprep.subr.bf16.mxu0 0
        %1843 = vmatpush1.bf16.msra.mxu0 0
        %1844 = vmatprep.subr.bf16.mxu0 0
        %1845 = vmatpush1.bf16.msra.mxu0 0
        %1846 = vmatprep.subr.bf16.mxu0 0
        %1847 = vmatpush1.bf16.msra.mxu0 0
        %1848 = vmatprep.subr.bf16.mxu0 0
        %1849 = vmatpush1.bf16.msra.mxu0 0
        %1850 = vmatprep.subr.bf16.mxu0 0
        %1851 = vmatpush1.bf16.msra.mxu0 0
        %1852 = vmatprep.subr.bf16.mxu0 %v1836
        %1853 = vmatpush1.bf16.msra.mxu0 %v1833
        %1854 = vmatprep.subr.bf16.mxu0 0
        %1855 = vmatpush2.bf16.msra.mxu0 0
        %1856 = vmatprep.subr.bf16.mxu0 0
        %1857 = vmatpush2.bf16.msra.mxu0 0
        %1858 = vmatprep.subr.bf16.mxu0 0
        %1859 = vmatpush2.bf16.msra.mxu0 0
        %1860 = vmatprep.subr.bf16.mxu0 0
        %1861 = vmatpush2.bf16.msra.mxu0 0
        %1862 = vmatprep.subr.bf16.mxu0 0
        %1863 = vmatpush2.bf16.msra.mxu0 0
        %1864 = vmatprep.subr.bf16.mxu0 0
        %1865 = vmatpush2.bf16.msra.mxu0 0
        %1866 = vmatprep.subr.bf16.mxu0 0
        %1867 = vmatpush2.bf16.msra.mxu0 0
        %1868 = vmatprep.subr.bf16.mxu0 0
        %1869 = vmatpush2.bf16.msra.mxu0 0
        %1870 = vmatprep.mubr.bf16.mxu0 0
        %1871 = vmatmul.mubr.bf16.gmra.mxu0 %v1809
        %v1872 = vpop.f32.mrf.mxu0
        %v1873 = vadd.f32 0.0, %v1872
        %v1874 = vpop.f32.mrf.mxu0
        %v1875 = vadd.f32 0.0, %v1874
        %v1876 = vpop.f32.mrf.mxu0
        %v1877 = vadd.f32 0.0, %v1876
        %v1878 = vpop.f32.mrf.mxu0
        %v1879 = vadd.f32 0.0, %v1878
        %1880 = vmatprep.mubr.bf16.mxu0 0
        %1881 = vmatmul.mubr.bf16.gmra.mxu0 %v1812
        %v1882 = vpop.f32.mrf.mxu0
        %v1883 = vadd.f32 0.0, %v1882
        %v1884 = vpop.f32.mrf.mxu0
        %v1885 = vadd.f32 0.0, %v1884
        %v1886 = vpop.f32.mrf.mxu0
        %v1887 = vadd.f32 0.0, %v1886
        %v1888 = vpop.f32.mrf.mxu0
        %v1889 = vadd.f32 0.0, %v1888
        %1890 = vmatprep.mubr.bf16.mxu0 0
        %1891 = vmatmul.mubr.bf16.gmra.mxu0 %v1815
        %v1892 = vpop.f32.mrf.mxu0
        %v1893 = vadd.f32 0.0, %v1892
        %v1894 = vpop.f32.mrf.mxu0
        %v1895 = vadd.f32 0.0, %v1894
        %v1896 = vpop.f32.mrf.mxu0
        %v1897 = vadd.f32 0.0, %v1896
        %v1898 = vpop.f32.mrf.mxu0
        %v1899 = vadd.f32 0.0, %v1898
        %1900 = vmatprep.mubr.bf16.mxu0 0
        %1901 = vmatmul.mubr.bf16.gmra.mxu0 %v1818
        %v1902 = vpop.f32.mrf.mxu0
        %v1903 = vadd.f32 0.0, %v1902
        %v1904 = vpop.f32.mrf.mxu0
        %v1905 = vadd.f32 0.0, %v1904
        %v1906 = vpop.f32.mrf.mxu0
        %v1907 = vadd.f32 0.0, %v1906
        %v1908 = vpop.f32.mrf.mxu0
        %v1909 = vadd.f32 0.0, %v1908
        %1910 = vmatprep.mubr.bf16.mxu0 0
        %1911 = vmatmul.mubr.bf16.gmra.mxu0 %v1821
        %v1912 = vpop.f32.mrf.mxu0
        %v1913 = vadd.f32 0.0, %v1912
        %v1914 = vpop.f32.mrf.mxu0
        %v1915 = vadd.f32 0.0, %v1914
        %v1916 = vpop.f32.mrf.mxu0
        %v1917 = vadd.f32 0.0, %v1916
        %v1918 = vpop.f32.mrf.mxu0
        %v1919 = vadd.f32 0.0, %v1918
        %1920 = vmatprep.mubr.bf16.mxu0 0
        %1921 = vmatmul.mubr.bf16.gmra.mxu0 %v1824
        %v1922 = vpop.f32.mrf.mxu0
        %v1923 = vadd.f32 0.0, %v1922
        %v1924 = vpop.f32.mrf.mxu0
        %v1925 = vadd.f32 0.0, %v1924
        %v1926 = vpop.f32.mrf.mxu0
        %v1927 = vadd.f32 0.0, %v1926
        %v1928 = vpop.f32.mrf.mxu0
        %v1929 = vadd.f32 0.0, %v1928
        %1930 = vmatprep.mubr.bf16.mxu0 0
        %1931 = vmatmul.mubr.bf16.gmra.mxu0 %v1827
        %v1932 = vpop.f32.mrf.mxu0
        %v1933 = vadd.f32 0.0, %v1932
        %v1934 = vpop.f32.mrf.mxu0
        %v1935 = vadd.f32 0.0, %v1934
        %v1936 = vpop.f32.mrf.mxu0
        %v1937 = vadd.f32 0.0, %v1936
        %v1938 = vpop.f32.mrf.mxu0
        %v1939 = vadd.f32 0.0, %v1938
        %1940 = vmatprep.mubr.bf16.mxu0 0
        %1941 = vmatmul.mubr.bf16.gmra.mxu0 %v1830
        %v1942 = vpop.f32.mrf.mxu0
        %v1943 = vadd.f32 0.0, %v1942
        %v1944 = vpop.f32.mrf.mxu0
        %v1945 = vadd.f32 0.0, %v1944
        %v1946 = vpop.f32.mrf.mxu0
        %v1947 = vadd.f32 0.0, %v1946
        %v1948 = vpop.f32.mrf.mxu0
        %v1949 = vadd.f32 0.0, %v1948
        %1950 = vdwg.mxu0
        %v1951 = vadd.f32 %v1628, %v1873
        %v1952 = vadd.f32 %v1630, %v1875
        %v1953 = vadd.f32 %v1632, %v1877
        %v1954 = vadd.f32 %v1634, %v1879
        %v1955 = vadd.f32 %v1638, %v1883
        %v1956 = vadd.f32 %v1640, %v1885
        %v1957 = vadd.f32 %v1642, %v1887
        %v1958 = vadd.f32 %v1644, %v1889
        %v1959 = vadd.f32 %v1648, %v1893
        %v1960 = vadd.f32 %v1650, %v1895
        %v1961 = vadd.f32 %v1652, %v1897
        %v1962 = vadd.f32 %v1654, %v1899
        %v1963 = vadd.f32 %v1658, %v1903
        %v1964 = vadd.f32 %v1660, %v1905
        %v1965 = vadd.f32 %v1662, %v1907
        %v1966 = vadd.f32 %v1664, %v1909
        %v1967 = vadd.f32 %v1668, %v1913
        %v1968 = vadd.f32 %v1670, %v1915
        %v1969 = vadd.f32 %v1672, %v1917
        %v1970 = vadd.f32 %v1674, %v1919
        %v1971 = vadd.f32 %v1678, %v1923
        %v1972 = vadd.f32 %v1680, %v1925
        %v1973 = vadd.f32 %v1682, %v1927
        %v1974 = vadd.f32 %v1684, %v1929
        %v1975 = vadd.f32 %v1688, %v1933
        %v1976 = vadd.f32 %v1690, %v1935
        %v1977 = vadd.f32 %v1692, %v1937
        %v1978 = vadd.f32 %v1694, %v1939
        %v1979 = vadd.f32 %v1698, %v1943
        %v1980 = vadd.f32 %v1700, %v1945
        %v1981 = vadd.f32 %v1702, %v1947
        %v1982 = vadd.f32 %v1704, %v1949
        %s1983 = scalar_lea.vmem %s1, 12
        %v1984 = vld [vmem:[%s1983] sm:$0xf]
        %v1987 = vunpack.c.l.b16 %v1132
        %v1988 = vunpack.c.l.b16 %v1133
        %v1989 = vpack.c.b16 %v1988, %v1987
        %v1992 = vunpack.c.l.s4 1983009808
        %v1993 = vunpack.c.0.s8 %v1992
        %v1994 = vlaneseq
        %v1995 = vshrl.u32 %v1994, 7
        %v1996 = vsub.s32 %v1993, %v1995
        %v1997 = vrot.slane %v1984, %v1996
        %v1998 = vcombine.high %v1997, %v1997
        %v2000 = vsel %vm1369, %v1989, 0
        %v2003 = vsel %vm1394, %v1997, 0
        %v2006 = vsel %vm1394, %v1998, 0
        %2008 = vmatprep.subr.bf16.mxu0 0
        %2009 = vmatpush1.bf16.msra.mxu0 0
        %2010 = vmatprep.subr.bf16.mxu0 0
        %2011 = vmatpush1.bf16.msra.mxu0 0
        %2012 = vmatprep.subr.bf16.mxu0 0
        %2013 = vmatpush1.bf16.msra.mxu0 0
        %2014 = vmatprep.subr.bf16.mxu0 0
        %2015 = vmatpush1.bf16.msra.mxu0 0
        %2016 = vmatprep.subr.bf16.mxu0 0
        %2017 = vmatpush1.bf16.msra.mxu0 0
        %2018 = vmatprep.subr.bf16.mxu0 0
        %2019 = vmatpush1.bf16.msra.mxu0 0
        %2020 = vmatprep.subr.bf16.mxu0 0
        %2021 = vmatpush1.bf16.msra.mxu0 0
        %2022 = vmatprep.subr.bf16.mxu0 %v2006
        %2023 = vmatpush1.bf16.msra.mxu0 %v2003
        %2024 = vmatprep.subr.bf16.mxu0 0
        %2025 = vmatpush2.bf16.msra.mxu0 0
        %2026 = vmatprep.subr.bf16.mxu0 0
        %2027 = vmatpush2.bf16.msra.mxu0 0
        %2028 = vmatprep.subr.bf16.mxu0 0
        %2029 = vmatpush2.bf16.msra.mxu0 0
        %2030 = vmatprep.subr.bf16.mxu0 0
        %2031 = vmatpush2.bf16.msra.mxu0 0
        %2032 = vmatprep.subr.bf16.mxu0 0
        %2033 = vmatpush2.bf16.msra.mxu0 0
        %2034 = vmatprep.subr.bf16.mxu0 0
        %2035 = vmatpush2.bf16.msra.mxu0 0
        %2036 = vmatprep.subr.bf16.mxu0 0
        %2037 = vmatpush2.bf16.msra.mxu0 0
        %2038 = vmatprep.subr.bf16.mxu0 0
        %2039 = vmatpush2.bf16.msra.mxu0 0
        %2040 = vmatprep.mubr.bf16.mxu0 0
        %2041 = vmatmul.mubr.bf16.gmra.mxu0 %v1567
        %v2042 = vpop.f32.mrf.mxu0
        %v2043 = vadd.f32 0.0, %v2042
        %v2044 = vpop.f32.mrf.mxu0
        %v2045 = vadd.f32 0.0, %v2044
        %v2046 = vpop.f32.mrf.mxu0
        %v2047 = vadd.f32 0.0, %v2046
        %v2048 = vpop.f32.mrf.mxu0
        %v2049 = vadd.f32 0.0, %v2048
        %2050 = vmatprep.mubr.bf16.mxu0 0
        %2051 = vmatmul.mubr.bf16.gmra.mxu0 %v1570
        %v2052 = vpop.f32.mrf.mxu0
        %v2053 = vadd.f32 0.0, %v2052
        %v2054 = vpop.f32.mrf.mxu0
        %v2055 = vadd.f32 0.0, %v2054
        %v2056 = vpop.f32.mrf.mxu0
        %v2057 = vadd.f32 0.0, %v2056
        %v2058 = vpop.f32.mrf.mxu0
        %v2059 = vadd.f32 0.0, %v2058
        %2060 = vmatprep.mubr.bf16.mxu0 0
        %2061 = vmatmul.mubr.bf16.gmra.mxu0 %v1573
        %v2062 = vpop.f32.mrf.mxu0
        %v2063 = vadd.f32 0.0, %v2062
        %v2064 = vpop.f32.mrf.mxu0
        %v2065 = vadd.f32 0.0, %v2064
        %v2066 = vpop.f32.mrf.mxu0
        %v2067 = vadd.f32 0.0, %v2066
        %v2068 = vpop.f32.mrf.mxu0
        %v2069 = vadd.f32 0.0, %v2068
        %2070 = vmatprep.mubr.bf16.mxu0 0
        %2071 = vmatmul.mubr.bf16.gmra.mxu0 %v1576
        %v2072 = vpop.f32.mrf.mxu0
        %v2073 = vadd.f32 0.0, %v2072
        %v2074 = vpop.f32.mrf.mxu0
        %v2075 = vadd.f32 0.0, %v2074
        %v2076 = vpop.f32.mrf.mxu0
        %v2077 = vadd.f32 0.0, %v2076
        %v2078 = vpop.f32.mrf.mxu0
        %v2079 = vadd.f32 0.0, %v2078
        %2080 = vmatprep.mubr.bf16.mxu0 0
        %2081 = vmatmul.mubr.bf16.gmra.mxu0 %v1579
        %v2082 = vpop.f32.mrf.mxu0
        %v2083 = vadd.f32 0.0, %v2082
        %v2084 = vpop.f32.mrf.mxu0
        %v2085 = vadd.f32 0.0, %v2084
        %v2086 = vpop.f32.mrf.mxu0
        %v2087 = vadd.f32 0.0, %v2086
        %v2088 = vpop.f32.mrf.mxu0
        %v2089 = vadd.f32 0.0, %v2088
        %2090 = vmatprep.mubr.bf16.mxu0 0
        %2091 = vmatmul.mubr.bf16.gmra.mxu0 %v1582
        %v2092 = vpop.f32.mrf.mxu0
        %v2093 = vadd.f32 0.0, %v2092
        %v2094 = vpop.f32.mrf.mxu0
        %v2095 = vadd.f32 0.0, %v2094
        %v2096 = vpop.f32.mrf.mxu0
        %v2097 = vadd.f32 0.0, %v2096
        %v2098 = vpop.f32.mrf.mxu0
        %v2099 = vadd.f32 0.0, %v2098
        %2100 = vmatprep.mubr.bf16.mxu0 0
        %2101 = vmatmul.mubr.bf16.gmra.mxu0 %v1585
        %v2102 = vpop.f32.mrf.mxu0
        %v2103 = vadd.f32 0.0, %v2102
        %v2104 = vpop.f32.mrf.mxu0
        %v2105 = vadd.f32 0.0, %v2104
        %v2106 = vpop.f32.mrf.mxu0
        %v2107 = vadd.f32 0.0, %v2106
        %v2108 = vpop.f32.mrf.mxu0
        %v2109 = vadd.f32 0.0, %v2108
        %2110 = vmatprep.mubr.bf16.mxu0 0
        %2111 = vmatmul.mubr.bf16.gmra.mxu0 %v2000
        %v2112 = vpop.f32.mrf.mxu0
        %v2113 = vadd.f32 0.0, %v2112
        %v2114 = vpop.f32.mrf.mxu0
        %v2115 = vadd.f32 0.0, %v2114
        %v2116 = vpop.f32.mrf.mxu0
        %v2117 = vadd.f32 0.0, %v2116
        %v2118 = vpop.f32.mrf.mxu0
        %v2119 = vadd.f32 0.0, %v2118
        %2120 = vdwg.mxu0
        %v2121 = vadd.f32 %v1951, %v2043
        %v2122 = vadd.f32 %v1952, %v2045
        %v2123 = vadd.f32 %v1953, %v2047
        %v2124 = vadd.f32 %v1954, %v2049
        %v2125 = vadd.f32 %v1955, %v2053
        %v2126 = vadd.f32 %v1956, %v2055
        %v2127 = vadd.f32 %v1957, %v2057
        %v2128 = vadd.f32 %v1958, %v2059
        %v2129 = vadd.f32 %v1959, %v2063
        %v2130 = vadd.f32 %v1960, %v2065
        %v2131 = vadd.f32 %v1961, %v2067
        %v2132 = vadd.f32 %v1962, %v2069
        %v2133 = vadd.f32 %v1963, %v2073
        %v2134 = vadd.f32 %v1964, %v2075
        %v2135 = vadd.f32 %v1965, %v2077
        %v2136 = vadd.f32 %v1966, %v2079
        %v2137 = vadd.f32 %v1967, %v2083
        %v2138 = vadd.f32 %v1968, %v2085
        %v2139 = vadd.f32 %v1969, %v2087
        %v2140 = vadd.f32 %v1970, %v2089
        %v2141 = vadd.f32 %v1971, %v2093
        %v2142 = vadd.f32 %v1972, %v2095
        %v2143 = vadd.f32 %v1973, %v2097
        %v2144 = vadd.f32 %v1974, %v2099
        %v2145 = vadd.f32 %v1975, %v2103
        %v2146 = vadd.f32 %v1976, %v2105
        %v2147 = vadd.f32 %v1977, %v2107
        %v2148 = vadd.f32 %v1978, %v2109
        %v2149 = vadd.f32 %v1979, %v2113
        %v2150 = vadd.f32 %v1980, %v2115
        %v2151 = vadd.f32 %v1981, %v2117
        %v2152 = vadd.f32 %v1982, %v2119
        %v2154 = vshrl.u32 %v1132, 16
        %v2156 = vrot.slane %v2154, 4
        %v2157 = vshll.u32 %v1132, 16
        %v2159 = vrot.slane %v2157, 5
        %v2160 = vor.u32 %v2156, %v2159
        %v2161 = vrot.slane %v2160, 4
        %v2163 = vshll.u32 %v1133, 16
        %v2165 = vrot.slane %v2163, 5
        %v2166 = vsel %vm1141, %v2161, %v2165
        %v2167 = vshrl.u32 %v1133, 16
        %v2169 = vrot.slane %v2167, 4
        %v2170 = vor.u32 %v2169, %v2165
        %v2171 = vrot.slane %v2170, 4
        %v2173 = vshll.u32 %v1134, 16
        %v2175 = vrot.slane %v2173, 5
        %v2176 = vsel %vm1141, %v2171, %v2175
        %s2177 = scalar_lea.vmem %s1, 16
        %v2178 = vld [vmem:[%s2177] sm:$0xf]
        %v2179 = vunpack.c.l.b16 %v2166
        %v2180 = vunpack.c.l.b16 %v2176
        %v2181 = vpack.c.b16 %v2180, %v2179
        %v2184 = vunpack.c.l.s4 1983009808
        %v2185 = vunpack.c.0.s8 %v2184
        %v2186 = vlaneseq
        %v2187 = vshrl.u32 %v2186, 7
        %v2188 = vsub.s32 %v2185, %v2187
        %v2189 = vrot.slane %v2178, %v2188
        %v2190 = vcombine.high %v2189, %v2189
        %v2192 = vsel %vm1369, %v2181, 0
        %v2195 = vsel %vm1394, %v2189, 0
        %v2198 = vsel %vm1394, %v2190, 0
        %2200 = vmatprep.subr.bf16.mxu0 0
        %2201 = vmatpush1.bf16.msra.mxu0 0
        %2202 = vmatprep.subr.bf16.mxu0 0
        %2203 = vmatpush1.bf16.msra.mxu0 0
        %2204 = vmatprep.subr.bf16.mxu0 0
        %2205 = vmatpush1.bf16.msra.mxu0 0
        %2206 = vmatprep.subr.bf16.mxu0 0
        %2207 = vmatpush1.bf16.msra.mxu0 0
        %2208 = vmatprep.subr.bf16.mxu0 0
        %2209 = vmatpush1.bf16.msra.mxu0 0
        %2210 = vmatprep.subr.bf16.mxu0 0
        %2211 = vmatpush1.bf16.msra.mxu0 0
        %2212 = vmatprep.subr.bf16.mxu0 0
        %2213 = vmatpush1.bf16.msra.mxu0 0
        %2214 = vmatprep.subr.bf16.mxu0 %v2198
        %2215 = vmatpush1.bf16.msra.mxu0 %v2195
        %2216 = vmatprep.subr.bf16.mxu0 0
        %2217 = vmatpush2.bf16.msra.mxu0 0
        %2218 = vmatprep.subr.bf16.mxu0 0
        %2219 = vmatpush2.bf16.msra.mxu0 0
        %2220 = vmatprep.subr.bf16.mxu0 0
        %2221 = vmatpush2.bf16.msra.mxu0 0
        %2222 = vmatprep.subr.bf16.mxu0 0
        %2223 = vmatpush2.bf16.msra.mxu0 0
        %2224 = vmatprep.subr.bf16.mxu0 0
        %2225 = vmatpush2.bf16.msra.mxu0 0
        %2226 = vmatprep.subr.bf16.mxu0 0
        %2227 = vmatpush2.bf16.msra.mxu0 0
        %2228 = vmatprep.subr.bf16.mxu0 0
        %2229 = vmatpush2.bf16.msra.mxu0 0
        %2230 = vmatprep.subr.bf16.mxu0 0
        %2231 = vmatpush2.bf16.msra.mxu0 0
        %2232 = vmatprep.mubr.bf16.mxu0 0
        %2233 = vmatmul.mubr.bf16.gmra.mxu0 %v1374
        %v2234 = vpop.f32.mrf.mxu0
        %v2235 = vadd.f32 0.0, %v2234
        %v2236 = vpop.f32.mrf.mxu0
        %v2237 = vadd.f32 0.0, %v2236
        %v2238 = vpop.f32.mrf.mxu0
        %v2239 = vadd.f32 0.0, %v2238
        %v2240 = vpop.f32.mrf.mxu0
        %v2241 = vadd.f32 0.0, %v2240
        %2242 = vmatprep.mubr.bf16.mxu0 0
        %2243 = vmatmul.mubr.bf16.gmra.mxu0 %v1377
        %v2244 = vpop.f32.mrf.mxu0
        %v2245 = vadd.f32 0.0, %v2244
        %v2246 = vpop.f32.mrf.mxu0
        %v2247 = vadd.f32 0.0, %v2246
        %v2248 = vpop.f32.mrf.mxu0
        %v2249 = vadd.f32 0.0, %v2248
        %v2250 = vpop.f32.mrf.mxu0
        %v2251 = vadd.f32 0.0, %v2250
        %2252 = vmatprep.mubr.bf16.mxu0 0
        %2253 = vmatmul.mubr.bf16.gmra.mxu0 %v1380
        %v2254 = vpop.f32.mrf.mxu0
        %v2255 = vadd.f32 0.0, %v2254
        %v2256 = vpop.f32.mrf.mxu0
        %v2257 = vadd.f32 0.0, %v2256
        %v2258 = vpop.f32.mrf.mxu0
        %v2259 = vadd.f32 0.0, %v2258
        %v2260 = vpop.f32.mrf.mxu0
        %v2261 = vadd.f32 0.0, %v2260
        %2262 = vmatprep.mubr.bf16.mxu0 0
        %2263 = vmatmul.mubr.bf16.gmra.mxu0 %v1383
        %v2264 = vpop.f32.mrf.mxu0
        %v2265 = vadd.f32 0.0, %v2264
        %v2266 = vpop.f32.mrf.mxu0
        %v2267 = vadd.f32 0.0, %v2266
        %v2268 = vpop.f32.mrf.mxu0
        %v2269 = vadd.f32 0.0, %v2268
        %v2270 = vpop.f32.mrf.mxu0
        %v2271 = vadd.f32 0.0, %v2270
        %2272 = vmatprep.mubr.bf16.mxu0 0
        %2273 = vmatmul.mubr.bf16.gmra.mxu0 %v1386
        %v2274 = vpop.f32.mrf.mxu0
        %v2275 = vadd.f32 0.0, %v2274
        %v2276 = vpop.f32.mrf.mxu0
        %v2277 = vadd.f32 0.0, %v2276
        %v2278 = vpop.f32.mrf.mxu0
        %v2279 = vadd.f32 0.0, %v2278
        %v2280 = vpop.f32.mrf.mxu0
        %v2281 = vadd.f32 0.0, %v2280
        %2282 = vmatprep.mubr.bf16.mxu0 0
        %2283 = vmatmul.mubr.bf16.gmra.mxu0 %v1389
        %v2284 = vpop.f32.mrf.mxu0
        %v2285 = vadd.f32 0.0, %v2284
        %v2286 = vpop.f32.mrf.mxu0
        %v2287 = vadd.f32 0.0, %v2286
        %v2288 = vpop.f32.mrf.mxu0
        %v2289 = vadd.f32 0.0, %v2288
        %v2290 = vpop.f32.mrf.mxu0
        %v2291 = vadd.f32 0.0, %v2290
        %2292 = vmatprep.mubr.bf16.mxu0 0
        %2293 = vmatmul.mubr.bf16.gmra.mxu0 %v1392
        %v2294 = vpop.f32.mrf.mxu0
        %v2295 = vadd.f32 0.0, %v2294
        %v2296 = vpop.f32.mrf.mxu0
        %v2297 = vadd.f32 0.0, %v2296
        %v2298 = vpop.f32.mrf.mxu0
        %v2299 = vadd.f32 0.0, %v2298
        %v2300 = vpop.f32.mrf.mxu0
        %v2301 = vadd.f32 0.0, %v2300
        %2302 = vmatprep.mubr.bf16.mxu0 0
        %2303 = vmatmul.mubr.bf16.gmra.mxu0 %v2192
        %v2304 = vpop.f32.mrf.mxu0
        %v2305 = vadd.f32 0.0, %v2304
        %v2306 = vpop.f32.mrf.mxu0
        %v2307 = vadd.f32 0.0, %v2306
        %v2308 = vpop.f32.mrf.mxu0
        %v2309 = vadd.f32 0.0, %v2308
        %v2310 = vpop.f32.mrf.mxu0
        %v2311 = vadd.f32 0.0, %v2310
        %2312 = vdwg.mxu0
        %v2313 = vadd.f32 %v2121, %v2235
        %v2314 = vadd.f32 %v2122, %v2237
        %v2315 = vadd.f32 %v2123, %v2239
        %v2316 = vadd.f32 %v2124, %v2241
        %v2317 = vadd.f32 %v2125, %v2245
        %v2318 = vadd.f32 %v2126, %v2247
        %v2319 = vadd.f32 %v2127, %v2249
        %v2320 = vadd.f32 %v2128, %v2251
        %v2321 = vadd.f32 %v2129, %v2255
        %v2322 = vadd.f32 %v2130, %v2257
        %v2323 = vadd.f32 %v2131, %v2259
        %v2324 = vadd.f32 %v2132, %v2261
        %v2325 = vadd.f32 %v2133, %v2265
        %v2326 = vadd.f32 %v2134, %v2267
        %v2327 = vadd.f32 %v2135, %v2269
        %v2328 = vadd.f32 %v2136, %v2271
        %v2329 = vadd.f32 %v2137, %v2275
        %v2330 = vadd.f32 %v2138, %v2277
        %v2331 = vadd.f32 %v2139, %v2279
        %v2332 = vadd.f32 %v2140, %v2281
        %v2333 = vadd.f32 %v2141, %v2285
        %v2334 = vadd.f32 %v2142, %v2287
        %v2335 = vadd.f32 %v2143, %v2289
        %v2336 = vadd.f32 %v2144, %v2291
        %v2337 = vadd.f32 %v2145, %v2295
        %v2338 = vadd.f32 %v2146, %v2297
        %v2339 = vadd.f32 %v2147, %v2299
        %v2340 = vadd.f32 %v2148, %v2301
        %v2341 = vadd.f32 %v2149, %v2305
        %v2342 = vadd.f32 %v2150, %v2307
        %v2343 = vadd.f32 %v2151, %v2309
        %v2344 = vadd.f32 %v2152, %v2311
        %v2346 = vrot.slane %v1132, 5
        %v2347 = vrot.slane %v2346, 4
        %v2348 = vrot.slane %v1133, 5
        %v2349 = vsel %vm1716, %v2347, %v2348
        %v2350 = vrot.slane %v2348, 4
        %v2351 = vrot.slane %v1134, 5
        %v2352 = vsel %vm1716, %v2350, %v2351
        %s2353 = scalar_lea.vmem %s1, 20
        %v2354 = vld [vmem:[%s2353] sm:$0xf]
        %v2355 = vunpack.c.l.b16 %v2349
        %v2356 = vunpack.c.l.b16 %v2352
        %v2357 = vpack.c.b16 %v2356, %v2355
        %v2360 = vunpack.c.l.s4 1983009808
        %v2361 = vunpack.c.0.s8 %v2360
        %v2362 = vlaneseq
        %v2363 = vshrl.u32 %v2362, 7
        %v2364 = vsub.s32 %v2361, %v2363
        %v2365 = vrot.slane %v2354, %v2364
        %v2366 = vcombine.high %v2365, %v2365
        %v2368 = vsel %vm1369, %v2357, 0
        %v2371 = vsel %vm1394, %v2365, 0
        %v2374 = vsel %vm1394, %v2366, 0
        %2376 = vmatprep.subr.bf16.mxu0 0
        %2377 = vmatpush1.bf16.msra.mxu0 0
        %2378 = vmatprep.subr.bf16.mxu0 0
        %2379 = vmatpush1.bf16.msra.mxu0 0
        %2380 = vmatprep.subr.bf16.mxu0 0
        %2381 = vmatpush1.bf16.msra.mxu0 0
        %2382 = vmatprep.subr.bf16.mxu0 0
        %2383 = vmatpush1.bf16.msra.mxu0 0
        %2384 = vmatprep.subr.bf16.mxu0 0
        %2385 = vmatpush1.bf16.msra.mxu0 0
        %2386 = vmatprep.subr.bf16.mxu0 0
        %2387 = vmatpush1.bf16.msra.mxu0 0
        %2388 = vmatprep.subr.bf16.mxu0 0
        %2389 = vmatpush1.bf16.msra.mxu0 0
        %2390 = vmatprep.subr.bf16.mxu0 %v2374
        %2391 = vmatpush1.bf16.msra.mxu0 %v2371
        %2392 = vmatprep.subr.bf16.mxu0 0
        %2393 = vmatpush2.bf16.msra.mxu0 0
        %2394 = vmatprep.subr.bf16.mxu0 0
        %2395 = vmatpush2.bf16.msra.mxu0 0
        %2396 = vmatprep.subr.bf16.mxu0 0
        %2397 = vmatpush2.bf16.msra.mxu0 0
        %2398 = vmatprep.subr.bf16.mxu0 0
        %2399 = vmatpush2.bf16.msra.mxu0 0
        %2400 = vmatprep.subr.bf16.mxu0 0
        %2401 = vmatpush2.bf16.msra.mxu0 0
        %2402 = vmatprep.subr.bf16.mxu0 0
        %2403 = vmatpush2.bf16.msra.mxu0 0
        %2404 = vmatprep.subr.bf16.mxu0 0
        %2405 = vmatpush2.bf16.msra.mxu0 0
        %2406 = vmatprep.subr.bf16.mxu0 0
        %2407 = vmatpush2.bf16.msra.mxu0 0
        %2408 = vmatprep.mubr.bf16.mxu0 0
        %2409 = vmatmul.mubr.bf16.gmra.mxu0 %v1812
        %v2410 = vpop.f32.mrf.mxu0
        %v2411 = vadd.f32 0.0, %v2410
        %v2412 = vpop.f32.mrf.mxu0
        %v2413 = vadd.f32 0.0, %v2412
        %v2414 = vpop.f32.mrf.mxu0
        %v2415 = vadd.f32 0.0, %v2414
        %v2416 = vpop.f32.mrf.mxu0
        %v2417 = vadd.f32 0.0, %v2416
        %2418 = vmatprep.mubr.bf16.mxu0 0
        %2419 = vmatmul.mubr.bf16.gmra.mxu0 %v1815
        %v2420 = vpop.f32.mrf.mxu0
        %v2421 = vadd.f32 0.0, %v2420
        %v2422 = vpop.f32.mrf.mxu0
        %v2423 = vadd.f32 0.0, %v2422
        %v2424 = vpop.f32.mrf.mxu0
        %v2425 = vadd.f32 0.0, %v2424
        %v2426 = vpop.f32.mrf.mxu0
        %v2427 = vadd.f32 0.0, %v2426
        %2428 = vmatprep.mubr.bf16.mxu0 0
        %2429 = vmatmul.mubr.bf16.gmra.mxu0 %v1818
        %v2430 = vpop.f32.mrf.mxu0
        %v2431 = vadd.f32 0.0, %v2430
        %v2432 = vpop.f32.mrf.mxu0
        %v2433 = vadd.f32 0.0, %v2432
        %v2434 = vpop.f32.mrf.mxu0
        %v2435 = vadd.f32 0.0, %v2434
        %v2436 = vpop.f32.mrf.mxu0
        %v2437 = vadd.f32 0.0, %v2436
        %2438 = vmatprep.mubr.bf16.mxu0 0
        %2439 = vmatmul.mubr.bf16.gmra.mxu0 %v1821
        %v2440 = vpop.f32.mrf.mxu0
        %v2441 = vadd.f32 0.0, %v2440
        %v2442 = vpop.f32.mrf.mxu0
        %v2443 = vadd.f32 0.0, %v2442
        %v2444 = vpop.f32.mrf.mxu0
        %v2445 = vadd.f32 0.0, %v2444
        %v2446 = vpop.f32.mrf.mxu0
        %v2447 = vadd.f32 0.0, %v2446
        %2448 = vmatprep.mubr.bf16.mxu0 0
        %2449 = vmatmul.mubr.bf16.gmra.mxu0 %v1824
        %v2450 = vpop.f32.mrf.mxu0
        %v2451 = vadd.f32 0.0, %v2450
        %v2452 = vpop.f32.mrf.mxu0
        %v2453 = vadd.f32 0.0, %v2452
        %v2454 = vpop.f32.mrf.mxu0
        %v2455 = vadd.f32 0.0, %v2454
        %v2456 = vpop.f32.mrf.mxu0
        %v2457 = vadd.f32 0.0, %v2456
        %2458 = vmatprep.mubr.bf16.mxu0 0
        %2459 = vmatmul.mubr.bf16.gmra.mxu0 %v1827
        %v2460 = vpop.f32.mrf.mxu0
        %v2461 = vadd.f32 0.0, %v2460
        %v2462 = vpop.f32.mrf.mxu0
        %v2463 = vadd.f32 0.0, %v2462
        %v2464 = vpop.f32.mrf.mxu0
        %v2465 = vadd.f32 0.0, %v2464
        %v2466 = vpop.f32.mrf.mxu0
        %v2467 = vadd.f32 0.0, %v2466
        %2468 = vmatprep.mubr.bf16.mxu0 0
        %2469 = vmatmul.mubr.bf16.gmra.mxu0 %v1830
        %v2470 = vpop.f32.mrf.mxu0
        %v2471 = vadd.f32 0.0, %v2470
        %v2472 = vpop.f32.mrf.mxu0
        %v2473 = vadd.f32 0.0, %v2472
        %v2474 = vpop.f32.mrf.mxu0
        %v2475 = vadd.f32 0.0, %v2474
        %v2476 = vpop.f32.mrf.mxu0
        %v2477 = vadd.f32 0.0, %v2476
        %2478 = vmatprep.mubr.bf16.mxu0 0
        %2479 = vmatmul.mubr.bf16.gmra.mxu0 %v2368
        %v2480 = vpop.f32.mrf.mxu0
        %v2481 = vadd.f32 0.0, %v2480
        %v2482 = vpop.f32.mrf.mxu0
        %v2483 = vadd.f32 0.0, %v2482
        %v2484 = vpop.f32.mrf.mxu0
        %v2485 = vadd.f32 0.0, %v2484
        %v2486 = vpop.f32.mrf.mxu0
        %v2487 = vadd.f32 0.0, %v2486
        %2488 = vdwg.mxu0
        %v2489 = vadd.f32 %v2313, %v2411
        %v2490 = vadd.f32 %v2314, %v2413
        %v2491 = vadd.f32 %v2315, %v2415
        %v2492 = vadd.f32 %v2316, %v2417
        %v2493 = vadd.f32 %v2317, %v2421
        %v2494 = vadd.f32 %v2318, %v2423
        %v2495 = vadd.f32 %v2319, %v2425
        %v2496 = vadd.f32 %v2320, %v2427
        %v2497 = vadd.f32 %v2321, %v2431
        %v2498 = vadd.f32 %v2322, %v2433
        %v2499 = vadd.f32 %v2323, %v2435
        %v2500 = vadd.f32 %v2324, %v2437
        %v2501 = vadd.f32 %v2325, %v2441
        %v2502 = vadd.f32 %v2326, %v2443
        %v2503 = vadd.f32 %v2327, %v2445
        %v2504 = vadd.f32 %v2328, %v2447
        %v2505 = vadd.f32 %v2329, %v2451
        %v2506 = vadd.f32 %v2330, %v2453
        %v2507 = vadd.f32 %v2331, %v2455
        %v2508 = vadd.f32 %v2332, %v2457
        %v2509 = vadd.f32 %v2333, %v2461
        %v2510 = vadd.f32 %v2334, %v2463
        %v2511 = vadd.f32 %v2335, %v2465
        %v2512 = vadd.f32 %v2336, %v2467
        %v2513 = vadd.f32 %v2337, %v2471
        %v2514 = vadd.f32 %v2338, %v2473
        %v2515 = vadd.f32 %v2339, %v2475
        %v2516 = vadd.f32 %v2340, %v2477
        %v2517 = vadd.f32 %v2341, %v2481
        %v2518 = vadd.f32 %v2342, %v2483
        %v2519 = vadd.f32 %v2343, %v2485
        %v2520 = vadd.f32 %v2344, %v2487
        %s2521 = scalar_lea.vmem %s1, 24
        %v2522 = vld [vmem:[%s2521] sm:$0xf]
        %v2525 = vunpack.c.l.b16 %v1135
        %v2526 = vunpack.c.l.b16 %v1136
        %v2527 = vpack.c.b16 %v2526, %v2525
        %v2530 = vunpack.c.l.s4 1983009808
        %v2531 = vunpack.c.0.s8 %v2530
        %v2532 = vlaneseq
        %v2533 = vshrl.u32 %v2532, 7
        %v2534 = vsub.s32 %v2531, %v2533
        %v2535 = vrot.slane %v2522, %v2534
        %v2536 = vcombine.high %v2535, %v2535
        %v2538 = vsel %vm1369, %v2527, 0
        %v2541 = vsel %vm1394, %v2535, 0
        %v2544 = vsel %vm1394, %v2536, 0
        %2546 = vmatprep.subr.bf16.mxu0 0
        %2547 = vmatpush1.bf16.msra.mxu0 0
        %2548 = vmatprep.subr.bf16.mxu0 0
        %2549 = vmatpush1.bf16.msra.mxu0 0
        %2550 = vmatprep.subr.bf16.mxu0 0
        %2551 = vmatpush1.bf16.msra.mxu0 0
        %2552 = vmatprep.subr.bf16.mxu0 0
        %2553 = vmatpush1.bf16.msra.mxu0 0
        %2554 = vmatprep.subr.bf16.mxu0 0
        %2555 = vmatpush1.bf16.msra.mxu0 0
        %2556 = vmatprep.subr.bf16.mxu0 0
        %2557 = vmatpush1.bf16.msra.mxu0 0
        %2558 = vmatprep.subr.bf16.mxu0 0
        %2559 = vmatpush1.bf16.msra.mxu0 0
        %2560 = vmatprep.subr.bf16.mxu0 %v2544
        %2561 = vmatpush1.bf16.msra.mxu0 %v2541
        %2562 = vmatprep.subr.bf16.mxu0 0
        %2563 = vmatpush2.bf16.msra.mxu0 0
        %2564 = vmatprep.subr.bf16.mxu0 0
        %2565 = vmatpush2.bf16.msra.mxu0 0
        %2566 = vmatprep.subr.bf16.mxu0 0
        %2567 = vmatpush2.bf16.msra.mxu0 0
        %2568 = vmatprep.subr.bf16.mxu0 0
        %2569 = vmatpush2.bf16.msra.mxu0 0
        %2570 = vmatprep.subr.bf16.mxu0 0
        %2571 = vmatpush2.bf16.msra.mxu0 0
        %2572 = vmatprep.subr.bf16.mxu0 0
        %2573 = vmatpush2.bf16.msra.mxu0 0
        %2574 = vmatprep.subr.bf16.mxu0 0
        %2575 = vmatpush2.bf16.msra.mxu0 0
        %2576 = vmatprep.subr.bf16.mxu0 0
        %2577 = vmatpush2.bf16.msra.mxu0 0
        %2578 = vmatprep.mubr.bf16.mxu0 0
        %2579 = vmatmul.mubr.bf16.gmra.mxu0 %v1570
        %v2580 = vpop.f32.mrf.mxu0
        %v2581 = vadd.f32 0.0, %v2580
        %v2582 = vpop.f32.mrf.mxu0
        %v2583 = vadd.f32 0.0, %v2582
        %v2584 = vpop.f32.mrf.mxu0
        %v2585 = vadd.f32 0.0, %v2584
        %v2586 = vpop.f32.mrf.mxu0
        %v2587 = vadd.f32 0.0, %v2586
        %2588 = vmatprep.mubr.bf16.mxu0 0
        %2589 = vmatmul.mubr.bf16.gmra.mxu0 %v1573
        %v2590 = vpop.f32.mrf.mxu0
        %v2591 = vadd.f32 0.0, %v2590
        %v2592 = vpop.f32.mrf.mxu0
        %v2593 = vadd.f32 0.0, %v2592
        %v2594 = vpop.f32.mrf.mxu0
        %v2595 = vadd.f32 0.0, %v2594
        %v2596 = vpop.f32.mrf.mxu0
        %v2597 = vadd.f32 0.0, %v2596
        %2598 = vmatprep.mubr.bf16.mxu0 0
        %2599 = vmatmul.mubr.bf16.gmra.mxu0 %v1576
        %v2600 = vpop.f32.mrf.mxu0
        %v2601 = vadd.f32 0.0, %v2600
        %v2602 = vpop.f32.mrf.mxu0
        %v2603 = vadd.f32 0.0, %v2602
        %v2604 = vpop.f32.mrf.mxu0
        %v2605 = vadd.f32 0.0, %v2604
        %v2606 = vpop.f32.mrf.mxu0
        %v2607 = vadd.f32 0.0, %v2606
        %2608 = vmatprep.mubr.bf16.mxu0 0
        %2609 = vmatmul.mubr.bf16.gmra.mxu0 %v1579
        %v2610 = vpop.f32.mrf.mxu0
        %v2611 = vadd.f32 0.0, %v2610
        %v2612 = vpop.f32.mrf.mxu0
        %v2613 = vadd.f32 0.0, %v2612
        %v2614 = vpop.f32.mrf.mxu0
        %v2615 = vadd.f32 0.0, %v2614
        %v2616 = vpop.f32.mrf.mxu0
        %v2617 = vadd.f32 0.0, %v2616
        %2618 = vmatprep.mubr.bf16.mxu0 0
        %2619 = vmatmul.mubr.bf16.gmra.mxu0 %v1582
        %v2620 = vpop.f32.mrf.mxu0
        %v2621 = vadd.f32 0.0, %v2620
        %v2622 = vpop.f32.mrf.mxu0
        %v2623 = vadd.f32 0.0, %v2622
        %v2624 = vpop.f32.mrf.mxu0
        %v2625 = vadd.f32 0.0, %v2624
        %v2626 = vpop.f32.mrf.mxu0
        %v2627 = vadd.f32 0.0, %v2626
        %2628 = vmatprep.mubr.bf16.mxu0 0
        %2629 = vmatmul.mubr.bf16.gmra.mxu0 %v1585
        %v2630 = vpop.f32.mrf.mxu0
        %v2631 = vadd.f32 0.0, %v2630
        %v2632 = vpop.f32.mrf.mxu0
        %v2633 = vadd.f32 0.0, %v2632
        %v2634 = vpop.f32.mrf.mxu0
        %v2635 = vadd.f32 0.0, %v2634
        %v2636 = vpop.f32.mrf.mxu0
        %v2637 = vadd.f32 0.0, %v2636
        %2638 = vmatprep.mubr.bf16.mxu0 0
        %2639 = vmatmul.mubr.bf16.gmra.mxu0 %v2000
        %v2640 = vpop.f32.mrf.mxu0
        %v2641 = vadd.f32 0.0, %v2640
        %v2642 = vpop.f32.mrf.mxu0
        %v2643 = vadd.f32 0.0, %v2642
        %v2644 = vpop.f32.mrf.mxu0
        %v2645 = vadd.f32 0.0, %v2644
        %v2646 = vpop.f32.mrf.mxu0
        %v2647 = vadd.f32 0.0, %v2646
        %2648 = vmatprep.mubr.bf16.mxu0 0
        %2649 = vmatmul.mubr.bf16.gmra.mxu0 %v2538
        %v2650 = vpop.f32.mrf.mxu0
        %v2651 = vadd.f32 0.0, %v2650
        %v2652 = vpop.f32.mrf.mxu0
        %v2653 = vadd.f32 0.0, %v2652
        %v2654 = vpop.f32.mrf.mxu0
        %v2655 = vadd.f32 0.0, %v2654
        %v2656 = vpop.f32.mrf.mxu0
        %v2657 = vadd.f32 0.0, %v2656
        %2658 = vdwg.mxu0
        %v2659 = vadd.f32 %v2489, %v2581
        %v2660 = vadd.f32 %v2490, %v2583
        %v2661 = vadd.f32 %v2491, %v2585
        %v2662 = vadd.f32 %v2492, %v2587
        %v2663 = vadd.f32 %v2493, %v2591
        %v2664 = vadd.f32 %v2494, %v2593
        %v2665 = vadd.f32 %v2495, %v2595
        %v2666 = vadd.f32 %v2496, %v2597
        %v2667 = vadd.f32 %v2497, %v2601
        %v2668 = vadd.f32 %v2498, %v2603
        %v2669 = vadd.f32 %v2499, %v2605
        %v2670 = vadd.f32 %v2500, %v2607
        %v2671 = vadd.f32 %v2501, %v2611
        %v2672 = vadd.f32 %v2502, %v2613
        %v2673 = vadd.f32 %v2503, %v2615
        %v2674 = vadd.f32 %v2504, %v2617
        %v2675 = vadd.f32 %v2505, %v2621
        %v2676 = vadd.f32 %v2506, %v2623
        %v2677 = vadd.f32 %v2507, %v2625
        %v2678 = vadd.f32 %v2508, %v2627
        %v2679 = vadd.f32 %v2509, %v2631
        %v2680 = vadd.f32 %v2510, %v2633
        %v2681 = vadd.f32 %v2511, %v2635
        %v2682 = vadd.f32 %v2512, %v2637
        %v2683 = vadd.f32 %v2513, %v2641
        %v2684 = vadd.f32 %v2514, %v2643
        %v2685 = vadd.f32 %v2515, %v2645
        %v2686 = vadd.f32 %v2516, %v2647
        %v2687 = vadd.f32 %v2517, %v2651
        %v2688 = vadd.f32 %v2518, %v2653
        %v2689 = vadd.f32 %v2519, %v2655
        %v2690 = vadd.f32 %v2520, %v2657
        %v2692 = vshrl.u32 %v1135, 16
        %v2694 = vrot.slane %v2692, 4
        %v2695 = vshll.u32 %v1135, 16
        %v2697 = vrot.slane %v2695, 5
        %v2698 = vor.u32 %v2694, %v2697
        %v2699 = vrot.slane %v2698, 4
        %v2701 = vshll.u32 %v1136, 16
        %v2703 = vrot.slane %v2701, 5
        %v2704 = vsel %vm1141, %v2699, %v2703
        %v2705 = vshrl.u32 %v1136, 16
        %v2707 = vrot.slane %v2705, 4
        %v2708 = vor.u32 %v2707, %v2703
        %v2709 = vrot.slane %v2708, 4
        %v2711 = vshll.u32 %v1137, 16
        %v2713 = vrot.slane %v2711, 5
        %v2714 = vsel %vm1141, %v2709, %v2713
        %s2715 = scalar_lea.vmem %s1, 28
        %v2716 = vld [vmem:[%s2715] sm:$0xf]
        %v2717 = vunpack.c.l.b16 %v2704
        %v2718 = vunpack.c.l.b16 %v2714
        %v2719 = vpack.c.b16 %v2718, %v2717
        %v2722 = vunpack.c.l.s4 1983009808
        %v2723 = vunpack.c.0.s8 %v2722
        %v2724 = vlaneseq
        %v2725 = vshrl.u32 %v2724, 7
        %v2726 = vsub.s32 %v2723, %v2725
        %v2727 = vrot.slane %v2716, %v2726
        %v2728 = vcombine.high %v2727, %v2727
        %v2730 = vsel %vm1369, %v2719, 0
        %v2733 = vsel %vm1394, %v2727, 0
        %v2736 = vsel %vm1394, %v2728, 0
        %2738 = vmatprep.subr.bf16.mxu0 0
        %2739 = vmatpush1.bf16.msra.mxu0 0
        %2740 = vmatprep.subr.bf16.mxu0 0
        %2741 = vmatpush1.bf16.msra.mxu0 0
        %2742 = vmatprep.subr.bf16.mxu0 0
        %2743 = vmatpush1.bf16.msra.mxu0 0
        %2744 = vmatprep.subr.bf16.mxu0 0
        %2745 = vmatpush1.bf16.msra.mxu0 0
        %2746 = vmatprep.subr.bf16.mxu0 0
        %2747 = vmatpush1.bf16.msra.mxu0 0
        %2748 = vmatprep.subr.bf16.mxu0 0
        %2749 = vmatpush1.bf16.msra.mxu0 0
        %2750 = vmatprep.subr.bf16.mxu0 0
        %2751 = vmatpush1.bf16.msra.mxu0 0
        %2752 = vmatprep.subr.bf16.mxu0 %v2736
        %2753 = vmatpush1.bf16.msra.mxu0 %v2733
        %2754 = vmatprep.subr.bf16.mxu0 0
        %2755 = vmatpush2.bf16.msra.mxu0 0
        %2756 = vmatprep.subr.bf16.mxu0 0
        %2757 = vmatpush2.bf16.msra.mxu0 0
        %2758 = vmatprep.subr.bf16.mxu0 0
        %2759 = vmatpush2.bf16.msra.mxu0 0
        %2760 = vmatprep.subr.bf16.mxu0 0
        %2761 = vmatpush2.bf16.msra.mxu0 0
        %2762 = vmatprep.subr.bf16.mxu0 0
        %2763 = vmatpush2.bf16.msra.mxu0 0
        %2764 = vmatprep.subr.bf16.mxu0 0
        %2765 = vmatpush2.bf16.msra.mxu0 0
        %2766 = vmatprep.subr.bf16.mxu0 0
        %2767 = vmatpush2.bf16.msra.mxu0 0
        %2768 = vmatprep.subr.bf16.mxu0 0
        %2769 = vmatpush2.bf16.msra.mxu0 0
        %2770 = vmatprep.mubr.bf16.mxu0 0
        %2771 = vmatmul.mubr.bf16.gmra.mxu0 %v1377
        %v2772 = vpop.f32.mrf.mxu0
        %v2773 = vadd.f32 0.0, %v2772
        %v2774 = vpop.f32.mrf.mxu0
        %v2775 = vadd.f32 0.0, %v2774
        %v2776 = vpop.f32.mrf.mxu0
        %v2777 = vadd.f32 0.0, %v2776
        %v2778 = vpop.f32.mrf.mxu0
        %v2779 = vadd.f32 0.0, %v2778
        %2780 = vmatprep.mubr.bf16.mxu0 0
        %2781 = vmatmul.mubr.bf16.gmra.mxu0 %v1380
        %v2782 = vpop.f32.mrf.mxu0
        %v2783 = vadd.f32 0.0, %v2782
        %v2784 = vpop.f32.mrf.mxu0
        %v2785 = vadd.f32 0.0, %v2784
        %v2786 = vpop.f32.mrf.mxu0
        %v2787 = vadd.f32 0.0, %v2786
        %v2788 = vpop.f32.mrf.mxu0
        %v2789 = vadd.f32 0.0, %v2788
        %2790 = vmatprep.mubr.bf16.mxu0 0
        %2791 = vmatmul.mubr.bf16.gmra.mxu0 %v1383
        %v2792 = vpop.f32.mrf.mxu0
        %v2793 = vadd.f32 0.0, %v2792
        %v2794 = vpop.f32.mrf.mxu0
        %v2795 = vadd.f32 0.0, %v2794
        %v2796 = vpop.f32.mrf.mxu0
        %v2797 = vadd.f32 0.0, %v2796
        %v2798 = vpop.f32.mrf.mxu0
        %v2799 = vadd.f32 0.0, %v2798
        %2800 = vmatprep.mubr.bf16.mxu0 0
        %2801 = vmatmul.mubr.bf16.gmra.mxu0 %v1386
        %v2802 = vpop.f32.mrf.mxu0
        %v2803 = vadd.f32 0.0, %v2802
        %v2804 = vpop.f32.mrf.mxu0
        %v2805 = vadd.f32 0.0, %v2804
        %v2806 = vpop.f32.mrf.mxu0
        %v2807 = vadd.f32 0.0, %v2806
        %v2808 = vpop.f32.mrf.mxu0
        %v2809 = vadd.f32 0.0, %v2808
        %2810 = vmatprep.mubr.bf16.mxu0 0
        %2811 = vmatmul.mubr.bf16.gmra.mxu0 %v1389
        %v2812 = vpop.f32.mrf.mxu0
        %v2813 = vadd.f32 0.0, %v2812
        %v2814 = vpop.f32.mrf.mxu0
        %v2815 = vadd.f32 0.0, %v2814
        %v2816 = vpop.f32.mrf.mxu0
        %v2817 = vadd.f32 0.0, %v2816
        %v2818 = vpop.f32.mrf.mxu0
        %v2819 = vadd.f32 0.0, %v2818
        %2820 = vmatprep.mubr.bf16.mxu0 0
        %2821 = vmatmul.mubr.bf16.gmra.mxu0 %v1392
        %v2822 = vpop.f32.mrf.mxu0
        %v2823 = vadd.f32 0.0, %v2822
        %v2824 = vpop.f32.mrf.mxu0
        %v2825 = vadd.f32 0.0, %v2824
        %v2826 = vpop.f32.mrf.mxu0
        %v2827 = vadd.f32 0.0, %v2826
        %v2828 = vpop.f32.mrf.mxu0
        %v2829 = vadd.f32 0.0, %v2828
        %2830 = vmatprep.mubr.bf16.mxu0 0
        %2831 = vmatmul.mubr.bf16.gmra.mxu0 %v2192
        %v2832 = vpop.f32.mrf.mxu0
        %v2833 = vadd.f32 0.0, %v2832
        %v2834 = vpop.f32.mrf.mxu0
        %v2835 = vadd.f32 0.0, %v2834
        %v2836 = vpop.f32.mrf.mxu0
        %v2837 = vadd.f32 0.0, %v2836
        %v2838 = vpop.f32.mrf.mxu0
        %v2839 = vadd.f32 0.0, %v2838
        %2840 = vmatprep.mubr.bf16.mxu0 0
        %2841 = vmatmul.mubr.bf16.gmra.mxu0 %v2730
        %v2842 = vpop.f32.mrf.mxu0
        %v2843 = vadd.f32 0.0, %v2842
        %v2844 = vpop.f32.mrf.mxu0
        %v2845 = vadd.f32 0.0, %v2844
        %v2846 = vpop.f32.mrf.mxu0
        %v2847 = vadd.f32 0.0, %v2846
        %v2848 = vpop.f32.mrf.mxu0
        %v2849 = vadd.f32 0.0, %v2848
        %2850 = vdwg.mxu0
        %v2851 = vadd.f32 %v2659, %v2773
        %v2852 = vadd.f32 %v2660, %v2775
        %v2853 = vadd.f32 %v2661, %v2777
        %v2854 = vadd.f32 %v2662, %v2779
        %v2855 = vadd.f32 %v2663, %v2783
        %v2856 = vadd.f32 %v2664, %v2785
        %v2857 = vadd.f32 %v2665, %v2787
        %v2858 = vadd.f32 %v2666, %v2789
        %v2859 = vadd.f32 %v2667, %v2793
        %v2860 = vadd.f32 %v2668, %v2795
        %v2861 = vadd.f32 %v2669, %v2797
        %v2862 = vadd.f32 %v2670, %v2799
        %v2863 = vadd.f32 %v2671, %v2803
        %v2864 = vadd.f32 %v2672, %v2805
        %v2865 = vadd.f32 %v2673, %v2807
        %v2866 = vadd.f32 %v2674, %v2809
        %v2867 = vadd.f32 %v2675, %v2813
        %v2868 = vadd.f32 %v2676, %v2815
        %v2869 = vadd.f32 %v2677, %v2817
        %v2870 = vadd.f32 %v2678, %v2819
        %v2871 = vadd.f32 %v2679, %v2823
        %v2872 = vadd.f32 %v2680, %v2825
        %v2873 = vadd.f32 %v2681, %v2827
        %v2874 = vadd.f32 %v2682, %v2829
        %v2875 = vadd.f32 %v2683, %v2833
        %v2876 = vadd.f32 %v2684, %v2835
        %v2877 = vadd.f32 %v2685, %v2837
        %v2878 = vadd.f32 %v2686, %v2839
        %v2879 = vadd.f32 %v2687, %v2843
        %v2880 = vadd.f32 %v2688, %v2845
        %v2881 = vadd.f32 %v2689, %v2847
        %v2882 = vadd.f32 %v2690, %v2849
        %v2884 = vrot.slane %v1135, 5
        %v2885 = vrot.slane %v2884, 4
        %v2886 = vrot.slane %v1136, 5
        %v2887 = vsel %vm1716, %v2885, %v2886
        %v2888 = vrot.slane %v2886, 4
        %v2889 = vrot.slane %v1137, 5
        %v2890 = vsel %vm1716, %v2888, %v2889
        %s2891 = scalar_lea.vmem %s1, 32
        %v2892 = vld [vmem:[%s2891] sm:$0xf]
        %v2893 = vunpack.c.l.b16 %v2887
        %v2894 = vunpack.c.l.b16 %v2890
        %v2895 = vpack.c.b16 %v2894, %v2893
        %v2898 = vunpack.c.l.s4 1983009808
        %v2899 = vunpack.c.0.s8 %v2898
        %v2900 = vlaneseq
        %v2901 = vshrl.u32 %v2900, 7
        %v2902 = vsub.s32 %v2899, %v2901
        %v2903 = vrot.slane %v2892, %v2902
        %v2904 = vcombine.high %v2903, %v2903
        %v2906 = vsel %vm1369, %v2895, 0
        %v2909 = vsel %vm1394, %v2903, 0
        %v2912 = vsel %vm1394, %v2904, 0
        %2914 = vmatprep.subr.bf16.mxu0 0
        %2915 = vmatpush1.bf16.msra.mxu0 0
        %2916 = vmatprep.subr.bf16.mxu0 0
        %2917 = vmatpush1.bf16.msra.mxu0 0
        %2918 = vmatprep.subr.bf16.mxu0 0
        %2919 = vmatpush1.bf16.msra.mxu0 0
        %2920 = vmatprep.subr.bf16.mxu0 0
        %2921 = vmatpush1.bf16.msra.mxu0 0
        %2922 = vmatprep.subr.bf16.mxu0 0
        %2923 = vmatpush1.bf16.msra.mxu0 0
        %2924 = vmatprep.subr.bf16.mxu0 0
        %2925 = vmatpush1.bf16.msra.mxu0 0
        %2926 = vmatprep.subr.bf16.mxu0 0
        %2927 = vmatpush1.bf16.msra.mxu0 0
        %2928 = vmatprep.subr.bf16.mxu0 %v2912
        %2929 = vmatpush1.bf16.msra.mxu0 %v2909
        %2930 = vmatprep.subr.bf16.mxu0 0
        %2931 = vmatpush2.bf16.msra.mxu0 0
        %2932 = vmatprep.subr.bf16.mxu0 0
        %2933 = vmatpush2.bf16.msra.mxu0 0
        %2934 = vmatprep.subr.bf16.mxu0 0
        %2935 = vmatpush2.bf16.msra.mxu0 0
        %2936 = vmatprep.subr.bf16.mxu0 0
        %2937 = vmatpush2.bf16.msra.mxu0 0
        %2938 = vmatprep.subr.bf16.mxu0 0
        %2939 = vmatpush2.bf16.msra.mxu0 0
        %2940 = vmatprep.subr.bf16.mxu0 0
        %2941 = vmatpush2.bf16.msra.mxu0 0
        %2942 = vmatprep.subr.bf16.mxu0 0
        %2943 = vmatpush2.bf16.msra.mxu0 0
        %2944 = vmatprep.subr.bf16.mxu0 0
        %2945 = vmatpush2.bf16.msra.mxu0 0
        %2946 = vmatprep.mubr.bf16.mxu0 0
        %2947 = vmatmul.mubr.bf16.gmra.mxu0 %v1815
        %v2948 = vpop.f32.mrf.mxu0
        %v2949 = vadd.f32 0.0, %v2948
        %v2950 = vpop.f32.mrf.mxu0
        %v2951 = vadd.f32 0.0, %v2950
        %v2952 = vpop.f32.mrf.mxu0
        %v2953 = vadd.f32 0.0, %v2952
        %v2954 = vpop.f32.mrf.mxu0
        %v2955 = vadd.f32 0.0, %v2954
        %2956 = vmatprep.mubr.bf16.mxu0 0
        %2957 = vmatmul.mubr.bf16.gmra.mxu0 %v1818
        %v2958 = vpop.f32.mrf.mxu0
        %v2959 = vadd.f32 0.0, %v2958
        %v2960 = vpop.f32.mrf.mxu0
        %v2961 = vadd.f32 0.0, %v2960
        %v2962 = vpop.f32.mrf.mxu0
        %v2963 = vadd.f32 0.0, %v2962
        %v2964 = vpop.f32.mrf.mxu0
        %v2965 = vadd.f32 0.0, %v2964
        %2966 = vmatprep.mubr.bf16.mxu0 0
        %2967 = vmatmul.mubr.bf16.gmra.mxu0 %v1821
        %v2968 = vpop.f32.mrf.mxu0
        %v2969 = vadd.f32 0.0, %v2968
        %v2970 = vpop.f32.mrf.mxu0
        %v2971 = vadd.f32 0.0, %v2970
        %v2972 = vpop.f32.mrf.mxu0
        %v2973 = vadd.f32 0.0, %v2972
        %v2974 = vpop.f32.mrf.mxu0
        %v2975 = vadd.f32 0.0, %v2974
        %2976 = vmatprep.mubr.bf16.mxu0 0
        %2977 = vmatmul.mubr.bf16.gmra.mxu0 %v1824
        %v2978 = vpop.f32.mrf.mxu0
        %v2979 = vadd.f32 0.0, %v2978
        %v2980 = vpop.f32.mrf.mxu0
        %v2981 = vadd.f32 0.0, %v2980
        %v2982 = vpop.f32.mrf.mxu0
        %v2983 = vadd.f32 0.0, %v2982
        %v2984 = vpop.f32.mrf.mxu0
        %v2985 = vadd.f32 0.0, %v2984
        %2986 = vmatprep.mubr.bf16.mxu0 0
        %2987 = vmatmul.mubr.bf16.gmra.mxu0 %v1827
        %v2988 = vpop.f32.mrf.mxu0
        %v2989 = vadd.f32 0.0, %v2988
        %v2990 = vpop.f32.mrf.mxu0
        %v2991 = vadd.f32 0.0, %v2990
        %v2992 = vpop.f32.mrf.mxu0
        %v2993 = vadd.f32 0.0, %v2992
        %v2994 = vpop.f32.mrf.mxu0
        %v2995 = vadd.f32 0.0, %v2994
        %2996 = vmatprep.mubr.bf16.mxu0 0
        %2997 = vmatmul.mubr.bf16.gmra.mxu0 %v1830
        %v2998 = vpop.f32.mrf.mxu0
        %v2999 = vadd.f32 0.0, %v2998
        %v3000 = vpop.f32.mrf.mxu0
        %v3001 = vadd.f32 0.0, %v3000
        %v3002 = vpop.f32.mrf.mxu0
        %v3003 = vadd.f32 0.0, %v3002
        %v3004 = vpop.f32.mrf.mxu0
        %v3005 = vadd.f32 0.0, %v3004
        %3006 = vmatprep.mubr.bf16.mxu0 0
        %3007 = vmatmul.mubr.bf16.gmra.mxu0 %v2368
        %v3008 = vpop.f32.mrf.mxu0
        %v3009 = vadd.f32 0.0, %v3008
        %v3010 = vpop.f32.mrf.mxu0
        %v3011 = vadd.f32 0.0, %v3010
        %v3012 = vpop.f32.mrf.mxu0
        %v3013 = vadd.f32 0.0, %v3012
        %v3014 = vpop.f32.mrf.mxu0
        %v3015 = vadd.f32 0.0, %v3014
        %3016 = vmatprep.mubr.bf16.mxu0 0
        %3017 = vmatmul.mubr.bf16.gmra.mxu0 %v2906
        %v3018 = vpop.f32.mrf.mxu0
        %v3019 = vadd.f32 0.0, %v3018
        %v3020 = vpop.f32.mrf.mxu0
        %v3021 = vadd.f32 0.0, %v3020
        %v3022 = vpop.f32.mrf.mxu0
        %v3023 = vadd.f32 0.0, %v3022
        %v3024 = vpop.f32.mrf.mxu0
        %v3025 = vadd.f32 0.0, %v3024
        %3026 = vdwg.mxu0
        %v3027 = vadd.f32 %v2851, %v2949
        %v3028 = vadd.f32 %v2852, %v2951
        %v3029 = vadd.f32 %v2853, %v2953
        %v3030 = vadd.f32 %v2854, %v2955
        %v3031 = vadd.f32 %v2855, %v2959
        %v3032 = vadd.f32 %v2856, %v2961
        %v3033 = vadd.f32 %v2857, %v2963
        %v3034 = vadd.f32 %v2858, %v2965
        %v3035 = vadd.f32 %v2859, %v2969
        %v3036 = vadd.f32 %v2860, %v2971
        %v3037 = vadd.f32 %v2861, %v2973
        %v3038 = vadd.f32 %v2862, %v2975
        %v3039 = vadd.f32 %v2863, %v2979
        %v3040 = vadd.f32 %v2864, %v2981
        %v3041 = vadd.f32 %v2865, %v2983
        %v3042 = vadd.f32 %v2866, %v2985
        %v3043 = vadd.f32 %v2867, %v2989
        %v3044 = vadd.f32 %v2868, %v2991
        %v3045 = vadd.f32 %v2869, %v2993
        %v3046 = vadd.f32 %v2870, %v2995
        %v3047 = vadd.f32 %v2871, %v2999
        %v3048 = vadd.f32 %v2872, %v3001
        %v3049 = vadd.f32 %v2873, %v3003
        %v3050 = vadd.f32 %v2874, %v3005
        %v3051 = vadd.f32 %v2875, %v3009
        %v3052 = vadd.f32 %v2876, %v3011
        %v3053 = vadd.f32 %v2877, %v3013
        %v3054 = vadd.f32 %v2878, %v3015
        %v3055 = vadd.f32 %v2879, %v3019
        %v3056 = vadd.f32 %v2880, %v3021
        %v3057 = vadd.f32 %v2881, %v3023
        %v3058 = vadd.f32 %v2882, %v3025
        %v3059 = vld [vmem:[%s2] sm:$0x3]
        %v3061 = vlaneseq
        %v3062 = vshrl.u32 %v3061, 7
        %v3063 = vsub.s32 0, %v3062
        %v3064 = vrot.slane %v3059, %v3063
        %v3065 = vlaneseq
        %v3066 = vshrl.u32 %v3065, 7
        %v3067 = vsub.s32 1, %v3066
        %v3068 = vrot.slane %v3059, %v3067
        %v3071 = vadd.f32 %v3027, %v3064
        %v3072 = vadd.f32 %v3028, %v3068
        %v3073 = vadd.f32 %v3029, %v3064
        %v3074 = vadd.f32 %v3030, %v3068
        %v3075 = vadd.f32 %v3031, %v3064
        %v3076 = vadd.f32 %v3032, %v3068
        %v3077 = vadd.f32 %v3033, %v3064
        %v3078 = vadd.f32 %v3034, %v3068
        %v3079 = vadd.f32 %v3035, %v3064
        %v3080 = vadd.f32 %v3036, %v3068
        %v3081 = vadd.f32 %v3037, %v3064
        %v3082 = vadd.f32 %v3038, %v3068
        %v3083 = vadd.f32 %v3039, %v3064
        %v3084 = vadd.f32 %v3040, %v3068
        %v3085 = vadd.f32 %v3041, %v3064
        %v3086 = vadd.f32 %v3042, %v3068
        %v3087 = vadd.f32 %v3043, %v3064
        %v3088 = vadd.f32 %v3044, %v3068
        %v3089 = vadd.f32 %v3045, %v3064
        %v3090 = vadd.f32 %v3046, %v3068
        %v3091 = vadd.f32 %v3047, %v3064
        %v3092 = vadd.f32 %v3048, %v3068
        %v3093 = vadd.f32 %v3049, %v3064
        %v3094 = vadd.f32 %v3050, %v3068
        %v3095 = vadd.f32 %v3051, %v3064
        %v3096 = vadd.f32 %v3052, %v3068
        %v3097 = vadd.f32 %v3053, %v3064
        %v3098 = vadd.f32 %v3054, %v3068
        %v3099 = vadd.f32 %v3055, %v3064
        %v3100 = vadd.f32 %v3056, %v3068
        %v3101 = vadd.f32 %v3057, %v3064
        %v3102 = vadd.f32 %v3058, %v3068
        %v3103 = vmax.f32 %v3071, 0.0
        %v3104 = vmax.f32 %v3072, 0.0
        %v3105 = vmax.f32 %v3073, 0.0
        %v3106 = vmax.f32 %v3074, 0.0
        %v3107 = vmax.f32 %v3075, 0.0
        %v3108 = vmax.f32 %v3076, 0.0
        %v3109 = vmax.f32 %v3077, 0.0
        %v3110 = vmax.f32 %v3078, 0.0
        %v3111 = vmax.f32 %v3079, 0.0
        %v3112 = vmax.f32 %v3080, 0.0
        %v3113 = vmax.f32 %v3081, 0.0
        %v3114 = vmax.f32 %v3082, 0.0
        %v3115 = vmax.f32 %v3083, 0.0
        %v3116 = vmax.f32 %v3084, 0.0
        %v3117 = vmax.f32 %v3085, 0.0
        %v3118 = vmax.f32 %v3086, 0.0
        %v3119 = vmax.f32 %v3087, 0.0
        %v3120 = vmax.f32 %v3088, 0.0
        %v3121 = vmax.f32 %v3089, 0.0
        %v3122 = vmax.f32 %v3090, 0.0
        %v3123 = vmax.f32 %v3091, 0.0
        %v3124 = vmax.f32 %v3092, 0.0
        %v3125 = vmax.f32 %v3093, 0.0
        %v3126 = vmax.f32 %v3094, 0.0
        %v3127 = vmax.f32 %v3095, 0.0
        %v3128 = vmax.f32 %v3096, 0.0
        %v3129 = vmax.f32 %v3097, 0.0
        %v3130 = vmax.f32 %v3098, 0.0
        %v3131 = vmax.f32 %v3099, 0.0
        %v3132 = vmax.f32 %v3100, 0.0
        %v3133 = vmax.f32 %v3101, 0.0
        %v3134 = vmax.f32 %v3102, 0.0
        %v3135 = vpack.c.bf16 %v3105, %v3103
        %v3136 = vpack.c.bf16 %v3106, %v3104
        %v3137 = vpack.c.bf16 %v3109, %v3107
        %v3138 = vpack.c.bf16 %v3110, %v3108
        %v3139 = vpack.c.bf16 %v3113, %v3111
        %v3140 = vpack.c.bf16 %v3114, %v3112
        %v3141 = vpack.c.bf16 %v3117, %v3115
        %v3142 = vpack.c.bf16 %v3118, %v3116
        %v3143 = vpack.c.bf16 %v3121, %v3119
        %v3144 = vpack.c.bf16 %v3122, %v3120
        %v3145 = vpack.c.bf16 %v3125, %v3123
        %v3146 = vpack.c.bf16 %v3126, %v3124
        %v3147 = vpack.c.bf16 %v3129, %v3127
        %v3148 = vpack.c.bf16 %v3130, %v3128
        %v3149 = vpack.c.bf16 %v3133, %v3131
        %v3150 = vpack.c.bf16 %v3134, %v3132
        %v3167 = vunpack.c.l.b16 %v3135
        %v3168 = vunpack.c.l.b16 %v3136
        %v3169 = vunpack.c.h.b16 %v3135
        %v3170 = vunpack.c.h.b16 %v3136
        %v3171 = vunpack.c.l.b16 %v3137
        %v3172 = vunpack.c.l.b16 %v3138
        %v3173 = vunpack.c.h.b16 %v3137
        %v3174 = vunpack.c.h.b16 %v3138
        %v3175 = vunpack.c.l.b16 %v3139
        %v3176 = vunpack.c.l.b16 %v3140
        %v3177 = vunpack.c.h.b16 %v3139
        %v3178 = vunpack.c.h.b16 %v3140
        %v3179 = vunpack.c.l.b16 %v3141
        %v3180 = vunpack.c.l.b16 %v3142
        %v3181 = vunpack.c.h.b16 %v3141
        %v3182 = vunpack.c.h.b16 %v3142
        %v3183 = vunpack.c.l.b16 %v3143
        %v3184 = vunpack.c.l.b16 %v3144
        %v3185 = vunpack.c.h.b16 %v3143
        %v3186 = vunpack.c.h.b16 %v3144
        %v3187 = vunpack.c.l.b16 %v3145
        %v3188 = vunpack.c.l.b16 %v3146
        %v3189 = vunpack.c.h.b16 %v3145
        %v3190 = vunpack.c.h.b16 %v3146
        %v3191 = vunpack.c.l.b16 %v3147
        %v3192 = vunpack.c.l.b16 %v3148
        %v3193 = vunpack.c.h.b16 %v3147
        %v3194 = vunpack.c.h.b16 %v3148
        %v3195 = vunpack.c.l.b16 %v3149
        %v3196 = vunpack.c.l.b16 %v3150
        %v3197 = vunpack.c.h.b16 %v3149
        %v3198 = vunpack.c.h.b16 %v3150
        %v3199 = vpack.c.b16 %v3168, %v3167
        %v3200 = vpack.c.b16 %v3170, %v3169
        %v3201 = vpack.c.b16 %v3172, %v3171
        %v3202 = vpack.c.b16 %v3174, %v3173
        %v3203 = vpack.c.b16 %v3176, %v3175
        %v3204 = vpack.c.b16 %v3178, %v3177
        %v3205 = vpack.c.b16 %v3180, %v3179
        %v3206 = vpack.c.b16 %v3182, %v3181
        %v3207 = vpack.c.b16 %v3184, %v3183
        %v3208 = vpack.c.b16 %v3186, %v3185
        %v3209 = vpack.c.b16 %v3188, %v3187
        %v3210 = vpack.c.b16 %v3190, %v3189
        %v3211 = vpack.c.b16 %v3192, %v3191
        %v3212 = vpack.c.b16 %v3194, %v3193
        %v3213 = vpack.c.b16 %v3196, %v3195
        %v3214 = vpack.c.b16 %v3198, %v3197
        %3231 = vst [vmem:[%s341] sm:$0xff] %v3199
        %3232 = vst [vmem:[%s341 + $0x8] sm:$0xff] %v3200
        %3233 = vst [vmem:[%s341 + $0x10] sm:$0xff] %v3201
        %3234 = vst [vmem:[%s341 + $0x18] sm:$0xff] %v3202
        %3235 = vst [vmem:[%s341 + $0x20] sm:$0xff] %v3203
        %3236 = vst [vmem:[%s341 + $0x28] sm:$0xff] %v3204
        %3237 = vst [vmem:[%s341 + $0x30] sm:$0xff] %v3205
        %3238 = vst [vmem:[%s341 + $0x38] sm:$0xff] %v3206
        %3239 = vst [vmem:[%s341 + $0x40] sm:$0xff] %v3207
        %3240 = vst [vmem:[%s341 + $0x48] sm:$0xff] %v3208
        %3241 = vst [vmem:[%s341 + $0x50] sm:$0xff] %v3209
        %3242 = vst [vmem:[%s341 + $0x58] sm:$0xff] %v3210
        %3243 = vst [vmem:[%s341 + $0x60] sm:$0xff] %v3211
        %3244 = vst [vmem:[%s341 + $0x68] sm:$0xff] %v3212
        %3245 = vst [vmem:[%s341 + $0x70] sm:$0xff] %v3213
        %3246 = vst [vmem:[%s341 + $0x78] sm:$0xff] %v3214
        %v3247 = vld [vmem:[#allocation2] sm:$0x3]
        %v3248 = vadd.f32 %v3103, %v3105
        %v3249 = vadd.f32 %v3248, %v3107
        %v3250 = vadd.f32 %v3249, %v3109
        %v3251 = vadd.f32 %v3250, %v3111
        %v3252 = vadd.f32 %v3251, %v3113
        %v3253 = vadd.f32 %v3252, %v3115
        %v3254 = vadd.f32 %v3253, %v3117
        %v3255 = vadd.f32 %v3254, %v3119
        %v3256 = vadd.f32 %v3255, %v3121
        %v3257 = vadd.f32 %v3256, %v3123
        %v3258 = vadd.f32 %v3257, %v3125
        %v3259 = vadd.f32 %v3258, %v3127
        %v3260 = vadd.f32 %v3259, %v3129
        %v3261 = vadd.f32 %v3260, %v3131
        %v3262 = vadd.f32 %v3261, %v3133
        %v3263 = vrot.slane %v3262, 4
        %v3264 = vadd.f32 %v3262, %v3263
        %v3265 = vrot.slane %v3264, 2
        %v3266 = vadd.f32 %v3264, %v3265
        %v3267 = vrot.slane %v3266, 1
        %v3268 = vadd.f32 %v3266, %v3267
        %v3269 = vadd.f32 %v3104, %v3106
        %v3270 = vadd.f32 %v3269, %v3108
        %v3271 = vadd.f32 %v3270, %v3110
        %v3272 = vadd.f32 %v3271, %v3112
        %v3273 = vadd.f32 %v3272, %v3114
        %v3274 = vadd.f32 %v3273, %v3116
        %v3275 = vadd.f32 %v3274, %v3118
        %v3276 = vadd.f32 %v3275, %v3120
        %v3277 = vadd.f32 %v3276, %v3122
        %v3278 = vadd.f32 %v3277, %v3124
        %v3279 = vadd.f32 %v3278, %v3126
        %v3280 = vadd.f32 %v3279, %v3128
        %v3281 = vadd.f32 %v3280, %v3130
        %v3282 = vadd.f32 %v3281, %v3132
        %v3283 = vadd.f32 %v3282, %v3134
        %v3284 = vrot.slane %v3283, 4
        %v3285 = vadd.f32 %v3283, %v3284
        %v3286 = vrot.slane %v3285, 2
        %v3287 = vadd.f32 %v3285, %v3286
        %v3288 = vrot.slane %v3287, 1
        %v3289 = vadd.f32 %v3287, %v3288
        %v3292 = vcombine.low %v3268, %v3289
        %v3294 = vunpack.c.l.s4 1966171168
        %v3295 = vunpack.c.0.s8 %v3294
        %v3296 = vlaneseq
        %v3297 = vshrl.u32 %v3296, 7
        %v3298 = vsub.s32 %v3295, %v3297
        %v3299 = vrot.slane %v3292, %v3298
        %v3301 = vunpack.c.l.s4 1966171168
        %v3302 = vunpack.c.0.s8 %v3301
        %v3303 = vlaneseq
        %v3304 = vshrl.u32 %v3303, 7
        %v3305 = vsub.s32 %v3302, %v3304
        %v3306 = vrot.slane %v3299, %v3305
        %v3308 = vadd.f32 %v3247, %v3306
        %v3309 = vlaneseq
        %vm3310 = vcmp.ge.s32.totalorder %v3309, 0
        %vm3311 = vcmp.lt.s32.totalorder %v3309, 256
        %vm3312 = vmand %vm3310, %vm3311
        %3313 = vst.msk [vmem:[#allocation2] sm:$0x3] %vm3312, %v3308
        %p3314 = scmp.eq.s32.totalorder %s34, 1
        // Predicated region
        $region45: #{tpu_custom_call.1} parent=39 // pred_check
          %p3315 = pneg %p3314
        $region46: #{tpu_custom_call.1} parent=39 // pred_check_branch
          %3317 = sbr.rel (%p3315) target = $region48
        $region47: #{tpu_custom_call.1} parent=39 // pred_region
          %v3318 = vld [vmem:[#allocation2] sm:$0x3]
          %v3319 = vmul.f32 %v3318, 0.00390625
          %3320 = vst.msk [vmem:[%s348] sm:$0x3] %vm3312, %v3319
        $region48: #{tpu_custom_call.1} parent=39 // pred_fallthru
          _
        %s3321 = sand.u32 %s171, 1
        %s3322 = scalar_lea.sflag [#allocation4], %s3321
        %s3323 = sand.u32 %s171, 1
        %s3324 = smul.addr %s3323, 128
        %s3325 = scalar_lea.vmem [#allocation3], %s3324
        %s3326 = sand.u32 %s29, 1
        %s3327 = scalar_lea.sflag [#allocation6], %s3326
        %s3328 = sand.u32 %s197, 1
        %s3329 = smul.addr %s3328, 2
        %s3330 = scalar_lea.vmem [#allocation5], %s3329
        %s3331 = sand.u32 %s29, 1
        %s3332 = scalar_lea.sflag [#allocation6], %s3331
        %s3333 = sand.u32 %s223, 1
        %s3334 = scalar_lea.vmem [#allocation7], %s3333
        %s3335 = sand.u32 %s249, 1
        %s3336 = scalar_lea.sflag [#allocation9], %s3335
        %s3337 = sand.u32 %s249, 1
        %s3338 = scalar_lea.vmem [#allocation8], %s3337
        // Predicated region
        $region49: #{tpu_custom_call.1} parent=39 // pred_check
          %p3339 = pneg %p181
        $region50: #{tpu_custom_call.1} parent=39 // pred_check_branch
          %3341 = sbr.rel (%p3339) target = $region52
        $region51: #{tpu_custom_call.1} parent=39 // pred_region
          %s3342 = smul.u32 16, %s34
          %s3344 = ssub.s32 2048, 2048
          %3345 = vsyncadd %s3322, %s3344
          %s3346 = smul.addr %s3342, 2
          %s3347 = smul.addr %s33, 64
          %s3348 = sadd.s32 %s3346, %s3347
          %s3349 = smul.addr %s3348, 64
          %s3350 = scalar_lea.hbm %s5, %s3349
          %s3351 = sshll.u32 %s3325, 4
          %s3352 = int_to_ptr.vmem [resolvable:$true] %s3351
          %3357 = dma.vmem_to_hbm [thread:$0]  %s3352, 2048, %s3350, %s3322, 128, 128, 8
        $region52: #{tpu_custom_call.1} parent=39 // pred_fallthru
          _
        // Predicated region
        $region53: #{tpu_custom_call.1} parent=39 // pred_check
          %p3358 = pneg %p207
        $region54: #{tpu_custom_call.1} parent=39 // pred_check_branch
          %3360 = sbr.rel (%p3358) target = $region56
        $region55: #{tpu_custom_call.1} parent=39 // pred_region
          %s3362 = ssub.s32 32, 32
          %3363 = vsyncadd %s3327, %s3362
          %s3364 = smul.addr %s33, 2
          %s3365 = smul.addr %s3364, 16
          %s3366 = scalar_lea.hbm %s6, %s3365
          %s3368 = sshll.u32 %s3330, 4
          %s3369 = int_to_ptr.vmem [resolvable:$true] %s3368
          %3371 = dma.vmem_to_hbm [thread:$0]  %s3369, 32, %s3366, %s3327
        $region56: #{tpu_custom_call.1} parent=39 // pred_fallthru
          _
        // Predicated region
        $region57: #{tpu_custom_call.1} parent=39 // pred_check
          %p3372 = pneg %p233
        $region58: #{tpu_custom_call.1} parent=39 // pred_check_branch
          %3374 = sbr.rel (%p3372) target = $region60
        $region59: #{tpu_custom_call.1} parent=39 // pred_region
          %s3376 = ssub.s32 16, 16
          %3377 = vsyncadd %s3332, %s3376
          %s3378 = smul.addr %s33, 16
          %s3379 = scalar_lea.hbm %s7, %s3378
          %s3381 = sshll.u32 %s3334, 4
          %s3382 = int_to_ptr.vmem [resolvable:$true] %s3381
          %3384 = dma.vmem_to_hbm [thread:$0]  %s3382, 16, %s3379, %s3332
        $region60: #{tpu_custom_call.1} parent=39 // pred_fallthru
          _
        // Predicated region
        $region61: #{tpu_custom_call.1} parent=39 // pred_check
          %p3385 = pneg %p259
        $region62: #{tpu_custom_call.1} parent=39 // pred_check_branch
          %3387 = sbr.rel (%p3385) target = $region64
        $region63: #{tpu_custom_call.1} parent=39 // pred_region
          %s3389 = ssub.s32 16, 16
          %3390 = vsyncadd %s3336, %s3389
          %s3391 = smul.addr %s33, 16
          %s3392 = scalar_lea.hbm %s8, %s3391
          %s3394 = sshll.u32 %s3338, 4
          %s3395 = int_to_ptr.vmem [resolvable:$true] %s3394
          %3397 = dma.vmem_to_hbm [thread:$0]  %s3395, 16, %s3392, %s3336
        $region64: #{tpu_custom_call.1} parent=39 // pred_fallthru
          _
      $region40: #{tpu_custom_call.1} parent=5 // pred_fallthru
        _
      %p3398 = scmp.le.s32.totalorder 2, %s24
      // Predicated region
      $region65: #{tpu_custom_call.1} parent=5 // pred_check
        %p3399 = pneg %p3398
      $region66: #{tpu_custom_call.1} parent=5 // pred_check_branch
        %3401 = sbr.rel (%p3399) target = $region68
      $region67: #{tpu_custom_call.1} parent=5 // pred_region
        %s3402 = ssub.s32 %s24, 2
        // Predicated region
        $region69: #{tpu_custom_call.1} parent=67 // pred_check
          %p3403 = pneg %p187
        $region70: #{tpu_custom_call.1} parent=67 // pred_check_branch
          %3405 = sbr.rel (%p3403) target = $region72
        $region71: #{tpu_custom_call.1} parent=67 // pred_region
          %s3406 = sand.u32 %s172, 1
          %s3407 = scalar_lea.sflag [#allocation4], %s3406
          %s3408 = sand.u32 %s172, 1
          %s3409 = smul.addr %s3408, 128
          %s3410 = scalar_lea.vmem [#allocation3], %s3409
          %3411 = dma.done %s3407, 2048
        $region72: #{tpu_custom_call.1} parent=67 // pred_fallthru
          _
        // Predicated region
        $region73: #{tpu_custom_call.1} parent=67 // pred_check
          %p3412 = pneg %p213
        $region74: #{tpu_custom_call.1} parent=67 // pred_check_branch
          %3414 = sbr.rel (%p3412) target = $region76
        $region75: #{tpu_custom_call.1} parent=67 // pred_region
          %s3415 = sand.u32 %s30, 1
          %s3416 = scalar_lea.sflag [#allocation6], %s3415
          %s3417 = sand.u32 %s198, 1
          %s3418 = smul.addr %s3417, 2
          %s3419 = scalar_lea.vmem [#allocation5], %s3418
          %3420 = dma.done %s3416, 32
        $region76: #{tpu_custom_call.1} parent=67 // pred_fallthru
          _
        // Predicated region
        $region77: #{tpu_custom_call.1} parent=67 // pred_check
          %p3421 = pneg %p239
        $region78: #{tpu_custom_call.1} parent=67 // pred_check_branch
          %3423 = sbr.rel (%p3421) target = $region80
        $region79: #{tpu_custom_call.1} parent=67 // pred_region
          %s3424 = sand.u32 %s30, 1
          %s3425 = scalar_lea.sflag [#allocation6], %s3424
          %s3426 = sand.u32 %s224, 1
          %s3427 = scalar_lea.vmem [#allocation7], %s3426
          %3428 = dma.done %s3425, 16
        $region80: #{tpu_custom_call.1} parent=67 // pred_fallthru
          _
        // Predicated region
        $region81: #{tpu_custom_call.1} parent=67 // pred_check
          %p3429 = pneg %p265
        $region82: #{tpu_custom_call.1} parent=67 // pred_check_branch
          %3431 = sbr.rel (%p3429) target = $region84
        $region83: #{tpu_custom_call.1} parent=67 // pred_region
          %s3432 = sand.u32 %s250, 1
          %s3433 = scalar_lea.sflag [#allocation9], %s3432
          %s3434 = sand.u32 %s250, 1
          %s3435 = scalar_lea.vmem [#allocation8], %s3434
          %3436 = dma.done %s3433, 16
        $region84: #{tpu_custom_call.1} parent=67 // pred_fallthru
          _
      $region68: #{tpu_custom_call.1} parent=5 // pred_fallthru
        _
    $region6: #{tpu_custom_call.1} parent=1 // loop_footer
      %s28 = sadd.s32 1, %s24
    $region7: #{tpu_custom_call.1} parent=1 // loop_footer_branch
      %23 = sbr.rel target = $region3
    $region8: #{tpu_custom_call.1} parent=1 // loop_exit
      _
    %3437 = vsyncpa [#allocation4], 1
    %s3438 = scalar_lea.sflag [#allocation4], 1
    %3439 = vsyncpa %s3438, 1
    %3440 = vsyncpa [#allocation6], 1
    %s3441 = scalar_lea.sflag [#allocation6], 1
    %3442 = vsyncpa %s3441, 1
    %3443 = vsyncpa [#allocation9], 1
    %s3444 = scalar_lea.sflag [#allocation9], 1
    %3445 = vsyncpa %s3444, 1

</llo_original>
